<compile_context>
chip_gen: v5e
topology: v5e:2x2
jax: 0.10.0
libtpu: 0.0.40
codegen_flags: <defaults>
</compile_context>

<pallas_src>
import jax
import jax.numpy as jnp
from jax.experimental import pallas as pl
from jax.experimental.pallas import tpu as pltpu

DIM = 512      # nn.Bilinear(512, 512, 512)
SUB = 8        # one sublane group of the weight slab per inner step


def _tile_config():
    """Pick (tile_o, vmem_limit_bytes) per TPU generation."""
    vmem_bytes = None
    try:
        info = pltpu.get_tpu_info()
        vmem_bytes = getattr(info, "vmem_capacity_bytes", None)
    except Exception:
        vmem_bytes = None
    if vmem_bytes is not None and vmem_bytes > 96 * 1024 * 1024:
        tile_o = 32            # 32 MiB weight blocks, 16 steps (v5e / v6e)
    else:
        tile_o = 16            # 16 MiB weight blocks (v7x 64 MiB VMEM, unknown)
    w_block_bytes = tile_o * DIM * DIM * 4
    # double-buffered weight block + tiny residents/scratch + compiler slack
    vmem_limit = 2 * w_block_bytes + 16 * 1024 * 1024
    return tile_o, vmem_limit


def _make_kernel(tile_o: int, batch: int):
    n_groups = DIM // SUB

    def kernel(c_ref, s_ref, w_ref, bias_ref, o_ref, rows_ref):
        """One output-channel block of the bilinear form.

        c_ref    : (DIM, batch)        content^T, i on sublanes   (resident)
        s_ref    : (batch, DIM)        style, j on lanes          (resident)
        w_ref    : (tile_o, DIM, DIM)  streamed weight block (contiguous HBM)
        bias_ref : (tile_o, 1)         bias slice for this block
        o_ref    : (tile_o, batch)     output block
        rows_ref : (batch*tile_o, DIM) scratch: rows[b*tile_o+o, j]
                                       = sum_i c[b,i] * W[o,i,j]
        """

        @pl.loop(0, tile_o)
        def _(o):
            wo = w_ref.at[o]                       # (DIM, DIM) view, dynamic o
            # (SUB, DIM) sublane partial sums per batch element, kept in vregs
            accs = [jnp.zeros((SUB, DIM), jnp.float32) for _ in range(batch)]
            for g in range(n_groups):              # static unroll: 64 groups
                lo = g * SUB
                sl = wo[pl.ds(lo, SUB), :]          # (SUB, DIM)  j lane-dense
                cb = c_ref[pl.ds(lo, SUB), :]       # (SUB, batch)
                # weight slab loaded once, reused for every batch element
                for b in range(batch):
                    accs[b] = accs[b] + sl * cb[:, b:b + 1]   # lane-bcast of c
            # fold the 8 sublane partials -> one (1, DIM) row per (o, b)
            for b in range(batch):
                row = jnp.sum(accs[b], axis=0, keepdims=True)      # (1, DIM)
                rows_ref[pl.ds(b * tile_o + o, 1), :] = row

        # Epilogue (once per block): contract against style over j, add bias.
        cols = []
        for b in range(batch):
            rows_b = rows_ref[pl.ds(b * tile_o, tile_o), :]        # (tile_o, DIM)
            cols.append(jnp.sum(rows_b * s_ref[b:b + 1, :],
                                axis=1, keepdims=True))            # (tile_o, 1)
        acc = jnp.concatenate(cols, axis=1)                        # (tile_o, batch)
        o_ref[...] = (acc + bias_ref[...]).astype(o_ref.dtype)

    return kernel


def mixer_forward(content, style, weight, bias):
    """content, style: (B, DIM, 1, 1) float32 -> (B, DIM, 1, 1) float32."""
    batch = content.shape[0]
    tile_o, vmem_limit = _tile_config()

    # glue: squeeze 1x1 spatial dims; lay content with i on sublanes,
    # style with j on lanes.
    c_t = content[:, :, 0, 0].T                     # (DIM, B)
    s2 = style[:, :, 0, 0]                          # (B, DIM)
    bias2 = bias.reshape(DIM, 1)

    kernel = _make_kernel(tile_o, batch)

    flops = 2 * batch * DIM * DIM * DIM
    bytes_accessed = 4 * (DIM ** 3) + 4 * (3 * batch * DIM + DIM)

    out_t = pl.pallas_call(
        kernel,
        out_shape=jax.ShapeDtypeStruct((DIM, batch), content.dtype),
        grid_spec=pltpu.PrefetchScalarGridSpec(
            num_scalar_prefetch=0,
            grid=(DIM // tile_o,),
            in_specs=[
                pl.BlockSpec((DIM, batch), lambda o: (0, 0)),           # content^T
                pl.BlockSpec((batch, DIM), lambda o: (0, 0)),           # style
                pl.BlockSpec((tile_o, DIM, DIM), lambda o: (o, 0, 0)),  # weight
                pl.BlockSpec((tile_o, 1), lambda o: (o, 0)),            # bias
            ],
            out_specs=pl.BlockSpec((tile_o, batch), lambda o: (o, 0)),
            scratch_shapes=[pltpu.VMEM((batch * tile_o, DIM), jnp.float32)],
        ),
        compiler_params=pltpu.CompilerParams(
            dimension_semantics=("parallel",),
            vmem_limit_bytes=vmem_limit,
        ),
        cost_estimate=pl.CostEstimate(
            flops=flops, transcendentals=0, bytes_accessed=bytes_accessed),
    )(c_t, s2, weight, bias2)

    # glue: back to (B, DIM, 1, 1)
    return out_t.T[:, :, None, None]


mixer_forward_jit = jax.jit(mixer_forward)


if __name__ == "__main__":
    key = jax.random.PRNGKey(0)
    k_w, k_b, k_c, k_s = jax.random.split(key, 4)

    # nn.Bilinear-style init: U(-1/sqrt(in1), 1/sqrt(in1))
    bound = 1.0 / (DIM ** 0.5)
    weight = jax.random.uniform(k_w, (DIM, DIM, DIM), jnp.float32,
                                minval=-bound, maxval=bound)
    bias = jax.random.uniform(k_b, (DIM,), jnp.float32,
                              minval=-bound, maxval=bound)

    B = 2
    content = jax.random.normal(k_c, (B, DIM, 1, 1), jnp.float32)
    style = jax.random.normal(k_s, (B, DIM, 1, 1), jnp.float32)

    out = mixer_forward_jit(content, style, weight, bias)
    out = jax.block_until_ready(out)
    assert out.shape == (B, DIM, 1, 1)

    # pure-JAX reference of nn.Bilinear forward
    c2 = content[:, :, 0, 0]
    s2 = style[:, :, 0, 0]
    ref = jnp.einsum("bi,oij,bj->bo", c2, weight, s2) + bias
    ref = jax.block_until_ready(ref)

    assert jnp.allclose(out[:, :, 0, 0], ref, rtol=2e-3, atol=1e-2), (
        "mismatch vs reference")

    print("KERNEL_OK")
</pallas_src>

<mosaic_0001>
module attributes {stable_mosaic.version = 11 : i64} {
  func.func @kernel(%arg0: i32, %arg1: memref<512x2xf32, #tpu.memory_space<vmem>>, %arg2: memref<2x512xf32, #tpu.memory_space<vmem>>, %arg3: memref<16x512x512xf32, #tpu.memory_space<vmem>>, %arg4: memref<16x1xf32, #tpu.memory_space<vmem>>, %arg5: memref<16x2xf32, #tpu.memory_space<vmem>>, %arg6: memref<32x512xf32, #tpu.memory_space<vmem>>) attributes {dimension_semantics = [#tpu.dimension_semantics<parallel>], iteration_bounds = array<i64: 32>, scalar_prefetch = 0 : i64, scratch_operands = 1 : i64, tpu.core_type = #tpu.core_type<tc>, window_params = [{pipeline_mode = #tpu.pipeline_mode<synchronous>, transform_indices = @transform_0, window_bounds = array<i64: 512, 2>}, {pipeline_mode = #tpu.pipeline_mode<synchronous>, transform_indices = @transform_1, window_bounds = array<i64: 2, 512>}, {transform_indices = @transform_2, window_bounds = array<i64: 16, 512, 512>}, {transform_indices = @transform_3, window_bounds = array<i64: 16, 1>}, {transform_indices = @transform_4, window_bounds = array<i64: 16, 2>}]} {
    %c0_i32 = arith.constant 0 : i32
    %c16_i32 = arith.constant 16 : i32
    %0 = arith.addi %c0_i32, %c16_i32 : i32
    %c1_i32 = arith.constant 1 : i32
    scf.for %arg7 = %c0_i32 to %0 step %c1_i32  : i32 {
      %c1_i32_11 = arith.constant 1 : i32
      %18 = arith.muli %arg7, %c1_i32_11 : i32
      %c0_i32_12 = arith.constant 0 : i32
      %19 = arith.addi %c0_i32_12, %18 : i32
      %cst_13 = arith.constant 0.000000e+00 : f32
      %20 = vector.broadcast %cst_13 : f32 to vector<8x512xf32>
      %cst_14 = arith.constant 0.000000e+00 : f32
      %21 = vector.broadcast %cst_14 : f32 to vector<8x512xf32>
      %c0_i32_15 = arith.constant 0 : i32
      %c0_i32_16 = arith.constant 0 : i32
      %22 = tpu.memref_slice %arg3[%19, %c0_i32_15, %c0_i32_16] : memref<16x512x512xf32, #tpu.memory_space<vmem>> -> memref<1x512x512xf32, #tpu.memory_space<vmem>>
      %23 = tpu.memref_squeeze %22 : memref<1x512x512xf32, #tpu.memory_space<vmem>> -> memref<512x512xf32, #tpu.memory_space<vmem>>
      %c0_17 = arith.constant 0 : index
      %c0_18 = arith.constant 0 : index
      %24 = vector.load %23[%c0_17, %c0_18] : memref<512x512xf32, #tpu.memory_space<vmem>>, vector<8x512xf32>
      %c0_19 = arith.constant 0 : index
      %c0_20 = arith.constant 0 : index
      %25 = vector.load %arg1[%c0_19, %c0_20] : memref<512x2xf32, #tpu.memory_space<vmem>>, vector<8x2xf32>
      %26 = vector.extract_strided_slice %25 {offsets = [0, 0], sizes = [8, 1], strides = [1, 1]} : vector<8x2xf32> to vector<8x1xf32>
      %27 = vector.broadcast %26 : vector<8x1xf32> to vector<8x512xf32>
      %28 = arith.mulf %24, %27 : vector<8x512xf32>
      %29 = arith.addf %20, %28 : vector<8x512xf32>
      %30 = vector.extract_strided_slice %25 {offsets = [0, 1], sizes = [8, 1], strides = [1, 1]} : vector<8x2xf32> to vector<8x1xf32>
      %31 = vector.broadcast %30 : vector<8x1xf32> to vector<8x512xf32>
      %32 = arith.mulf %24, %31 : vector<8x512xf32>
      %33 = arith.addf %21, %32 : vector<8x512xf32>
      %c0_i32_21 = arith.constant 0 : i32
      %c0_i32_22 = arith.constant 0 : i32
      %34 = tpu.memref_slice %arg3[%19, %c0_i32_21, %c0_i32_22] : memref<16x512x512xf32, #tpu.memory_space<vmem>> -> memref<1x512x512xf32, #tpu.memory_space<vmem>>
      %35 = tpu.memref_squeeze %34 : memref<1x512x512xf32, #tpu.memory_space<vmem>> -> memref<512x512xf32, #tpu.memory_space<vmem>>
      %c8 = arith.constant 8 : index
      %c0_23 = arith.constant 0 : index
      %36 = vector.load %35[%c8, %c0_23] : memref<512x512xf32, #tpu.memory_space<vmem>>, vector<8x512xf32>
      %c8_24 = arith.constant 8 : index
      %c0_25 = arith.constant 0 : index
      %37 = vector.load %arg1[%c8_24, %c0_25] : memref<512x2xf32, #tpu.memory_space<vmem>>, vector<8x2xf32>
      %38 = vector.extract_strided_slice %37 {offsets = [0, 0], sizes = [8, 1], strides = [1, 1]} : vector<8x2xf32> to vector<8x1xf32>
      %39 = vector.broadcast %38 : vector<8x1xf32> to vector<8x512xf32>
      %40 = arith.mulf %36, %39 : vector<8x512xf32>
      %41 = arith.addf %29, %40 : vector<8x512xf32>
      %42 = vector.extract_strided_slice %37 {offsets = [0, 1], sizes = [8, 1], strides = [1, 1]} : vector<8x2xf32> to vector<8x1xf32>
      %43 = vector.broadcast %42 : vector<8x1xf32> to vector<8x512xf32>
      %44 = arith.mulf %36, %43 : vector<8x512xf32>
      %45 = arith.addf %33, %44 : vector<8x512xf32>
      %c0_i32_26 = arith.constant 0 : i32
      %c0_i32_27 = arith.constant 0 : i32
      %46 = tpu.memref_slice %arg3[%19, %c0_i32_26, %c0_i32_27] : memref<16x512x512xf32, #tpu.memory_space<vmem>> -> memref<1x512x512xf32, #tpu.memory_space<vmem>>
      %47 = tpu.memref_squeeze %46 : memref<1x512x512xf32, #tpu.memory_space<vmem>> -> memref<512x512xf32, #tpu.memory_space<vmem>>
      %c16_28 = arith.constant 16 : index
      %c0_29 = arith.constant 0 : index
      %48 = vector.load %47[%c16_28, %c0_29] : memref<512x512xf32, #tpu.memory_space<vmem>>, vector<8x512xf32>
      %c16_30 = arith.constant 16 : index
      %c0_31 = arith.constant 0 : index
      %49 = vector.load %arg1[%c16_30, %c0_31] : memref<512x2xf32, #tpu.memory_space<vmem>>, vector<8x2xf32>
      %50 = vector.extract_strided_slice %49 {offsets = [0, 0], sizes = [8, 1], strides = [1, 1]} : vector<8x2xf32> to vector<8x1xf32>
      %51 = vector.broadcast %50 : vector<8x1xf32> to vector<8x512xf32>
      %52 = arith.mulf %48, %51 : vector<8x512xf32>
      %53 = arith.addf %41, %52 : vector<8x512xf32>
      %54 = vector.extract_strided_slice %49 {offsets = [0, 1], sizes = [8, 1], strides = [1, 1]} : vector<8x2xf32> to vector<8x1xf32>
      %55 = vector.broadcast %54 : vector<8x1xf32> to vector<8x512xf32>
      %56 = arith.mulf %48, %55 : vector<8x512xf32>
      %57 = arith.addf %45, %56 : vector<8x512xf32>
      %c0_i32_32 = arith.constant 0 : i32
      %c0_i32_33 = arith.constant 0 : i32
      %58 = tpu.memref_slice %arg3[%19, %c0_i32_32, %c0_i32_33] : memref<16x512x512xf32, #tpu.memory_space<vmem>> -> memref<1x512x512xf32, #tpu.memory_space<vmem>>
      %59 = tpu.memref_squeeze %58 : memref<1x512x512xf32, #tpu.memory_space<vmem>> -> memref<512x512xf32, #tpu.memory_space<vmem>>
      %c24 = arith.constant 24 : index
      %c0_34 = arith.constant 0 : index
      %60 = vector.load %59[%c24, %c0_34] : memref<512x512xf32, #tpu.memory_space<vmem>>, vector<8x512xf32>
      %c24_35 = arith.constant 24 : index
      %c0_36 = arith.constant 0 : index
      %61 = vector.load %arg1[%c24_35, %c0_36] : memref<512x2xf32, #tpu.memory_space<vmem>>, vector<8x2xf32>
      %62 = vector.extract_strided_slice %61 {offsets = [0, 0], sizes = [8, 1], strides = [1, 1]} : vector<8x2xf32> to vector<8x1xf32>
      %63 = vector.broadcast %62 : vector<8x1xf32> to vector<8x512xf32>
      %64 = arith.mulf %60, %63 : vector<8x512xf32>
      %65 = arith.addf %53, %64 : vector<8x512xf32>
      %66 = vector.extract_strided_slice %61 {offsets = [0, 1], sizes = [8, 1], strides = [1, 1]} : vector<8x2xf32> to vector<8x1xf32>
      %67 = vector.broadcast %66 : vector<8x1xf32> to vector<8x512xf32>
      %68 = arith.mulf %60, %67 : vector<8x512xf32>
      %69 = arith.addf %57, %68 : vector<8x512xf32>
      %c0_i32_37 = arith.constant 0 : i32
      %c0_i32_38 = arith.constant 0 : i32
      %70 = tpu.memref_slice %arg3[%19, %c0_i32_37, %c0_i32_38] : memref<16x512x512xf32, #tpu.memory_space<vmem>> -> memref<1x512x512xf32, #tpu.memory_space<vmem>>
      %71 = tpu.memref_squeeze %70 : memref<1x512x512xf32, #tpu.memory_space<vmem>> -> memref<512x512xf32, #tpu.memory_space<vmem>>
      %c32 = arith.constant 32 : index
      %c0_39 = arith.constant 0 : index
      %72 = vector.load %71[%c32, %c0_39] : memref<512x512xf32, #tpu.memory_space<vmem>>, vector<8x512xf32>
      %c32_40 = arith.constant 32 : index
      %c0_41 = arith.constant 0 : index
      %73 = vector.load %arg1[%c32_40, %c0_41] : memref<512x2xf32, #tpu.memory_space<vmem>>, vector<8x2xf32>
      %74 = vector.extract_strided_slice %73 {offsets = [0, 0], sizes = [8, 1], strides = [1, 1]} : vector<8x2xf32> to vector<8x1xf32>
      %75 = vector.broadcast %74 : vector<8x1xf32> to vector<8x512xf32>
      %76 = arith.mulf %72, %75 : vector<8x512xf32>
      %77 = arith.addf %65, %76 : vector<8x512xf32>
      %78 = vector.extract_strided_slice %73 {offsets = [0, 1], sizes = [8, 1], strides = [1, 1]} : vector<8x2xf32> to vector<8x1xf32>
      %79 = vector.broadcast %78 : vector<8x1xf32> to vector<8x512xf32>
      %80 = arith.mulf %72, %79 : vector<8x512xf32>
      %81 = arith.addf %69, %80 : vector<8x512xf32>
      %c0_i32_42 = arith.constant 0 : i32
      %c0_i32_43 = arith.constant 0 : i32
      %82 = tpu.memref_slice %arg3[%19, %c0_i32_42, %c0_i32_43] : memref<16x512x512xf32, #tpu.memory_space<vmem>> -> memref<1x512x512xf32, #tpu.memory_space<vmem>>
      %83 = tpu.memref_squeeze %82 : memref<1x512x512xf32, #tpu.memory_space<vmem>> -> memref<512x512xf32, #tpu.memory_space<vmem>>
      %c40 = arith.constant 40 : index
      %c0_44 = arith.constant 0 : index
      %84 = vector.load %83[%c40, %c0_44] : memref<512x512xf32, #tpu.memory_space<vmem>>, vector<8x512xf32>
      %c40_45 = arith.constant 40 : index
      %c0_46 = arith.constant 0 : index
      %85 = vector.load %arg1[%c40_45, %c0_46] : memref<512x2xf32, #tpu.memory_space<vmem>>, vector<8x2xf32>
      %86 = vector.extract_strided_slice %85 {offsets = [0, 0], sizes = [8, 1], strides = [1, 1]} : vector<8x2xf32> to vector<8x1xf32>
      %87 = vector.broadcast %86 : vector<8x1xf32> to vector<8x512xf32>
      %88 = arith.mulf %84, %87 : vector<8x512xf32>
      %89 = arith.addf %77, %88 : vector<8x512xf32>
      %90 = vector.extract_strided_slice %85 {offsets = [0, 1], sizes = [8, 1], strides = [1, 1]} : vector<8x2xf32> to vector<8x1xf32>
      %91 = vector.broadcast %90 : vector<8x1xf32> to vector<8x512xf32>
      %92 = arith.mulf %84, %91 : vector<8x512xf32>
      %93 = arith.addf %81, %92 : vector<8x512xf32>
      %c0_i32_47 = arith.constant 0 : i32
      %c0_i32_48 = arith.constant 0 : i32
      %94 = tpu.memref_slice %arg3[%19, %c0_i32_47, %c0_i32_48] : memref<16x512x512xf32, #tpu.memory_space<vmem>> -> memref<1x512x512xf32, #tpu.memory_space<vmem>>
      %95 = tpu.memref_squeeze %94 : memref<1x512x512xf32, #tpu.memory_space<vmem>> -> memref<512x512xf32, #tpu.memory_space<vmem>>
      %c48 = arith.constant 48 : index
      %c0_49 = arith.constant 0 : index
      %96 = vector.load %95[%c48, %c0_49] : memref<512x512xf32, #tpu.memory_space<vmem>>, vector<8x512xf32>
      %c48_50 = arith.constant 48 : index
      %c0_51 = arith.constant 0 : index
      %97 = vector.load %arg1[%c48_50, %c0_51] : memref<512x2xf32, #tpu.memory_space<vmem>>, vector<8x2xf32>
      %98 = vector.extract_strided_slice %97 {offsets = [0, 0], sizes = [8, 1], strides = [1, 1]} : vector<8x2xf32> to vector<8x1xf32>
      %99 = vector.broadcast %98 : vector<8x1xf32> to vector<8x512xf32>
      %100 = arith.mulf %96, %99 : vector<8x512xf32>
      %101 = arith.addf %89, %100 : vector<8x512xf32>
      %102 = vector.extract_strided_slice %97 {offsets = [0, 1], sizes = [8, 1], strides = [1, 1]} : vector<8x2xf32> to vector<8x1xf32>
      %103 = vector.broadcast %102 : vector<8x1xf32> to vector<8x512xf32>
      %104 = arith.mulf %96, %103 : vector<8x512xf32>
      %105 = arith.addf %93, %104 : vector<8x512xf32>
      %c0_i32_52 = arith.constant 0 : i32
      %c0_i32_53 = arith.constant 0 : i32
      %106 = tpu.memref_slice %arg3[%19, %c0_i32_52, %c0_i32_53] : memref<16x512x512xf32, #tpu.memory_space<vmem>> -> memref<1x512x512xf32, #tpu.memory_space<vmem>>
      %107 = tpu.memref_squeeze %106 : memref<1x512x512xf32, #tpu.memory_space<vmem>> -> memref<512x512xf32, #tpu.memory_space<vmem>>
      %c56 = arith.constant 56 : index
      %c0_54 = arith.constant 0 : index
      %108 = vector.load %107[%c56, %c0_54] : memref<512x512xf32, #tpu.memory_space<vmem>>, vector<8x512xf32>
      %c56_55 = arith.constant 56 : index
      %c0_56 = arith.constant 0 : index
      %109 = vector.load %arg1[%c56_55, %c0_56] : memref<512x2xf32, #tpu.memory_space<vmem>>, vector<8x2xf32>
      %110 = vector.extract_strided_slice %109 {offsets = [0, 0], sizes = [8, 1], strides = [1, 1]} : vector<8x2xf32> to vector<8x1xf32>
      %111 = vector.broadcast %110 : vector<8x1xf32> to vector<8x512xf32>
      %112 = arith.mulf %108, %111 : vector<8x512xf32>
      %113 = arith.addf %101, %112 : vector<8x512xf32>
      %114 = vector.extract_strided_slice %109 {offsets = [0, 1], sizes = [8, 1], strides = [1, 1]} : vector<8x2xf32> to vector<8x1xf32>
      %115 = vector.broadcast %114 : vector<8x1xf32> to vector<8x512xf32>
      %116 = arith.mulf %108, %115 : vector<8x512xf32>
      %117 = arith.addf %105, %116 : vector<8x512xf32>
      %c0_i32_57 = arith.constant 0 : i32
      %c0_i32_58 = arith.constant 0 : i32
      %118 = tpu.memref_slice %arg3[%19, %c0_i32_57, %c0_i32_58] : memref<16x512x512xf32, #tpu.memory_space<vmem>> -> memref<1x512x512xf32, #tpu.memory_space<vmem>>
      %119 = tpu.memref_squeeze %118 : memref<1x512x512xf32, #tpu.memory_space<vmem>> -> memref<512x512xf32, #tpu.memory_space<vmem>>
      %c64 = arith.constant 64 : index
      %c0_59 = arith.constant 0 : index
      %120 = vector.load %119[%c64, %c0_59] : memref<512x512xf32, #tpu.memory_space<vmem>>, vector<8x512xf32>
      %c64_60 = arith.constant 64 : index
      %c0_61 = arith.constant 0 : index
      %121 = vector.load %arg1[%c64_60, %c0_61] : memref<512x2xf32, #tpu.memory_space<vmem>>, vector<8x2xf32>
      %122 = vector.extract_strided_slice %121 {offsets = [0, 0], sizes = [8, 1], strides = [1, 1]} : vector<8x2xf32> to vector<8x1xf32>
      %123 = vector.broadcast %122 : vector<8x1xf32> to vector<8x512xf32>
      %124 = arith.mulf %120, %123 : vector<8x512xf32>
      %125 = arith.addf %113, %124 : vector<8x512xf32>
      %126 = vector.extract_strided_slice %121 {offsets = [0, 1], sizes = [8, 1], strides = [1, 1]} : vector<8x2xf32> to vector<8x1xf32>
      %127 = vector.broadcast %126 : vector<8x1xf32> to vector<8x512xf32>
      %128 = arith.mulf %120, %127 : vector<8x512xf32>
      %129 = arith.addf %117, %128 : vector<8x512xf32>
      %c0_i32_62 = arith.constant 0 : i32
      %c0_i32_63 = arith.constant 0 : i32
      %130 = tpu.memref_slice %arg3[%19, %c0_i32_62, %c0_i32_63] : memref<16x512x512xf32, #tpu.memory_space<vmem>> -> memref<1x512x512xf32, #tpu.memory_space<vmem>>
      %131 = tpu.memref_squeeze %130 : memref<1x512x512xf32, #tpu.memory_space<vmem>> -> memref<512x512xf32, #tpu.memory_space<vmem>>
      %c72 = arith.constant 72 : index
      %c0_64 = arith.constant 0 : index
      %132 = vector.load %131[%c72, %c0_64] : memref<512x512xf32, #tpu.memory_space<vmem>>, vector<8x512xf32>
      %c72_65 = arith.constant 72 : index
      %c0_66 = arith.constant 0 : index
      %133 = vector.load %arg1[%c72_65, %c0_66] : memref<512x2xf32, #tpu.memory_space<vmem>>, vector<8x2xf32>
      %134 = vector.extract_strided_slice %133 {offsets = [0, 0], sizes = [8, 1], strides = [1, 1]} : vector<8x2xf32> to vector<8x1xf32>
      %135 = vector.broadcast %134 : vector<8x1xf32> to vector<8x512xf32>
      %136 = arith.mulf %132, %135 : vector<8x512xf32>
      %137 = arith.addf %125, %136 : vector<8x512xf32>
      %138 = vector.extract_strided_slice %133 {offsets = [0, 1], sizes = [8, 1], strides = [1, 1]} : vector<8x2xf32> to vector<8x1xf32>
      %139 = vector.broadcast %138 : vector<8x1xf32> to vector<8x512xf32>
      %140 = arith.mulf %132, %139 : vector<8x512xf32>
      %141 = arith.addf %129, %140 : vector<8x512xf32>
      %c0_i32_67 = arith.constant 0 : i32
      %c0_i32_68 = arith.constant 0 : i32
      %142 = tpu.memref_slice %arg3[%19, %c0_i32_67, %c0_i32_68] : memref<16x512x512xf32, #tpu.memory_space<vmem>> -> memref<1x512x512xf32, #tpu.memory_space<vmem>>
      %143 = tpu.memref_squeeze %142 : memref<1x512x512xf32, #tpu.memory_space<vmem>> -> memref<512x512xf32, #tpu.memory_space<vmem>>
      %c80 = arith.constant 80 : index
      %c0_69 = arith.constant 0 : index
      %144 = vector.load %143[%c80, %c0_69] : memref<512x512xf32, #tpu.memory_space<vmem>>, vector<8x512xf32>
      %c80_70 = arith.constant 80 : index
      %c0_71 = arith.constant 0 : index
      %145 = vector.load %arg1[%c80_70, %c0_71] : memref<512x2xf32, #tpu.memory_space<vmem>>, vector<8x2xf32>
      %146 = vector.extract_strided_slice %145 {offsets = [0, 0], sizes = [8, 1], strides = [1, 1]} : vector<8x2xf32> to vector<8x1xf32>
      %147 = vector.broadcast %146 : vector<8x1xf32> to vector<8x512xf32>
      %148 = arith.mulf %144, %147 : vector<8x512xf32>
      %149 = arith.addf %137, %148 : vector<8x512xf32>
      %150 = vector.extract_strided_slice %145 {offsets = [0, 1], sizes = [8, 1], strides = [1, 1]} : vector<8x2xf32> to vector<8x1xf32>
      %151 = vector.broadcast %150 : vector<8x1xf32> to vector<8x512xf32>
      %152 = arith.mulf %144, %151 : vector<8x512xf32>
      %153 = arith.addf %141, %152 : vector<8x512xf32>
      %c0_i32_72 = arith.constant 0 : i32
      %c0_i32_73 = arith.constant 0 : i32
      %154 = tpu.memref_slice %arg3[%19, %c0_i32_72, %c0_i32_73] : memref<16x512x512xf32, #tpu.memory_space<vmem>> -> memref<1x512x512xf32, #tpu.memory_space<vmem>>
      %155 = tpu.memref_squeeze %154 : memref<1x512x512xf32, #tpu.memory_space<vmem>> -> memref<512x512xf32, #tpu.memory_space<vmem>>
      %c88 = arith.constant 88 : index
      %c0_74 = arith.constant 0 : index
      %156 = vector.load %155[%c88, %c0_74] : memref<512x512xf32, #tpu.memory_space<vmem>>, vector<8x512xf32>
      %c88_75 = arith.constant 88 : index
      %c0_76 = arith.constant 0 : index
      %157 = vector.load %arg1[%c88_75, %c0_76] : memref<512x2xf32, #tpu.memory_space<vmem>>, vector<8x2xf32>
      %158 = vector.extract_strided_slice %157 {offsets = [0, 0], sizes = [8, 1], strides = [1, 1]} : vector<8x2xf32> to vector<8x1xf32>
      %159 = vector.broadcast %158 : vector<8x1xf32> to vector<8x512xf32>
      %160 = arith.mulf %156, %159 : vector<8x512xf32>
      %161 = arith.addf %149, %160 : vector<8x512xf32>
      %162 = vector.extract_strided_slice %157 {offsets = [0, 1], sizes = [8, 1], strides = [1, 1]} : vector<8x2xf32> to vector<8x1xf32>
      %163 = vector.broadcast %162 : vector<8x1xf32> to vector<8x512xf32>
      %164 = arith.mulf %156, %163 : vector<8x512xf32>
      %165 = arith.addf %153, %164 : vector<8x512xf32>
      %c0_i32_77 = arith.constant 0 : i32
      %c0_i32_78 = arith.constant 0 : i32
      %166 = tpu.memref_slice %arg3[%19, %c0_i32_77, %c0_i32_78] : memref<16x512x512xf32, #tpu.memory_space<vmem>> -> memref<1x512x512xf32, #tpu.memory_space<vmem>>
      %167 = tpu.memref_squeeze %166 : memref<1x512x512xf32, #tpu.memory_space<vmem>> -> memref<512x512xf32, #tpu.memory_space<vmem>>
      %c96 = arith.constant 96 : index
      %c0_79 = arith.constant 0 : index
      %168 = vector.load %167[%c96, %c0_79] : memref<512x512xf32, #tpu.memory_space<vmem>>, vector<8x512xf32>
      %c96_80 = arith.constant 96 : index
      %c0_81 = arith.constant 0 : index
      %169 = vector.load %arg1[%c96_80, %c0_81] : memref<512x2xf32, #tpu.memory_space<vmem>>, vector<8x2xf32>
      %170 = vector.extract_strided_slice %169 {offsets = [0, 0], sizes = [8, 1], strides = [1, 1]} : vector<8x2xf32> to vector<8x1xf32>
      %171 = vector.broadcast %170 : vector<8x1xf32> to vector<8x512xf32>
      %172 = arith.mulf %168, %171 : vector<8x512xf32>
      %173 = arith.addf %161, %172 : vector<8x512xf32>
      %174 = vector.extract_strided_slice %169 {offsets = [0, 1], sizes = [8, 1], strides = [1, 1]} : vector<8x2xf32> to vector<8x1xf32>
      %175 = vector.broadcast %174 : vector<8x1xf32> to vector<8x512xf32>
      %176 = arith.mulf %168, %175 : vector<8x512xf32>
      %177 = arith.addf %165, %176 : vector<8x512xf32>
      %c0_i32_82 = arith.constant 0 : i32
      %c0_i32_83 = arith.constant 0 : i32
      %178 = tpu.memref_slice %arg3[%19, %c0_i32_82, %c0_i32_83] : memref<16x512x512xf32, #tpu.memory_space<vmem>> -> memref<1x512x512xf32, #tpu.memory_space<vmem>>
      %179 = tpu.memref_squeeze %178 : memref<1x512x512xf32, #tpu.memory_space<vmem>> -> memref<512x512xf32, #tpu.memory_space<vmem>>
      %c104 = arith.constant 104 : index
      %c0_84 = arith.constant 0 : index
      %180 = vector.load %179[%c104, %c0_84] : memref<512x512xf32, #tpu.memory_space<vmem>>, vector<8x512xf32>
      %c104_85 = arith.constant 104 : index
      %c0_86 = arith.constant 0 : index
      %181 = vector.load %arg1[%c104_85, %c0_86] : memref<512x2xf32, #tpu.memory_space<vmem>>, vector<8x2xf32>
      %182 = vector.extract_strided_slice %181 {offsets = [0, 0], sizes = [8, 1], strides = [1, 1]} : vector<8x2xf32> to vector<8x1xf32>
      %183 = vector.broadcast %182 : vector<8x1xf32> to vector<8x512xf32>
      %184 = arith.mulf %180, %183 : vector<8x512xf32>
      %185 = arith.addf %173, %184 : vector<8x512xf32>
      %186 = vector.extract_strided_slice %181 {offsets = [0, 1], sizes = [8, 1], strides = [1, 1]} : vector<8x2xf32> to vector<8x1xf32>
      %187 = vector.broadcast %186 : vector<8x1xf32> to vector<8x512xf32>
      %188 = arith.mulf %180, %187 : vector<8x512xf32>
      %189 = arith.addf %177, %188 : vector<8x512xf32>
      %c0_i32_87 = arith.constant 0 : i32
      %c0_i32_88 = arith.constant 0 : i32
      %190 = tpu.memref_slice %arg3[%19, %c0_i32_87, %c0_i32_88] : memref<16x512x512xf32, #tpu.memory_space<vmem>> -> memref<1x512x512xf32, #tpu.memory_space<vmem>>
      %191 = tpu.memref_squeeze %190 : memref<1x512x512xf32, #tpu.memory_space<vmem>> -> memref<512x512xf32, #tpu.memory_space<vmem>>
      %c112 = arith.constant 112 : index
      %c0_89 = arith.constant 0 : index
      %192 = vector.load %191[%c112, %c0_89] : memref<512x512xf32, #tpu.memory_space<vmem>>, vector<8x512xf32>
      %c112_90 = arith.constant 112 : index
      %c0_91 = arith.constant 0 : index
      %193 = vector.load %arg1[%c112_90, %c0_91] : memref<512x2xf32, #tpu.memory_space<vmem>>, vector<8x2xf32>
      %194 = vector.extract_strided_slice %193 {offsets = [0, 0], sizes = [8, 1], strides = [1, 1]} : vector<8x2xf32> to vector<8x1xf32>
      %195 = vector.broadcast %194 : vector<8x1xf32> to vector<8x512xf32>
      %196 = arith.mulf %192, %195 : vector<8x512xf32>
      %197 = arith.addf %185, %196 : vector<8x512xf32>
      %198 = vector.extract_strided_slice %193 {offsets = [0, 1], sizes = [8, 1], strides = [1, 1]} : vector<8x2xf32> to vector<8x1xf32>
      %199 = vector.broadcast %198 : vector<8x1xf32> to vector<8x512xf32>
      %200 = arith.mulf %192, %199 : vector<8x512xf32>
      %201 = arith.addf %189, %200 : vector<8x512xf32>
      %c0_i32_92 = arith.constant 0 : i32
      %c0_i32_93 = arith.constant 0 : i32
      %202 = tpu.memref_slice %arg3[%19, %c0_i32_92, %c0_i32_93] : memref<16x512x512xf32, #tpu.memory_space<vmem>> -> memref<1x512x512xf32, #tpu.memory_space<vmem>>
      %203 = tpu.memref_squeeze %202 : memref<1x512x512xf32, #tpu.memory_space<vmem>> -> memref<512x512xf32, #tpu.memory_space<vmem>>
      %c120 = arith.constant 120 : index
      %c0_94 = arith.constant 0 : index
      %204 = vector.load %203[%c120, %c0_94] : memref<512x512xf32, #tpu.memory_space<vmem>>, vector<8x512xf32>
      %c120_95 = arith.constant 120 : index
      %c0_96 = arith.constant 0 : index
      %205 = vector.load %arg1[%c120_95, %c0_96] : memref<512x2xf32, #tpu.memory_space<vmem>>, vector<8x2xf32>
      %206 = vector.extract_strided_slice %205 {offsets = [0, 0], sizes = [8, 1], strides = [1, 1]} : vector<8x2xf32> to vector<8x1xf32>
      %207 = vector.broadcast %206 : vector<8x1xf32> to vector<8x512xf32>
      %208 = arith.mulf %204, %207 : vector<8x512xf32>
      %209 = arith.addf %197, %208 : vector<8x512xf32>
      %210 = vector.extract_strided_slice %205 {offsets = [0, 1], sizes = [8, 1], strides = [1, 1]} : vector<8x2xf32> to vector<8x1xf32>
      %211 = vector.broadcast %210 : vector<8x1xf32> to vector<8x512xf32>
      %212 = arith.mulf %204, %211 : vector<8x512xf32>
      %213 = arith.addf %201, %212 : vector<8x512xf32>
      %c0_i32_97 = arith.constant 0 : i32
      %c0_i32_98 = arith.constant 0 : i32
      %214 = tpu.memref_slice %arg3[%19, %c0_i32_97, %c0_i32_98] : memref<16x512x512xf32, #tpu.memory_space<vmem>> -> memref<1x512x512xf32, #tpu.memory_space<vmem>>
      %215 = tpu.memref_squeeze %214 : memref<1x512x512xf32, #tpu.memory_space<vmem>> -> memref<512x512xf32, #tpu.memory_space<vmem>>
      %c128 = arith.constant 128 : index
      %c0_99 = arith.constant 0 : index
      %216 = vector.load %215[%c128, %c0_99] : memref<512x512xf32, #tpu.memory_space<vmem>>, vector<8x512xf32>
      %c128_100 = arith.constant 128 : index
      %c0_101 = arith.constant 0 : index
      %217 = vector.load %arg1[%c128_100, %c0_101] : memref<512x2xf32, #tpu.memory_space<vmem>>, vector<8x2xf32>
      %218 = vector.extract_strided_slice %217 {offsets = [0, 0], sizes = [8, 1], strides = [1, 1]} : vector<8x2xf32> to vector<8x1xf32>
      %219 = vector.broadcast %218 : vector<8x1xf32> to vector<8x512xf32>
      %220 = arith.mulf %216, %219 : vector<8x512xf32>
      %221 = arith.addf %209, %220 : vector<8x512xf32>
      %222 = vector.extract_strided_slice %217 {offsets = [0, 1], sizes = [8, 1], strides = [1, 1]} : vector<8x2xf32> to vector<8x1xf32>
      %223 = vector.broadcast %222 : vector<8x1xf32> to vector<8x512xf32>
      %224 = arith.mulf %216, %223 : vector<8x512xf32>
      %225 = arith.addf %213, %224 : vector<8x512xf32>
      %c0_i32_102 = arith.constant 0 : i32
      %c0_i32_103 = arith.constant 0 : i32
      %226 = tpu.memref_slice %arg3[%19, %c0_i32_102, %c0_i32_103] : memref<16x512x512xf32, #tpu.memory_space<vmem>> -> memref<1x512x512xf32, #tpu.memory_space<vmem>>
      %227 = tpu.memref_squeeze %226 : memref<1x512x512xf32, #tpu.memory_space<vmem>> -> memref<512x512xf32, #tpu.memory_space<vmem>>
      %c136 = arith.constant 136 : index
      %c0_104 = arith.constant 0 : index
      %228 = vector.load %227[%c136, %c0_104] : memref<512x512xf32, #tpu.memory_space<vmem>>, vector<8x512xf32>
      %c136_105 = arith.constant 136 : index
      %c0_106 = arith.constant 0 : index
      %229 = vector.load %arg1[%c136_105, %c0_106] : memref<512x2xf32, #tpu.memory_space<vmem>>, vector<8x2xf32>
      %230 = vector.extract_strided_slice %229 {offsets = [0, 0], sizes = [8, 1], strides = [1, 1]} : vector<8x2xf32> to vector<8x1xf32>
      %231 = vector.broadcast %230 : vector<8x1xf32> to vector<8x512xf32>
      %232 = arith.mulf %228, %231 : vector<8x512xf32>
      %233 = arith.addf %221, %232 : vector<8x512xf32>
      %234 = vector.extract_strided_slice %229 {offsets = [0, 1], sizes = [8, 1], strides = [1, 1]} : vector<8x2xf32> to vector<8x1xf32>
      %235 = vector.broadcast %234 : vector<8x1xf32> to vector<8x512xf32>
      %236 = arith.mulf %228, %235 : vector<8x512xf32>
      %237 = arith.addf %225, %236 : vector<8x512xf32>
      %c0_i32_107 = arith.constant 0 : i32
      %c0_i32_108 = arith.constant 0 : i32
      %238 = tpu.memref_slice %arg3[%19, %c0_i32_107, %c0_i32_108] : memref<16x512x512xf32, #tpu.memory_space<vmem>> -> memref<1x512x512xf32, #tpu.memory_space<vmem>>
      %239 = tpu.memref_squeeze %238 : memref<1x512x512xf32, #tpu.memory_space<vmem>> -> memref<512x512xf32, #tpu.memory_space<vmem>>
      %c144 = arith.constant 144 : index
      %c0_109 = arith.constant 0 : index
      %240 = vector.load %239[%c144, %c0_109] : memref<512x512xf32, #tpu.memory_space<vmem>>, vector<8x512xf32>
      %c144_110 = arith.constant 144 : index
      %c0_111 = arith.constant 0 : index
      %241 = vector.load %arg1[%c144_110, %c0_111] : memref<512x2xf32, #tpu.memory_space<vmem>>, vector<8x2xf32>
      %242 = vector.extract_strided_slice %241 {offsets = [0, 0], sizes = [8, 1], strides = [1, 1]} : vector<8x2xf32> to vector<8x1xf32>
      %243 = vector.broadcast %242 : vector<8x1xf32> to vector<8x512xf32>
      %244 = arith.mulf %240, %243 : vector<8x512xf32>
      %245 = arith.addf %233, %244 : vector<8x512xf32>
      %246 = vector.extract_strided_slice %241 {offsets = [0, 1], sizes = [8, 1], strides = [1, 1]} : vector<8x2xf32> to vector<8x1xf32>
      %247 = vector.broadcast %246 : vector<8x1xf32> to vector<8x512xf32>
      %248 = arith.mulf %240, %247 : vector<8x512xf32>
      %249 = arith.addf %237, %248 : vector<8x512xf32>
      %c0_i32_112 = arith.constant 0 : i32
      %c0_i32_113 = arith.constant 0 : i32
      %250 = tpu.memref_slice %arg3[%19, %c0_i32_112, %c0_i32_113] : memref<16x512x512xf32, #tpu.memory_space<vmem>> -> memref<1x512x512xf32, #tpu.memory_space<vmem>>
      %251 = tpu.memref_squeeze %250 : memref<1x512x512xf32, #tpu.memory_space<vmem>> -> memref<512x512xf32, #tpu.memory_space<vmem>>
      %c152 = arith.constant 152 : index
      %c0_114 = arith.constant 0 : index
      %252 = vector.load %251[%c152, %c0_114] : memref<512x512xf32, #tpu.memory_space<vmem>>, vector<8x512xf32>
      %c152_115 = arith.constant 152 : index
      %c0_116 = arith.constant 0 : index
      %253 = vector.load %arg1[%c152_115, %c0_116] : memref<512x2xf32, #tpu.memory_space<vmem>>, vector<8x2xf32>
      %254 = vector.extract_strided_slice %253 {offsets = [0, 0], sizes = [8, 1], strides = [1, 1]} : vector<8x2xf32> to vector<8x1xf32>
      %255 = vector.broadcast %254 : vector<8x1xf32> to vector<8x512xf32>
      %256 = arith.mulf %252, %255 : vector<8x512xf32>
      %257 = arith.addf %245, %256 : vector<8x512xf32>
      %258 = vector.extract_strided_slice %253 {offsets = [0, 1], sizes = [8, 1], strides = [1, 1]} : vector<8x2xf32> to vector<8x1xf32>
      %259 = vector.broadcast %258 : vector<8x1xf32> to vector<8x512xf32>
      %260 = arith.mulf %252, %259 : vector<8x512xf32>
      %261 = arith.addf %249, %260 : vector<8x512xf32>
      %c0_i32_117 = arith.constant 0 : i32
      %c0_i32_118 = arith.constant 0 : i32
      %262 = tpu.memref_slice %arg3[%19, %c0_i32_117, %c0_i32_118] : memref<16x512x512xf32, #tpu.memory_space<vmem>> -> memref<1x512x512xf32, #tpu.memory_space<vmem>>
      %263 = tpu.memref_squeeze %262 : memref<1x512x512xf32, #tpu.memory_space<vmem>> -> memref<512x512xf32, #tpu.memory_space<vmem>>
      %c160 = arith.constant 160 : index
      %c0_119 = arith.constant 0 : index
      %264 = vector.load %263[%c160, %c0_119] : memref<512x512xf32, #tpu.memory_space<vmem>>, vector<8x512xf32>
      %c160_120 = arith.constant 160 : index
      %c0_121 = arith.constant 0 : index
      %265 = vector.load %arg1[%c160_120, %c0_121] : memref<512x2xf32, #tpu.memory_space<vmem>>, vector<8x2xf32>
      %266 = vector.extract_strided_slice %265 {offsets = [0, 0], sizes = [8, 1], strides = [1, 1]} : vector<8x2xf32> to vector<8x1xf32>
      %267 = vector.broadcast %266 : vector<8x1xf32> to vector<8x512xf32>
      %268 = arith.mulf %264, %267 : vector<8x512xf32>
      %269 = arith.addf %257, %268 : vector<8x512xf32>
      %270 = vector.extract_strided_slice %265 {offsets = [0, 1], sizes = [8, 1], strides = [1, 1]} : vector<8x2xf32> to vector<8x1xf32>
      %271 = vector.broadcast %270 : vector<8x1xf32> to vector<8x512xf32>
      %272 = arith.mulf %264, %271 : vector<8x512xf32>
      %273 = arith.addf %261, %272 : vector<8x512xf32>
      %c0_i32_122 = arith.constant 0 : i32
      %c0_i32_123 = arith.constant 0 : i32
      %274 = tpu.memref_slice %arg3[%19, %c0_i32_122, %c0_i32_123] : memref<16x512x512xf32, #tpu.memory_space<vmem>> -> memref<1x512x512xf32, #tpu.memory_space<vmem>>
      %275 = tpu.memref_squeeze %274 : memref<1x512x512xf32, #tpu.memory_space<vmem>> -> memref<512x512xf32, #tpu.memory_space<vmem>>
      %c168 = arith.constant 168 : index
      %c0_124 = arith.constant 0 : index
      %276 = vector.load %275[%c168, %c0_124] : memref<512x512xf32, #tpu.memory_space<vmem>>, vector<8x512xf32>
      %c168_125 = arith.constant 168 : index
      %c0_126 = arith.constant 0 : index
      %277 = vector.load %arg1[%c168_125, %c0_126] : memref<512x2xf32, #tpu.memory_space<vmem>>, vector<8x2xf32>
      %278 = vector.extract_strided_slice %277 {offsets = [0, 0], sizes = [8, 1], strides = [1, 1]} : vector<8x2xf32> to vector<8x1xf32>
      %279 = vector.broadcast %278 : vector<8x1xf32> to vector<8x512xf32>
      %280 = arith.mulf %276, %279 : vector<8x512xf32>
      %281 = arith.addf %269, %280 : vector<8x512xf32>
      %282 = vector.extract_strided_slice %277 {offsets = [0, 1], sizes = [8, 1], strides = [1, 1]} : vector<8x2xf32> to vector<8x1xf32>
      %283 = vector.broadcast %282 : vector<8x1xf32> to vector<8x512xf32>
      %284 = arith.mulf %276, %283 : vector<8x512xf32>
      %285 = arith.addf %273, %284 : vector<8x512xf32>
      %c0_i32_127 = arith.constant 0 : i32
      %c0_i32_128 = arith.constant 0 : i32
      %286 = tpu.memref_slice %arg3[%19, %c0_i32_127, %c0_i32_128] : memref<16x512x512xf32, #tpu.memory_space<vmem>> -> memref<1x512x512xf32, #tpu.memory_space<vmem>>
      %287 = tpu.memref_squeeze %286 : memref<1x512x512xf32, #tpu.memory_space<vmem>> -> memref<512x512xf32, #tpu.memory_space<vmem>>
      %c176 = arith.constant 176 : index
      %c0_129 = arith.constant 0 : index
      %288 = vector.load %287[%c176, %c0_129] : memref<512x512xf32, #tpu.memory_space<vmem>>, vector<8x512xf32>
      %c176_130 = arith.constant 176 : index
      %c0_131 = arith.constant 0 : index
      %289 = vector.load %arg1[%c176_130, %c0_131] : memref<512x2xf32, #tpu.memory_space<vmem>>, vector<8x2xf32>
      %290 = vector.extract_strided_slice %289 {offsets = [0, 0], sizes = [8, 1], strides = [1, 1]} : vector<8x2xf32> to vector<8x1xf32>
      %291 = vector.broadcast %290 : vector<8x1xf32> to vector<8x512xf32>
      %292 = arith.mulf %288, %291 : vector<8x512xf32>
      %293 = arith.addf %281, %292 : vector<8x512xf32>
      %294 = vector.extract_strided_slice %289 {offsets = [0, 1], sizes = [8, 1], strides = [1, 1]} : vector<8x2xf32> to vector<8x1xf32>
      %295 = vector.broadcast %294 : vector<8x1xf32> to vector<8x512xf32>
      %296 = arith.mulf %288, %295 : vector<8x512xf32>
      %297 = arith.addf %285, %296 : vector<8x512xf32>
      %c0_i32_132 = arith.constant 0 : i32
      %c0_i32_133 = arith.constant 0 : i32
      %298 = tpu.memref_slice %arg3[%19, %c0_i32_132, %c0_i32_133] : memref<16x512x512xf32, #tpu.memory_space<vmem>> -> memref<1x512x512xf32, #tpu.memory_space<vmem>>
      %299 = tpu.memref_squeeze %298 : memref<1x512x512xf32, #tpu.memory_space<vmem>> -> memref<512x512xf32, #tpu.memory_space<vmem>>
      %c184 = arith.constant 184 : index
      %c0_134 = arith.constant 0 : index
      %300 = vector.load %299[%c184, %c0_134] : memref<512x512xf32, #tpu.memory_space<vmem>>, vector<8x512xf32>
      %c184_135 = arith.constant 184 : index
      %c0_136 = arith.constant 0 : index
      %301 = vector.load %arg1[%c184_135, %c0_136] : memref<512x2xf32, #tpu.memory_space<vmem>>, vector<8x2xf32>
      %302 = vector.extract_strided_slice %301 {offsets = [0, 0], sizes = [8, 1], strides = [1, 1]} : vector<8x2xf32> to vector<8x1xf32>
      %303 = vector.broadcast %302 : vector<8x1xf32> to vector<8x512xf32>
      %304 = arith.mulf %300, %303 : vector<8x512xf32>
      %305 = arith.addf %293, %304 : vector<8x512xf32>
      %306 = vector.extract_strided_slice %301 {offsets = [0, 1], sizes = [8, 1], strides = [1, 1]} : vector<8x2xf32> to vector<8x1xf32>
      %307 = vector.broadcast %306 : vector<8x1xf32> to vector<8x512xf32>
      %308 = arith.mulf %300, %307 : vector<8x512xf32>
      %309 = arith.addf %297, %308 : vector<8x512xf32>
      %c0_i32_137 = arith.constant 0 : i32
      %c0_i32_138 = arith.constant 0 : i32
      %310 = tpu.memref_slice %arg3[%19, %c0_i32_137, %c0_i32_138] : memref<16x512x512xf32, #tpu.memory_space<vmem>> -> memref<1x512x512xf32, #tpu.memory_space<vmem>>
      %311 = tpu.memref_squeeze %310 : memref<1x512x512xf32, #tpu.memory_space<vmem>> -> memref<512x512xf32, #tpu.memory_space<vmem>>
      %c192 = arith.constant 192 : index
      %c0_139 = arith.constant 0 : index
      %312 = vector.load %311[%c192, %c0_139] : memref<512x512xf32, #tpu.memory_space<vmem>>, vector<8x512xf32>
      %c192_140 = arith.constant 192 : index
      %c0_141 = arith.constant 0 : index
      %313 = vector.load %arg1[%c192_140, %c0_141] : memref<512x2xf32, #tpu.memory_space<vmem>>, vector<8x2xf32>
      %314 = vector.extract_strided_slice %313 {offsets = [0, 0], sizes = [8, 1], strides = [1, 1]} : vector<8x2xf32> to vector<8x1xf32>
      %315 = vector.broadcast %314 : vector<8x1xf32> to vector<8x512xf32>
      %316 = arith.mulf %312, %315 : vector<8x512xf32>
      %317 = arith.addf %305, %316 : vector<8x512xf32>
      %318 = vector.extract_strided_slice %313 {offsets = [0, 1], sizes = [8, 1], strides = [1, 1]} : vector<8x2xf32> to vector<8x1xf32>
      %319 = vector.broadcast %318 : vector<8x1xf32> to vector<8x512xf32>
      %320 = arith.mulf %312, %319 : vector<8x512xf32>
      %321 = arith.addf %309, %320 : vector<8x512xf32>
      %c0_i32_142 = arith.constant 0 : i32
      %c0_i32_143 = arith.constant 0 : i32
      %322 = tpu.memref_slice %arg3[%19, %c0_i32_142, %c0_i32_143] : memref<16x512x512xf32, #tpu.memory_space<vmem>> -> memref<1x512x512xf32, #tpu.memory_space<vmem>>
      %323 = tpu.memref_squeeze %322 : memref<1x512x512xf32, #tpu.memory_space<vmem>> -> memref<512x512xf32, #tpu.memory_space<vmem>>
      %c200 = arith.constant 200 : index
      %c0_144 = arith.constant 0 : index
      %324 = vector.load %323[%c200, %c0_144] : memref<512x512xf32, #tpu.memory_space<vmem>>, vector<8x512xf32>
      %c200_145 = arith.constant 200 : index
      %c0_146 = arith.constant 0 : index
      %325 = vector.load %arg1[%c200_145, %c0_146] : memref<512x2xf32, #tpu.memory_space<vmem>>, vector<8x2xf32>
      %326 = vector.extract_strided_slice %325 {offsets = [0, 0], sizes = [8, 1], strides = [1, 1]} : vector<8x2xf32> to vector<8x1xf32>
      %327 = vector.broadcast %326 : vector<8x1xf32> to vector<8x512xf32>
      %328 = arith.mulf %324, %327 : vector<8x512xf32>
      %329 = arith.addf %317, %328 : vector<8x512xf32>
      %330 = vector.extract_strided_slice %325 {offsets = [0, 1], sizes = [8, 1], strides = [1, 1]} : vector<8x2xf32> to vector<8x1xf32>
      %331 = vector.broadcast %330 : vector<8x1xf32> to vector<8x512xf32>
      %332 = arith.mulf %324, %331 : vector<8x512xf32>
      %333 = arith.addf %321, %332 : vector<8x512xf32>
      %c0_i32_147 = arith.constant 0 : i32
      %c0_i32_148 = arith.constant 0 : i32
      %334 = tpu.memref_slice %arg3[%19, %c0_i32_147, %c0_i32_148] : memref<16x512x512xf32, #tpu.memory_space<vmem>> -> memref<1x512x512xf32, #tpu.memory_space<vmem>>
      %335 = tpu.memref_squeeze %334 : memref<1x512x512xf32, #tpu.memory_space<vmem>> -> memref<512x512xf32, #tpu.memory_space<vmem>>
      %c208 = arith.constant 208 : index
      %c0_149 = arith.constant 0 : index
      %336 = vector.load %335[%c208, %c0_149] : memref<512x512xf32, #tpu.memory_space<vmem>>, vector<8x512xf32>
      %c208_150 = arith.constant 208 : index
      %c0_151 = arith.constant 0 : index
      %337 = vector.load %arg1[%c208_150, %c0_151] : memref<512x2xf32, #tpu.memory_space<vmem>>, vector<8x2xf32>
      %338 = vector.extract_strided_slice %337 {offsets = [0, 0], sizes = [8, 1], strides = [1, 1]} : vector<8x2xf32> to vector<8x1xf32>
      %339 = vector.broadcast %338 : vector<8x1xf32> to vector<8x512xf32>
      %340 = arith.mulf %336, %339 : vector<8x512xf32>
      %341 = arith.addf %329, %340 : vector<8x512xf32>
      %342 = vector.extract_strided_slice %337 {offsets = [0, 1], sizes = [8, 1], strides = [1, 1]} : vector<8x2xf32> to vector<8x1xf32>
      %343 = vector.broadcast %342 : vector<8x1xf32> to vector<8x512xf32>
      %344 = arith.mulf %336, %343 : vector<8x512xf32>
      %345 = arith.addf %333, %344 : vector<8x512xf32>
      %c0_i32_152 = arith.constant 0 : i32
      %c0_i32_153 = arith.constant 0 : i32
      %346 = tpu.memref_slice %arg3[%19, %c0_i32_152, %c0_i32_153] : memref<16x512x512xf32, #tpu.memory_space<vmem>> -> memref<1x512x512xf32, #tpu.memory_space<vmem>>
      %347 = tpu.memref_squeeze %346 : memref<1x512x512xf32, #tpu.memory_space<vmem>> -> memref<512x512xf32, #tpu.memory_space<vmem>>
      %c216 = arith.constant 216 : index
      %c0_154 = arith.constant 0 : index
      %348 = vector.load %347[%c216, %c0_154] : memref<512x512xf32, #tpu.memory_space<vmem>>, vector<8x512xf32>
      %c216_155 = arith.constant 216 : index
      %c0_156 = arith.constant 0 : index
      %349 = vector.load %arg1[%c216_155, %c0_156] : memref<512x2xf32, #tpu.memory_space<vmem>>, vector<8x2xf32>
      %350 = vector.extract_strided_slice %349 {offsets = [0, 0], sizes = [8, 1], strides = [1, 1]} : vector<8x2xf32> to vector<8x1xf32>
      %351 = vector.broadcast %350 : vector<8x1xf32> to vector<8x512xf32>
      %352 = arith.mulf %348, %351 : vector<8x512xf32>
      %353 = arith.addf %341, %352 : vector<8x512xf32>
      %354 = vector.extract_strided_slice %349 {offsets = [0, 1], sizes = [8, 1], strides = [1, 1]} : vector<8x2xf32> to vector<8x1xf32>
      %355 = vector.broadcast %354 : vector<8x1xf32> to vector<8x512xf32>
      %356 = arith.mulf %348, %355 : vector<8x512xf32>
      %357 = arith.addf %345, %356 : vector<8x512xf32>
      %c0_i32_157 = arith.constant 0 : i32
      %c0_i32_158 = arith.constant 0 : i32
      %358 = tpu.memref_slice %arg3[%19, %c0_i32_157, %c0_i32_158] : memref<16x512x512xf32, #tpu.memory_space<vmem>> -> memref<1x512x512xf32, #tpu.memory_space<vmem>>
      %359 = tpu.memref_squeeze %358 : memref<1x512x512xf32, #tpu.memory_space<vmem>> -> memref<512x512xf32, #tpu.memory_space<vmem>>
      %c224 = arith.constant 224 : index
      %c0_159 = arith.constant 0 : index
      %360 = vector.load %359[%c224, %c0_159] : memref<512x512xf32, #tpu.memory_space<vmem>>, vector<8x512xf32>
      %c224_160 = arith.constant 224 : index
      %c0_161 = arith.constant 0 : index
      %361 = vector.load %arg1[%c224_160, %c0_161] : memref<512x2xf32, #tpu.memory_space<vmem>>, vector<8x2xf32>
      %362 = vector.extract_strided_slice %361 {offsets = [0, 0], sizes = [8, 1], strides = [1, 1]} : vector<8x2xf32> to vector<8x1xf32>
      %363 = vector.broadcast %362 : vector<8x1xf32> to vector<8x512xf32>
      %364 = arith.mulf %360, %363 : vector<8x512xf32>
      %365 = arith.addf %353, %364 : vector<8x512xf32>
      %366 = vector.extract_strided_slice %361 {offsets = [0, 1], sizes = [8, 1], strides = [1, 1]} : vector<8x2xf32> to vector<8x1xf32>
      %367 = vector.broadcast %366 : vector<8x1xf32> to vector<8x512xf32>
      %368 = arith.mulf %360, %367 : vector<8x512xf32>
      %369 = arith.addf %357, %368 : vector<8x512xf32>
      %c0_i32_162 = arith.constant 0 : i32
      %c0_i32_163 = arith.constant 0 : i32
      %370 = tpu.memref_slice %arg3[%19, %c0_i32_162, %c0_i32_163] : memref<16x512x512xf32, #tpu.memory_space<vmem>> -> memref<1x512x512xf32, #tpu.memory_space<vmem>>
      %371 = tpu.memref_squeeze %370 : memref<1x512x512xf32, #tpu.memory_space<vmem>> -> memref<512x512xf32, #tpu.memory_space<vmem>>
      %c232 = arith.constant 232 : index
      %c0_164 = arith.constant 0 : index
      %372 = vector.load %371[%c232, %c0_164] : memref<512x512xf32, #tpu.memory_space<vmem>>, vector<8x512xf32>
      %c232_165 = arith.constant 232 : index
      %c0_166 = arith.constant 0 : index
      %373 = vector.load %arg1[%c232_165, %c0_166] : memref<512x2xf32, #tpu.memory_space<vmem>>, vector<8x2xf32>
      %374 = vector.extract_strided_slice %373 {offsets = [0, 0], sizes = [8, 1], strides = [1, 1]} : vector<8x2xf32> to vector<8x1xf32>
      %375 = vector.broadcast %374 : vector<8x1xf32> to vector<8x512xf32>
      %376 = arith.mulf %372, %375 : vector<8x512xf32>
      %377 = arith.addf %365, %376 : vector<8x512xf32>
      %378 = vector.extract_strided_slice %373 {offsets = [0, 1], sizes = [8, 1], strides = [1, 1]} : vector<8x2xf32> to vector<8x1xf32>
      %379 = vector.broadcast %378 : vector<8x1xf32> to vector<8x512xf32>
      %380 = arith.mulf %372, %379 : vector<8x512xf32>
      %381 = arith.addf %369, %380 : vector<8x512xf32>
      %c0_i32_167 = arith.constant 0 : i32
      %c0_i32_168 = arith.constant 0 : i32
      %382 = tpu.memref_slice %arg3[%19, %c0_i32_167, %c0_i32_168] : memref<16x512x512xf32, #tpu.memory_space<vmem>> -> memref<1x512x512xf32, #tpu.memory_space<vmem>>
      %383 = tpu.memref_squeeze %382 : memref<1x512x512xf32, #tpu.memory_space<vmem>> -> memref<512x512xf32, #tpu.memory_space<vmem>>
      %c240 = arith.constant 240 : index
      %c0_169 = arith.constant 0 : index
      %384 = vector.load %383[%c240, %c0_169] : memref<512x512xf32, #tpu.memory_space<vmem>>, vector<8x512xf32>
      %c240_170 = arith.constant 240 : index
      %c0_171 = arith.constant 0 : index
      %385 = vector.load %arg1[%c240_170, %c0_171] : memref<512x2xf32, #tpu.memory_space<vmem>>, vector<8x2xf32>
      %386 = vector.extract_strided_slice %385 {offsets = [0, 0], sizes = [8, 1], strides = [1, 1]} : vector<8x2xf32> to vector<8x1xf32>
      %387 = vector.broadcast %386 : vector<8x1xf32> to vector<8x512xf32>
      %388 = arith.mulf %384, %387 : vector<8x512xf32>
      %389 = arith.addf %377, %388 : vector<8x512xf32>
      %390 = vector.extract_strided_slice %385 {offsets = [0, 1], sizes = [8, 1], strides = [1, 1]} : vector<8x2xf32> to vector<8x1xf32>
      %391 = vector.broadcast %390 : vector<8x1xf32> to vector<8x512xf32>
      %392 = arith.mulf %384, %391 : vector<8x512xf32>
      %393 = arith.addf %381, %392 : vector<8x512xf32>
      %c0_i32_172 = arith.constant 0 : i32
      %c0_i32_173 = arith.constant 0 : i32
      %394 = tpu.memref_slice %arg3[%19, %c0_i32_172, %c0_i32_173] : memref<16x512x512xf32, #tpu.memory_space<vmem>> -> memref<1x512x512xf32, #tpu.memory_space<vmem>>
      %395 = tpu.memref_squeeze %394 : memref<1x512x512xf32, #tpu.memory_space<vmem>> -> memref<512x512xf32, #tpu.memory_space<vmem>>
      %c248 = arith.constant 248 : index
      %c0_174 = arith.constant 0 : index
      %396 = vector.load %395[%c248, %c0_174] : memref<512x512xf32, #tpu.memory_space<vmem>>, vector<8x512xf32>
      %c248_175 = arith.constant 248 : index
      %c0_176 = arith.constant 0 : index
      %397 = vector.load %arg1[%c248_175, %c0_176] : memref<512x2xf32, #tpu.memory_space<vmem>>, vector<8x2xf32>
      %398 = vector.extract_strided_slice %397 {offsets = [0, 0], sizes = [8, 1], strides = [1, 1]} : vector<8x2xf32> to vector<8x1xf32>
      %399 = vector.broadcast %398 : vector<8x1xf32> to vector<8x512xf32>
      %400 = arith.mulf %396, %399 : vector<8x512xf32>
      %401 = arith.addf %389, %400 : vector<8x512xf32>
      %402 = vector.extract_strided_slice %397 {offsets = [0, 1], sizes = [8, 1], strides = [1, 1]} : vector<8x2xf32> to vector<8x1xf32>
      %403 = vector.broadcast %402 : vector<8x1xf32> to vector<8x512xf32>
      %404 = arith.mulf %396, %403 : vector<8x512xf32>
      %405 = arith.addf %393, %404 : vector<8x512xf32>
      %c0_i32_177 = arith.constant 0 : i32
      %c0_i32_178 = arith.constant 0 : i32
      %406 = tpu.memref_slice %arg3[%19, %c0_i32_177, %c0_i32_178] : memref<16x512x512xf32, #tpu.memory_space<vmem>> -> memref<1x512x512xf32, #tpu.memory_space<vmem>>
      %407 = tpu.memref_squeeze %406 : memref<1x512x512xf32, #tpu.memory_space<vmem>> -> memref<512x512xf32, #tpu.memory_space<vmem>>
      %c256 = arith.constant 256 : index
      %c0_179 = arith.constant 0 : index
      %408 = vector.load %407[%c256, %c0_179] : memref<512x512xf32, #tpu.memory_space<vmem>>, vector<8x512xf32>
      %c256_180 = arith.constant 256 : index
      %c0_181 = arith.constant 0 : index
      %409 = vector.load %arg1[%c256_180, %c0_181] : memref<512x2xf32, #tpu.memory_space<vmem>>, vector<8x2xf32>
      %410 = vector.extract_strided_slice %409 {offsets = [0, 0], sizes = [8, 1], strides = [1, 1]} : vector<8x2xf32> to vector<8x1xf32>
      %411 = vector.broadcast %410 : vector<8x1xf32> to vector<8x512xf32>
      %412 = arith.mulf %408, %411 : vector<8x512xf32>
      %413 = arith.addf %401, %412 : vector<8x512xf32>
      %414 = vector.extract_strided_slice %409 {offsets = [0, 1], sizes = [8, 1], strides = [1, 1]} : vector<8x2xf32> to vector<8x1xf32>
      %415 = vector.broadcast %414 : vector<8x1xf32> to vector<8x512xf32>
      %416 = arith.mulf %408, %415 : vector<8x512xf32>
      %417 = arith.addf %405, %416 : vector<8x512xf32>
      %c0_i32_182 = arith.constant 0 : i32
      %c0_i32_183 = arith.constant 0 : i32
      %418 = tpu.memref_slice %arg3[%19, %c0_i32_182, %c0_i32_183] : memref<16x512x512xf32, #tpu.memory_space<vmem>> -> memref<1x512x512xf32, #tpu.memory_space<vmem>>
      %419 = tpu.memref_squeeze %418 : memref<1x512x512xf32, #tpu.memory_space<vmem>> -> memref<512x512xf32, #tpu.memory_space<vmem>>
      %c264 = arith.constant 264 : index
      %c0_184 = arith.constant 0 : index
      %420 = vector.load %419[%c264, %c0_184] : memref<512x512xf32, #tpu.memory_space<vmem>>, vector<8x512xf32>
      %c264_185 = arith.constant 264 : index
      %c0_186 = arith.constant 0 : index
      %421 = vector.load %arg1[%c264_185, %c0_186] : memref<512x2xf32, #tpu.memory_space<vmem>>, vector<8x2xf32>
      %422 = vector.extract_strided_slice %421 {offsets = [0, 0], sizes = [8, 1], strides = [1, 1]} : vector<8x2xf32> to vector<8x1xf32>
      %423 = vector.broadcast %422 : vector<8x1xf32> to vector<8x512xf32>
      %424 = arith.mulf %420, %423 : vector<8x512xf32>
      %425 = arith.addf %413, %424 : vector<8x512xf32>
      %426 = vector.extract_strided_slice %421 {offsets = [0, 1], sizes = [8, 1], strides = [1, 1]} : vector<8x2xf32> to vector<8x1xf32>
      %427 = vector.broadcast %426 : vector<8x1xf32> to vector<8x512xf32>
      %428 = arith.mulf %420, %427 : vector<8x512xf32>
      %429 = arith.addf %417, %428 : vector<8x512xf32>
      %c0_i32_187 = arith.constant 0 : i32
      %c0_i32_188 = arith.constant 0 : i32
      %430 = tpu.memref_slice %arg3[%19, %c0_i32_187, %c0_i32_188] : memref<16x512x512xf32, #tpu.memory_space<vmem>> -> memref<1x512x512xf32, #tpu.memory_space<vmem>>
      %431 = tpu.memref_squeeze %430 : memref<1x512x512xf32, #tpu.memory_space<vmem>> -> memref<512x512xf32, #tpu.memory_space<vmem>>
      %c272 = arith.constant 272 : index
      %c0_189 = arith.constant 0 : index
      %432 = vector.load %431[%c272, %c0_189] : memref<512x512xf32, #tpu.memory_space<vmem>>, vector<8x512xf32>
      %c272_190 = arith.constant 272 : index
      %c0_191 = arith.constant 0 : index
      %433 = vector.load %arg1[%c272_190, %c0_191] : memref<512x2xf32, #tpu.memory_space<vmem>>, vector<8x2xf32>
      %434 = vector.extract_strided_slice %433 {offsets = [0, 0], sizes = [8, 1], strides = [1, 1]} : vector<8x2xf32> to vector<8x1xf32>
      %435 = vector.broadcast %434 : vector<8x1xf32> to vector<8x512xf32>
      %436 = arith.mulf %432, %435 : vector<8x512xf32>
      %437 = arith.addf %425, %436 : vector<8x512xf32>
      %438 = vector.extract_strided_slice %433 {offsets = [0, 1], sizes = [8, 1], strides = [1, 1]} : vector<8x2xf32> to vector<8x1xf32>
      %439 = vector.broadcast %438 : vector<8x1xf32> to vector<8x512xf32>
      %440 = arith.mulf %432, %439 : vector<8x512xf32>
      %441 = arith.addf %429, %440 : vector<8x512xf32>
      %c0_i32_192 = arith.constant 0 : i32
      %c0_i32_193 = arith.constant 0 : i32
      %442 = tpu.memref_slice %arg3[%19, %c0_i32_192, %c0_i32_193] : memref<16x512x512xf32, #tpu.memory_space<vmem>> -> memref<1x512x512xf32, #tpu.memory_space<vmem>>
      %443 = tpu.memref_squeeze %442 : memref<1x512x512xf32, #tpu.memory_space<vmem>> -> memref<512x512xf32, #tpu.memory_space<vmem>>
      %c280 = arith.constant 280 : index
      %c0_194 = arith.constant 0 : index
      %444 = vector.load %443[%c280, %c0_194] : memref<512x512xf32, #tpu.memory_space<vmem>>, vector<8x512xf32>
      %c280_195 = arith.constant 280 : index
      %c0_196 = arith.constant 0 : index
      %445 = vector.load %arg1[%c280_195, %c0_196] : memref<512x2xf32, #tpu.memory_space<vmem>>, vector<8x2xf32>
      %446 = vector.extract_strided_slice %445 {offsets = [0, 0], sizes = [8, 1], strides = [1, 1]} : vector<8x2xf32> to vector<8x1xf32>
      %447 = vector.broadcast %446 : vector<8x1xf32> to vector<8x512xf32>
      %448 = arith.mulf %444, %447 : vector<8x512xf32>
      %449 = arith.addf %437, %448 : vector<8x512xf32>
      %450 = vector.extract_strided_slice %445 {offsets = [0, 1], sizes = [8, 1], strides = [1, 1]} : vector<8x2xf32> to vector<8x1xf32>
      %451 = vector.broadcast %450 : vector<8x1xf32> to vector<8x512xf32>
      %452 = arith.mulf %444, %451 : vector<8x512xf32>
      %453 = arith.addf %441, %452 : vector<8x512xf32>
      %c0_i32_197 = arith.constant 0 : i32
      %c0_i32_198 = arith.constant 0 : i32
      %454 = tpu.memref_slice %arg3[%19, %c0_i32_197, %c0_i32_198] : memref<16x512x512xf32, #tpu.memory_space<vmem>> -> memref<1x512x512xf32, #tpu.memory_space<vmem>>
      %455 = tpu.memref_squeeze %454 : memref<1x512x512xf32, #tpu.memory_space<vmem>> -> memref<512x512xf32, #tpu.memory_space<vmem>>
      %c288 = arith.constant 288 : index
      %c0_199 = arith.constant 0 : index
      %456 = vector.load %455[%c288, %c0_199] : memref<512x512xf32, #tpu.memory_space<vmem>>, vector<8x512xf32>
      %c288_200 = arith.constant 288 : index
      %c0_201 = arith.constant 0 : index
      %457 = vector.load %arg1[%c288_200, %c0_201] : memref<512x2xf32, #tpu.memory_space<vmem>>, vector<8x2xf32>
      %458 = vector.extract_strided_slice %457 {offsets = [0, 0], sizes = [8, 1], strides = [1, 1]} : vector<8x2xf32> to vector<8x1xf32>
      %459 = vector.broadcast %458 : vector<8x1xf32> to vector<8x512xf32>
      %460 = arith.mulf %456, %459 : vector<8x512xf32>
      %461 = arith.addf %449, %460 : vector<8x512xf32>
      %462 = vector.extract_strided_slice %457 {offsets = [0, 1], sizes = [8, 1], strides = [1, 1]} : vector<8x2xf32> to vector<8x1xf32>
      %463 = vector.broadcast %462 : vector<8x1xf32> to vector<8x512xf32>
      %464 = arith.mulf %456, %463 : vector<8x512xf32>
      %465 = arith.addf %453, %464 : vector<8x512xf32>
      %c0_i32_202 = arith.constant 0 : i32
      %c0_i32_203 = arith.constant 0 : i32
      %466 = tpu.memref_slice %arg3[%19, %c0_i32_202, %c0_i32_203] : memref<16x512x512xf32, #tpu.memory_space<vmem>> -> memref<1x512x512xf32, #tpu.memory_space<vmem>>
      %467 = tpu.memref_squeeze %466 : memref<1x512x512xf32, #tpu.memory_space<vmem>> -> memref<512x512xf32, #tpu.memory_space<vmem>>
      %c296 = arith.constant 296 : index
      %c0_204 = arith.constant 0 : index
      %468 = vector.load %467[%c296, %c0_204] : memref<512x512xf32, #tpu.memory_space<vmem>>, vector<8x512xf32>
      %c296_205 = arith.constant 296 : index
      %c0_206 = arith.constant 0 : index
      %469 = vector.load %arg1[%c296_205, %c0_206] : memref<512x2xf32, #tpu.memory_space<vmem>>, vector<8x2xf32>
      %470 = vector.extract_strided_slice %469 {offsets = [0, 0], sizes = [8, 1], strides = [1, 1]} : vector<8x2xf32> to vector<8x1xf32>
      %471 = vector.broadcast %470 : vector<8x1xf32> to vector<8x512xf32>
      %472 = arith.mulf %468, %471 : vector<8x512xf32>
      %473 = arith.addf %461, %472 : vector<8x512xf32>
      %474 = vector.extract_strided_slice %469 {offsets = [0, 1], sizes = [8, 1], strides = [1, 1]} : vector<8x2xf32> to vector<8x1xf32>
      %475 = vector.broadcast %474 : vector<8x1xf32> to vector<8x512xf32>
      %476 = arith.mulf %468, %475 : vector<8x512xf32>
      %477 = arith.addf %465, %476 : vector<8x512xf32>
      %c0_i32_207 = arith.constant 0 : i32
      %c0_i32_208 = arith.constant 0 : i32
      %478 = tpu.memref_slice %arg3[%19, %c0_i32_207, %c0_i32_208] : memref<16x512x512xf32, #tpu.memory_space<vmem>> -> memref<1x512x512xf32, #tpu.memory_space<vmem>>
      %479 = tpu.memref_squeeze %478 : memref<1x512x512xf32, #tpu.memory_space<vmem>> -> memref<512x512xf32, #tpu.memory_space<vmem>>
      %c304 = arith.constant 304 : index
      %c0_209 = arith.constant 0 : index
      %480 = vector.load %479[%c304, %c0_209] : memref<512x512xf32, #tpu.memory_space<vmem>>, vector<8x512xf32>
      %c304_210 = arith.constant 304 : index
      %c0_211 = arith.constant 0 : index
      %481 = vector.load %arg1[%c304_210, %c0_211] : memref<512x2xf32, #tpu.memory_space<vmem>>, vector<8x2xf32>
      %482 = vector.extract_strided_slice %481 {offsets = [0, 0], sizes = [8, 1], strides = [1, 1]} : vector<8x2xf32> to vector<8x1xf32>
      %483 = vector.broadcast %482 : vector<8x1xf32> to vector<8x512xf32>
      %484 = arith.mulf %480, %483 : vector<8x512xf32>
      %485 = arith.addf %473, %484 : vector<8x512xf32>
      %486 = vector.extract_strided_slice %481 {offsets = [0, 1], sizes = [8, 1], strides = [1, 1]} : vector<8x2xf32> to vector<8x1xf32>
      %487 = vector.broadcast %486 : vector<8x1xf32> to vector<8x512xf32>
      %488 = arith.mulf %480, %487 : vector<8x512xf32>
      %489 = arith.addf %477, %488 : vector<8x512xf32>
      %c0_i32_212 = arith.constant 0 : i32
      %c0_i32_213 = arith.constant 0 : i32
      %490 = tpu.memref_slice %arg3[%19, %c0_i32_212, %c0_i32_213] : memref<16x512x512xf32, #tpu.memory_space<vmem>> -> memref<1x512x512xf32, #tpu.memory_space<vmem>>
      %491 = tpu.memref_squeeze %490 : memref<1x512x512xf32, #tpu.memory_space<vmem>> -> memref<512x512xf32, #tpu.memory_space<vmem>>
      %c312 = arith.constant 312 : index
      %c0_214 = arith.constant 0 : index
      %492 = vector.load %491[%c312, %c0_214] : memref<512x512xf32, #tpu.memory_space<vmem>>, vector<8x512xf32>
      %c312_215 = arith.constant 312 : index
      %c0_216 = arith.constant 0 : index
      %493 = vector.load %arg1[%c312_215, %c0_216] : memref<512x2xf32, #tpu.memory_space<vmem>>, vector<8x2xf32>
      %494 = vector.extract_strided_slice %493 {offsets = [0, 0], sizes = [8, 1], strides = [1, 1]} : vector<8x2xf32> to vector<8x1xf32>
      %495 = vector.broadcast %494 : vector<8x1xf32> to vector<8x512xf32>
      %496 = arith.mulf %492, %495 : vector<8x512xf32>
      %497 = arith.addf %485, %496 : vector<8x512xf32>
      %498 = vector.extract_strided_slice %493 {offsets = [0, 1], sizes = [8, 1], strides = [1, 1]} : vector<8x2xf32> to vector<8x1xf32>
      %499 = vector.broadcast %498 : vector<8x1xf32> to vector<8x512xf32>
      %500 = arith.mulf %492, %499 : vector<8x512xf32>
      %501 = arith.addf %489, %500 : vector<8x512xf32>
      %c0_i32_217 = arith.constant 0 : i32
      %c0_i32_218 = arith.constant 0 : i32
      %502 = tpu.memref_slice %arg3[%19, %c0_i32_217, %c0_i32_218] : memref<16x512x512xf32, #tpu.memory_space<vmem>> -> memref<1x512x512xf32, #tpu.memory_space<vmem>>
      %503 = tpu.memref_squeeze %502 : memref<1x512x512xf32, #tpu.memory_space<vmem>> -> memref<512x512xf32, #tpu.memory_space<vmem>>
      %c320 = arith.constant 320 : index
      %c0_219 = arith.constant 0 : index
      %504 = vector.load %503[%c320, %c0_219] : memref<512x512xf32, #tpu.memory_space<vmem>>, vector<8x512xf32>
      %c320_220 = arith.constant 320 : index
      %c0_221 = arith.constant 0 : index
      %505 = vector.load %arg1[%c320_220, %c0_221] : memref<512x2xf32, #tpu.memory_space<vmem>>, vector<8x2xf32>
      %506 = vector.extract_strided_slice %505 {offsets = [0, 0], sizes = [8, 1], strides = [1, 1]} : vector<8x2xf32> to vector<8x1xf32>
      %507 = vector.broadcast %506 : vector<8x1xf32> to vector<8x512xf32>
      %508 = arith.mulf %504, %507 : vector<8x512xf32>
      %509 = arith.addf %497, %508 : vector<8x512xf32>
      %510 = vector.extract_strided_slice %505 {offsets = [0, 1], sizes = [8, 1], strides = [1, 1]} : vector<8x2xf32> to vector<8x1xf32>
      %511 = vector.broadcast %510 : vector<8x1xf32> to vector<8x512xf32>
      %512 = arith.mulf %504, %511 : vector<8x512xf32>
      %513 = arith.addf %501, %512 : vector<8x512xf32>
      %c0_i32_222 = arith.constant 0 : i32
      %c0_i32_223 = arith.constant 0 : i32
      %514 = tpu.memref_slice %arg3[%19, %c0_i32_222, %c0_i32_223] : memref<16x512x512xf32, #tpu.memory_space<vmem>> -> memref<1x512x512xf32, #tpu.memory_space<vmem>>
      %515 = tpu.memref_squeeze %514 : memref<1x512x512xf32, #tpu.memory_space<vmem>> -> memref<512x512xf32, #tpu.memory_space<vmem>>
      %c328 = arith.constant 328 : index
      %c0_224 = arith.constant 0 : index
      %516 = vector.load %515[%c328, %c0_224] : memref<512x512xf32, #tpu.memory_space<vmem>>, vector<8x512xf32>
      %c328_225 = arith.constant 328 : index
      %c0_226 = arith.constant 0 : index
      %517 = vector.load %arg1[%c328_225, %c0_226] : memref<512x2xf32, #tpu.memory_space<vmem>>, vector<8x2xf32>
      %518 = vector.extract_strided_slice %517 {offsets = [0, 0], sizes = [8, 1], strides = [1, 1]} : vector<8x2xf32> to vector<8x1xf32>
      %519 = vector.broadcast %518 : vector<8x1xf32> to vector<8x512xf32>
      %520 = arith.mulf %516, %519 : vector<8x512xf32>
      %521 = arith.addf %509, %520 : vector<8x512xf32>
      %522 = vector.extract_strided_slice %517 {offsets = [0, 1], sizes = [8, 1], strides = [1, 1]} : vector<8x2xf32> to vector<8x1xf32>
      %523 = vector.broadcast %522 : vector<8x1xf32> to vector<8x512xf32>
      %524 = arith.mulf %516, %523 : vector<8x512xf32>
      %525 = arith.addf %513, %524 : vector<8x512xf32>
      %c0_i32_227 = arith.constant 0 : i32
      %c0_i32_228 = arith.constant 0 : i32
      %526 = tpu.memref_slice %arg3[%19, %c0_i32_227, %c0_i32_228] : memref<16x512x512xf32, #tpu.memory_space<vmem>> -> memref<1x512x512xf32, #tpu.memory_space<vmem>>
      %527 = tpu.memref_squeeze %526 : memref<1x512x512xf32, #tpu.memory_space<vmem>> -> memref<512x512xf32, #tpu.memory_space<vmem>>
      %c336 = arith.constant 336 : index
      %c0_229 = arith.constant 0 : index
      %528 = vector.load %527[%c336, %c0_229] : memref<512x512xf32, #tpu.memory_space<vmem>>, vector<8x512xf32>
      %c336_230 = arith.constant 336 : index
      %c0_231 = arith.constant 0 : index
      %529 = vector.load %arg1[%c336_230, %c0_231] : memref<512x2xf32, #tpu.memory_space<vmem>>, vector<8x2xf32>
      %530 = vector.extract_strided_slice %529 {offsets = [0, 0], sizes = [8, 1], strides = [1, 1]} : vector<8x2xf32> to vector<8x1xf32>
      %531 = vector.broadcast %530 : vector<8x1xf32> to vector<8x512xf32>
      %532 = arith.mulf %528, %531 : vector<8x512xf32>
      %533 = arith.addf %521, %532 : vector<8x512xf32>
      %534 = vector.extract_strided_slice %529 {offsets = [0, 1], sizes = [8, 1], strides = [1, 1]} : vector<8x2xf32> to vector<8x1xf32>
      %535 = vector.broadcast %534 : vector<8x1xf32> to vector<8x512xf32>
      %536 = arith.mulf %528, %535 : vector<8x512xf32>
      %537 = arith.addf %525, %536 : vector<8x512xf32>
      %c0_i32_232 = arith.constant 0 : i32
      %c0_i32_233 = arith.constant 0 : i32
      %538 = tpu.memref_slice %arg3[%19, %c0_i32_232, %c0_i32_233] : memref<16x512x512xf32, #tpu.memory_space<vmem>> -> memref<1x512x512xf32, #tpu.memory_space<vmem>>
      %539 = tpu.memref_squeeze %538 : memref<1x512x512xf32, #tpu.memory_space<vmem>> -> memref<512x512xf32, #tpu.memory_space<vmem>>
      %c344 = arith.constant 344 : index
      %c0_234 = arith.constant 0 : index
      %540 = vector.load %539[%c344, %c0_234] : memref<512x512xf32, #tpu.memory_space<vmem>>, vector<8x512xf32>
      %c344_235 = arith.constant 344 : index
      %c0_236 = arith.constant 0 : index
      %541 = vector.load %arg1[%c344_235, %c0_236] : memref<512x2xf32, #tpu.memory_space<vmem>>, vector<8x2xf32>
      %542 = vector.extract_strided_slice %541 {offsets = [0, 0], sizes = [8, 1], strides = [1, 1]} : vector<8x2xf32> to vector<8x1xf32>
      %543 = vector.broadcast %542 : vector<8x1xf32> to vector<8x512xf32>
      %544 = arith.mulf %540, %543 : vector<8x512xf32>
      %545 = arith.addf %533, %544 : vector<8x512xf32>
      %546 = vector.extract_strided_slice %541 {offsets = [0, 1], sizes = [8, 1], strides = [1, 1]} : vector<8x2xf32> to vector<8x1xf32>
      %547 = vector.broadcast %546 : vector<8x1xf32> to vector<8x512xf32>
      %548 = arith.mulf %540, %547 : vector<8x512xf32>
      %549 = arith.addf %537, %548 : vector<8x512xf32>
      %c0_i32_237 = arith.constant 0 : i32
      %c0_i32_238 = arith.constant 0 : i32
      %550 = tpu.memref_slice %arg3[%19, %c0_i32_237, %c0_i32_238] : memref<16x512x512xf32, #tpu.memory_space<vmem>> -> memref<1x512x512xf32, #tpu.memory_space<vmem>>
      %551 = tpu.memref_squeeze %550 : memref<1x512x512xf32, #tpu.memory_space<vmem>> -> memref<512x512xf32, #tpu.memory_space<vmem>>
      %c352 = arith.constant 352 : index
      %c0_239 = arith.constant 0 : index
      %552 = vector.load %551[%c352, %c0_239] : memref<512x512xf32, #tpu.memory_space<vmem>>, vector<8x512xf32>
      %c352_240 = arith.constant 352 : index
      %c0_241 = arith.constant 0 : index
      %553 = vector.load %arg1[%c352_240, %c0_241] : memref<512x2xf32, #tpu.memory_space<vmem>>, vector<8x2xf32>
      %554 = vector.extract_strided_slice %553 {offsets = [0, 0], sizes = [8, 1], strides = [1, 1]} : vector<8x2xf32> to vector<8x1xf32>
      %555 = vector.broadcast %554 : vector<8x1xf32> to vector<8x512xf32>
      %556 = arith.mulf %552, %555 : vector<8x512xf32>
      %557 = arith.addf %545, %556 : vector<8x512xf32>
      %558 = vector.extract_strided_slice %553 {offsets = [0, 1], sizes = [8, 1], strides = [1, 1]} : vector<8x2xf32> to vector<8x1xf32>
      %559 = vector.broadcast %558 : vector<8x1xf32> to vector<8x512xf32>
      %560 = arith.mulf %552, %559 : vector<8x512xf32>
      %561 = arith.addf %549, %560 : vector<8x512xf32>
      %c0_i32_242 = arith.constant 0 : i32
      %c0_i32_243 = arith.constant 0 : i32
      %562 = tpu.memref_slice %arg3[%19, %c0_i32_242, %c0_i32_243] : memref<16x512x512xf32, #tpu.memory_space<vmem>> -> memref<1x512x512xf32, #tpu.memory_space<vmem>>
      %563 = tpu.memref_squeeze %562 : memref<1x512x512xf32, #tpu.memory_space<vmem>> -> memref<512x512xf32, #tpu.memory_space<vmem>>
      %c360 = arith.constant 360 : index
      %c0_244 = arith.constant 0 : index
      %564 = vector.load %563[%c360, %c0_244] : memref<512x512xf32, #tpu.memory_space<vmem>>, vector<8x512xf32>
      %c360_245 = arith.constant 360 : index
      %c0_246 = arith.constant 0 : index
      %565 = vector.load %arg1[%c360_245, %c0_246] : memref<512x2xf32, #tpu.memory_space<vmem>>, vector<8x2xf32>
      %566 = vector.extract_strided_slice %565 {offsets = [0, 0], sizes = [8, 1], strides = [1, 1]} : vector<8x2xf32> to vector<8x1xf32>
      %567 = vector.broadcast %566 : vector<8x1xf32> to vector<8x512xf32>
      %568 = arith.mulf %564, %567 : vector<8x512xf32>
      %569 = arith.addf %557, %568 : vector<8x512xf32>
      %570 = vector.extract_strided_slice %565 {offsets = [0, 1], sizes = [8, 1], strides = [1, 1]} : vector<8x2xf32> to vector<8x1xf32>
      %571 = vector.broadcast %570 : vector<8x1xf32> to vector<8x512xf32>
      %572 = arith.mulf %564, %571 : vector<8x512xf32>
      %573 = arith.addf %561, %572 : vector<8x512xf32>
      %c0_i32_247 = arith.constant 0 : i32
      %c0_i32_248 = arith.constant 0 : i32
      %574 = tpu.memref_slice %arg3[%19, %c0_i32_247, %c0_i32_248] : memref<16x512x512xf32, #tpu.memory_space<vmem>> -> memref<1x512x512xf32, #tpu.memory_space<vmem>>
      %575 = tpu.memref_squeeze %574 : memref<1x512x512xf32, #tpu.memory_space<vmem>> -> memref<512x512xf32, #tpu.memory_space<vmem>>
      %c368 = arith.constant 368 : index
      %c0_249 = arith.constant 0 : index
      %576 = vector.load %575[%c368, %c0_249] : memref<512x512xf32, #tpu.memory_space<vmem>>, vector<8x512xf32>
      %c368_250 = arith.constant 368 : index
      %c0_251 = arith.constant 0 : index
      %577 = vector.load %arg1[%c368_250, %c0_251] : memref<512x2xf32, #tpu.memory_space<vmem>>, vector<8x2xf32>
      %578 = vector.extract_strided_slice %577 {offsets = [0, 0], sizes = [8, 1], strides = [1, 1]} : vector<8x2xf32> to vector<8x1xf32>
      %579 = vector.broadcast %578 : vector<8x1xf32> to vector<8x512xf32>
      %580 = arith.mulf %576, %579 : vector<8x512xf32>
      %581 = arith.addf %569, %580 : vector<8x512xf32>
      %582 = vector.extract_strided_slice %577 {offsets = [0, 1], sizes = [8, 1], strides = [1, 1]} : vector<8x2xf32> to vector<8x1xf32>
      %583 = vector.broadcast %582 : vector<8x1xf32> to vector<8x512xf32>
      %584 = arith.mulf %576, %583 : vector<8x512xf32>
      %585 = arith.addf %573, %584 : vector<8x512xf32>
      %c0_i32_252 = arith.constant 0 : i32
      %c0_i32_253 = arith.constant 0 : i32
      %586 = tpu.memref_slice %arg3[%19, %c0_i32_252, %c0_i32_253] : memref<16x512x512xf32, #tpu.memory_space<vmem>> -> memref<1x512x512xf32, #tpu.memory_space<vmem>>
      %587 = tpu.memref_squeeze %586 : memref<1x512x512xf32, #tpu.memory_space<vmem>> -> memref<512x512xf32, #tpu.memory_space<vmem>>
      %c376 = arith.constant 376 : index
      %c0_254 = arith.constant 0 : index
      %588 = vector.load %587[%c376, %c0_254] : memref<512x512xf32, #tpu.memory_space<vmem>>, vector<8x512xf32>
      %c376_255 = arith.constant 376 : index
      %c0_256 = arith.constant 0 : index
      %589 = vector.load %arg1[%c376_255, %c0_256] : memref<512x2xf32, #tpu.memory_space<vmem>>, vector<8x2xf32>
      %590 = vector.extract_strided_slice %589 {offsets = [0, 0], sizes = [8, 1], strides = [1, 1]} : vector<8x2xf32> to vector<8x1xf32>
      %591 = vector.broadcast %590 : vector<8x1xf32> to vector<8x512xf32>
      %592 = arith.mulf %588, %591 : vector<8x512xf32>
      %593 = arith.addf %581, %592 : vector<8x512xf32>
      %594 = vector.extract_strided_slice %589 {offsets = [0, 1], sizes = [8, 1], strides = [1, 1]} : vector<8x2xf32> to vector<8x1xf32>
      %595 = vector.broadcast %594 : vector<8x1xf32> to vector<8x512xf32>
      %596 = arith.mulf %588, %595 : vector<8x512xf32>
      %597 = arith.addf %585, %596 : vector<8x512xf32>
      %c0_i32_257 = arith.constant 0 : i32
      %c0_i32_258 = arith.constant 0 : i32
      %598 = tpu.memref_slice %arg3[%19, %c0_i32_257, %c0_i32_258] : memref<16x512x512xf32, #tpu.memory_space<vmem>> -> memref<1x512x512xf32, #tpu.memory_space<vmem>>
      %599 = tpu.memref_squeeze %598 : memref<1x512x512xf32, #tpu.memory_space<vmem>> -> memref<512x512xf32, #tpu.memory_space<vmem>>
      %c384 = arith.constant 384 : index
      %c0_259 = arith.constant 0 : index
      %600 = vector.load %599[%c384, %c0_259] : memref<512x512xf32, #tpu.memory_space<vmem>>, vector<8x512xf32>
      %c384_260 = arith.constant 384 : index
      %c0_261 = arith.constant 0 : index
      %601 = vector.load %arg1[%c384_260, %c0_261] : memref<512x2xf32, #tpu.memory_space<vmem>>, vector<8x2xf32>
      %602 = vector.extract_strided_slice %601 {offsets = [0, 0], sizes = [8, 1], strides = [1, 1]} : vector<8x2xf32> to vector<8x1xf32>
      %603 = vector.broadcast %602 : vector<8x1xf32> to vector<8x512xf32>
      %604 = arith.mulf %600, %603 : vector<8x512xf32>
      %605 = arith.addf %593, %604 : vector<8x512xf32>
      %606 = vector.extract_strided_slice %601 {offsets = [0, 1], sizes = [8, 1], strides = [1, 1]} : vector<8x2xf32> to vector<8x1xf32>
      %607 = vector.broadcast %606 : vector<8x1xf32> to vector<8x512xf32>
      %608 = arith.mulf %600, %607 : vector<8x512xf32>
      %609 = arith.addf %597, %608 : vector<8x512xf32>
      %c0_i32_262 = arith.constant 0 : i32
      %c0_i32_263 = arith.constant 0 : i32
      %610 = tpu.memref_slice %arg3[%19, %c0_i32_262, %c0_i32_263] : memref<16x512x512xf32, #tpu.memory_space<vmem>> -> memref<1x512x512xf32, #tpu.memory_space<vmem>>
      %611 = tpu.memref_squeeze %610 : memref<1x512x512xf32, #tpu.memory_space<vmem>> -> memref<512x512xf32, #tpu.memory_space<vmem>>
      %c392 = arith.constant 392 : index
      %c0_264 = arith.constant 0 : index
      %612 = vector.load %611[%c392, %c0_264] : memref<512x512xf32, #tpu.memory_space<vmem>>, vector<8x512xf32>
      %c392_265 = arith.constant 392 : index
      %c0_266 = arith.constant 0 : index
      %613 = vector.load %arg1[%c392_265, %c0_266] : memref<512x2xf32, #tpu.memory_space<vmem>>, vector<8x2xf32>
      %614 = vector.extract_strided_slice %613 {offsets = [0, 0], sizes = [8, 1], strides = [1, 1]} : vector<8x2xf32> to vector<8x1xf32>
      %615 = vector.broadcast %614 : vector<8x1xf32> to vector<8x512xf32>
      %616 = arith.mulf %612, %615 : vector<8x512xf32>
      %617 = arith.addf %605, %616 : vector<8x512xf32>
      %618 = vector.extract_strided_slice %613 {offsets = [0, 1], sizes = [8, 1], strides = [1, 1]} : vector<8x2xf32> to vector<8x1xf32>
      %619 = vector.broadcast %618 : vector<8x1xf32> to vector<8x512xf32>
      %620 = arith.mulf %612, %619 : vector<8x512xf32>
      %621 = arith.addf %609, %620 : vector<8x512xf32>
      %c0_i32_267 = arith.constant 0 : i32
      %c0_i32_268 = arith.constant 0 : i32
      %622 = tpu.memref_slice %arg3[%19, %c0_i32_267, %c0_i32_268] : memref<16x512x512xf32, #tpu.memory_space<vmem>> -> memref<1x512x512xf32, #tpu.memory_space<vmem>>
      %623 = tpu.memref_squeeze %622 : memref<1x512x512xf32, #tpu.memory_space<vmem>> -> memref<512x512xf32, #tpu.memory_space<vmem>>
      %c400 = arith.constant 400 : index
      %c0_269 = arith.constant 0 : index
      %624 = vector.load %623[%c400, %c0_269] : memref<512x512xf32, #tpu.memory_space<vmem>>, vector<8x512xf32>
      %c400_270 = arith.constant 400 : index
      %c0_271 = arith.constant 0 : index
      %625 = vector.load %arg1[%c400_270, %c0_271] : memref<512x2xf32, #tpu.memory_space<vmem>>, vector<8x2xf32>
      %626 = vector.extract_strided_slice %625 {offsets = [0, 0], sizes = [8, 1], strides = [1, 1]} : vector<8x2xf32> to vector<8x1xf32>
      %627 = vector.broadcast %626 : vector<8x1xf32> to vector<8x512xf32>
      %628 = arith.mulf %624, %627 : vector<8x512xf32>
      %629 = arith.addf %617, %628 : vector<8x512xf32>
      %630 = vector.extract_strided_slice %625 {offsets = [0, 1], sizes = [8, 1], strides = [1, 1]} : vector<8x2xf32> to vector<8x1xf32>
      %631 = vector.broadcast %630 : vector<8x1xf32> to vector<8x512xf32>
      %632 = arith.mulf %624, %631 : vector<8x512xf32>
      %633 = arith.addf %621, %632 : vector<8x512xf32>
      %c0_i32_272 = arith.constant 0 : i32
      %c0_i32_273 = arith.constant 0 : i32
      %634 = tpu.memref_slice %arg3[%19, %c0_i32_272, %c0_i32_273] : memref<16x512x512xf32, #tpu.memory_space<vmem>> -> memref<1x512x512xf32, #tpu.memory_space<vmem>>
      %635 = tpu.memref_squeeze %634 : memref<1x512x512xf32, #tpu.memory_space<vmem>> -> memref<512x512xf32, #tpu.memory_space<vmem>>
      %c408 = arith.constant 408 : index
      %c0_274 = arith.constant 0 : index
      %636 = vector.load %635[%c408, %c0_274] : memref<512x512xf32, #tpu.memory_space<vmem>>, vector<8x512xf32>
      %c408_275 = arith.constant 408 : index
      %c0_276 = arith.constant 0 : index
      %637 = vector.load %arg1[%c408_275, %c0_276] : memref<512x2xf32, #tpu.memory_space<vmem>>, vector<8x2xf32>
      %638 = vector.extract_strided_slice %637 {offsets = [0, 0], sizes = [8, 1], strides = [1, 1]} : vector<8x2xf32> to vector<8x1xf32>
      %639 = vector.broadcast %638 : vector<8x1xf32> to vector<8x512xf32>
      %640 = arith.mulf %636, %639 : vector<8x512xf32>
      %641 = arith.addf %629, %640 : vector<8x512xf32>
      %642 = vector.extract_strided_slice %637 {offsets = [0, 1], sizes = [8, 1], strides = [1, 1]} : vector<8x2xf32> to vector<8x1xf32>
      %643 = vector.broadcast %642 : vector<8x1xf32> to vector<8x512xf32>
      %644 = arith.mulf %636, %643 : vector<8x512xf32>
      %645 = arith.addf %633, %644 : vector<8x512xf32>
      %c0_i32_277 = arith.constant 0 : i32
      %c0_i32_278 = arith.constant 0 : i32
      %646 = tpu.memref_slice %arg3[%19, %c0_i32_277, %c0_i32_278] : memref<16x512x512xf32, #tpu.memory_space<vmem>> -> memref<1x512x512xf32, #tpu.memory_space<vmem>>
      %647 = tpu.memref_squeeze %646 : memref<1x512x512xf32, #tpu.memory_space<vmem>> -> memref<512x512xf32, #tpu.memory_space<vmem>>
      %c416 = arith.constant 416 : index
      %c0_279 = arith.constant 0 : index
      %648 = vector.load %647[%c416, %c0_279] : memref<512x512xf32, #tpu.memory_space<vmem>>, vector<8x512xf32>
      %c416_280 = arith.constant 416 : index
      %c0_281 = arith.constant 0 : index
      %649 = vector.load %arg1[%c416_280, %c0_281] : memref<512x2xf32, #tpu.memory_space<vmem>>, vector<8x2xf32>
      %650 = vector.extract_strided_slice %649 {offsets = [0, 0], sizes = [8, 1], strides = [1, 1]} : vector<8x2xf32> to vector<8x1xf32>
      %651 = vector.broadcast %650 : vector<8x1xf32> to vector<8x512xf32>
      %652 = arith.mulf %648, %651 : vector<8x512xf32>
      %653 = arith.addf %641, %652 : vector<8x512xf32>
      %654 = vector.extract_strided_slice %649 {offsets = [0, 1], sizes = [8, 1], strides = [1, 1]} : vector<8x2xf32> to vector<8x1xf32>
      %655 = vector.broadcast %654 : vector<8x1xf32> to vector<8x512xf32>
      %656 = arith.mulf %648, %655 : vector<8x512xf32>
      %657 = arith.addf %645, %656 : vector<8x512xf32>
      %c0_i32_282 = arith.constant 0 : i32
      %c0_i32_283 = arith.constant 0 : i32
      %658 = tpu.memref_slice %arg3[%19, %c0_i32_282, %c0_i32_283] : memref<16x512x512xf32, #tpu.memory_space<vmem>> -> memref<1x512x512xf32, #tpu.memory_space<vmem>>
      %659 = tpu.memref_squeeze %658 : memref<1x512x512xf32, #tpu.memory_space<vmem>> -> memref<512x512xf32, #tpu.memory_space<vmem>>
      %c424 = arith.constant 424 : index
      %c0_284 = arith.constant 0 : index
      %660 = vector.load %659[%c424, %c0_284] : memref<512x512xf32, #tpu.memory_space<vmem>>, vector<8x512xf32>
      %c424_285 = arith.constant 424 : index
      %c0_286 = arith.constant 0 : index
      %661 = vector.load %arg1[%c424_285, %c0_286] : memref<512x2xf32, #tpu.memory_space<vmem>>, vector<8x2xf32>
      %662 = vector.extract_strided_slice %661 {offsets = [0, 0], sizes = [8, 1], strides = [1, 1]} : vector<8x2xf32> to vector<8x1xf32>
      %663 = vector.broadcast %662 : vector<8x1xf32> to vector<8x512xf32>
      %664 = arith.mulf %660, %663 : vector<8x512xf32>
      %665 = arith.addf %653, %664 : vector<8x512xf32>
      %666 = vector.extract_strided_slice %661 {offsets = [0, 1], sizes = [8, 1], strides = [1, 1]} : vector<8x2xf32> to vector<8x1xf32>
      %667 = vector.broadcast %666 : vector<8x1xf32> to vector<8x512xf32>
      %668 = arith.mulf %660, %667 : vector<8x512xf32>
      %669 = arith.addf %657, %668 : vector<8x512xf32>
      %c0_i32_287 = arith.constant 0 : i32
      %c0_i32_288 = arith.constant 0 : i32
      %670 = tpu.memref_slice %arg3[%19, %c0_i32_287, %c0_i32_288] : memref<16x512x512xf32, #tpu.memory_space<vmem>> -> memref<1x512x512xf32, #tpu.memory_space<vmem>>
      %671 = tpu.memref_squeeze %670 : memref<1x512x512xf32, #tpu.memory_space<vmem>> -> memref<512x512xf32, #tpu.memory_space<vmem>>
      %c432 = arith.constant 432 : index
      %c0_289 = arith.constant 0 : index
      %672 = vector.load %671[%c432, %c0_289] : memref<512x512xf32, #tpu.memory_space<vmem>>, vector<8x512xf32>
      %c432_290 = arith.constant 432 : index
      %c0_291 = arith.constant 0 : index
      %673 = vector.load %arg1[%c432_290, %c0_291] : memref<512x2xf32, #tpu.memory_space<vmem>>, vector<8x2xf32>
      %674 = vector.extract_strided_slice %673 {offsets = [0, 0], sizes = [8, 1], strides = [1, 1]} : vector<8x2xf32> to vector<8x1xf32>
      %675 = vector.broadcast %674 : vector<8x1xf32> to vector<8x512xf32>
      %676 = arith.mulf %672, %675 : vector<8x512xf32>
      %677 = arith.addf %665, %676 : vector<8x512xf32>
      %678 = vector.extract_strided_slice %673 {offsets = [0, 1], sizes = [8, 1], strides = [1, 1]} : vector<8x2xf32> to vector<8x1xf32>
      %679 = vector.broadcast %678 : vector<8x1xf32> to vector<8x512xf32>
      %680 = arith.mulf %672, %679 : vector<8x512xf32>
      %681 = arith.addf %669, %680 : vector<8x512xf32>
      %c0_i32_292 = arith.constant 0 : i32
      %c0_i32_293 = arith.constant 0 : i32
      %682 = tpu.memref_slice %arg3[%19, %c0_i32_292, %c0_i32_293] : memref<16x512x512xf32, #tpu.memory_space<vmem>> -> memref<1x512x512xf32, #tpu.memory_space<vmem>>
      %683 = tpu.memref_squeeze %682 : memref<1x512x512xf32, #tpu.memory_space<vmem>> -> memref<512x512xf32, #tpu.memory_space<vmem>>
      %c440 = arith.constant 440 : index
      %c0_294 = arith.constant 0 : index
      %684 = vector.load %683[%c440, %c0_294] : memref<512x512xf32, #tpu.memory_space<vmem>>, vector<8x512xf32>
      %c440_295 = arith.constant 440 : index
      %c0_296 = arith.constant 0 : index
      %685 = vector.load %arg1[%c440_295, %c0_296] : memref<512x2xf32, #tpu.memory_space<vmem>>, vector<8x2xf32>
      %686 = vector.extract_strided_slice %685 {offsets = [0, 0], sizes = [8, 1], strides = [1, 1]} : vector<8x2xf32> to vector<8x1xf32>
      %687 = vector.broadcast %686 : vector<8x1xf32> to vector<8x512xf32>
      %688 = arith.mulf %684, %687 : vector<8x512xf32>
      %689 = arith.addf %677, %688 : vector<8x512xf32>
      %690 = vector.extract_strided_slice %685 {offsets = [0, 1], sizes = [8, 1], strides = [1, 1]} : vector<8x2xf32> to vector<8x1xf32>
      %691 = vector.broadcast %690 : vector<8x1xf32> to vector<8x512xf32>
      %692 = arith.mulf %684, %691 : vector<8x512xf32>
      %693 = arith.addf %681, %692 : vector<8x512xf32>
      %c0_i32_297 = arith.constant 0 : i32
      %c0_i32_298 = arith.constant 0 : i32
      %694 = tpu.memref_slice %arg3[%19, %c0_i32_297, %c0_i32_298] : memref<16x512x512xf32, #tpu.memory_space<vmem>> -> memref<1x512x512xf32, #tpu.memory_space<vmem>>
      %695 = tpu.memref_squeeze %694 : memref<1x512x512xf32, #tpu.memory_space<vmem>> -> memref<512x512xf32, #tpu.memory_space<vmem>>
      %c448 = arith.constant 448 : index
      %c0_299 = arith.constant 0 : index
      %696 = vector.load %695[%c448, %c0_299] : memref<512x512xf32, #tpu.memory_space<vmem>>, vector<8x512xf32>
      %c448_300 = arith.constant 448 : index
      %c0_301 = arith.constant 0 : index
      %697 = vector.load %arg1[%c448_300, %c0_301] : memref<512x2xf32, #tpu.memory_space<vmem>>, vector<8x2xf32>
      %698 = vector.extract_strided_slice %697 {offsets = [0, 0], sizes = [8, 1], strides = [1, 1]} : vector<8x2xf32> to vector<8x1xf32>
      %699 = vector.broadcast %698 : vector<8x1xf32> to vector<8x512xf32>
      %700 = arith.mulf %696, %699 : vector<8x512xf32>
      %701 = arith.addf %689, %700 : vector<8x512xf32>
      %702 = vector.extract_strided_slice %697 {offsets = [0, 1], sizes = [8, 1], strides = [1, 1]} : vector<8x2xf32> to vector<8x1xf32>
      %703 = vector.broadcast %702 : vector<8x1xf32> to vector<8x512xf32>
      %704 = arith.mulf %696, %703 : vector<8x512xf32>
      %705 = arith.addf %693, %704 : vector<8x512xf32>
      %c0_i32_302 = arith.constant 0 : i32
      %c0_i32_303 = arith.constant 0 : i32
      %706 = tpu.memref_slice %arg3[%19, %c0_i32_302, %c0_i32_303] : memref<16x512x512xf32, #tpu.memory_space<vmem>> -> memref<1x512x512xf32, #tpu.memory_space<vmem>>
      %707 = tpu.memref_squeeze %706 : memref<1x512x512xf32, #tpu.memory_space<vmem>> -> memref<512x512xf32, #tpu.memory_space<vmem>>
      %c456 = arith.constant 456 : index
      %c0_304 = arith.constant 0 : index
      %708 = vector.load %707[%c456, %c0_304] : memref<512x512xf32, #tpu.memory_space<vmem>>, vector<8x512xf32>
      %c456_305 = arith.constant 456 : index
      %c0_306 = arith.constant 0 : index
      %709 = vector.load %arg1[%c456_305, %c0_306] : memref<512x2xf32, #tpu.memory_space<vmem>>, vector<8x2xf32>
      %710 = vector.extract_strided_slice %709 {offsets = [0, 0], sizes = [8, 1], strides = [1, 1]} : vector<8x2xf32> to vector<8x1xf32>
      %711 = vector.broadcast %710 : vector<8x1xf32> to vector<8x512xf32>
      %712 = arith.mulf %708, %711 : vector<8x512xf32>
      %713 = arith.addf %701, %712 : vector<8x512xf32>
      %714 = vector.extract_strided_slice %709 {offsets = [0, 1], sizes = [8, 1], strides = [1, 1]} : vector<8x2xf32> to vector<8x1xf32>
      %715 = vector.broadcast %714 : vector<8x1xf32> to vector<8x512xf32>
      %716 = arith.mulf %708, %715 : vector<8x512xf32>
      %717 = arith.addf %705, %716 : vector<8x512xf32>
      %c0_i32_307 = arith.constant 0 : i32
      %c0_i32_308 = arith.constant 0 : i32
      %718 = tpu.memref_slice %arg3[%19, %c0_i32_307, %c0_i32_308] : memref<16x512x512xf32, #tpu.memory_space<vmem>> -> memref<1x512x512xf32, #tpu.memory_space<vmem>>
      %719 = tpu.memref_squeeze %718 : memref<1x512x512xf32, #tpu.memory_space<vmem>> -> memref<512x512xf32, #tpu.memory_space<vmem>>
      %c464 = arith.constant 464 : index
      %c0_309 = arith.constant 0 : index
      %720 = vector.load %719[%c464, %c0_309] : memref<512x512xf32, #tpu.memory_space<vmem>>, vector<8x512xf32>
      %c464_310 = arith.constant 464 : index
      %c0_311 = arith.constant 0 : index
      %721 = vector.load %arg1[%c464_310, %c0_311] : memref<512x2xf32, #tpu.memory_space<vmem>>, vector<8x2xf32>
      %722 = vector.extract_strided_slice %721 {offsets = [0, 0], sizes = [8, 1], strides = [1, 1]} : vector<8x2xf32> to vector<8x1xf32>
      %723 = vector.broadcast %722 : vector<8x1xf32> to vector<8x512xf32>
      %724 = arith.mulf %720, %723 : vector<8x512xf32>
      %725 = arith.addf %713, %724 : vector<8x512xf32>
      %726 = vector.extract_strided_slice %721 {offsets = [0, 1], sizes = [8, 1], strides = [1, 1]} : vector<8x2xf32> to vector<8x1xf32>
      %727 = vector.broadcast %726 : vector<8x1xf32> to vector<8x512xf32>
      %728 = arith.mulf %720, %727 : vector<8x512xf32>
      %729 = arith.addf %717, %728 : vector<8x512xf32>
      %c0_i32_312 = arith.constant 0 : i32
      %c0_i32_313 = arith.constant 0 : i32
      %730 = tpu.memref_slice %arg3[%19, %c0_i32_312, %c0_i32_313] : memref<16x512x512xf32, #tpu.memory_space<vmem>> -> memref<1x512x512xf32, #tpu.memory_space<vmem>>
      %731 = tpu.memref_squeeze %730 : memref<1x512x512xf32, #tpu.memory_space<vmem>> -> memref<512x512xf32, #tpu.memory_space<vmem>>
      %c472 = arith.constant 472 : index
      %c0_314 = arith.constant 0 : index
      %732 = vector.load %731[%c472, %c0_314] : memref<512x512xf32, #tpu.memory_space<vmem>>, vector<8x512xf32>
      %c472_315 = arith.constant 472 : index
      %c0_316 = arith.constant 0 : index
      %733 = vector.load %arg1[%c472_315, %c0_316] : memref<512x2xf32, #tpu.memory_space<vmem>>, vector<8x2xf32>
      %734 = vector.extract_strided_slice %733 {offsets = [0, 0], sizes = [8, 1], strides = [1, 1]} : vector<8x2xf32> to vector<8x1xf32>
      %735 = vector.broadcast %734 : vector<8x1xf32> to vector<8x512xf32>
      %736 = arith.mulf %732, %735 : vector<8x512xf32>
      %737 = arith.addf %725, %736 : vector<8x512xf32>
      %738 = vector.extract_strided_slice %733 {offsets = [0, 1], sizes = [8, 1], strides = [1, 1]} : vector<8x2xf32> to vector<8x1xf32>
      %739 = vector.broadcast %738 : vector<8x1xf32> to vector<8x512xf32>
      %740 = arith.mulf %732, %739 : vector<8x512xf32>
      %741 = arith.addf %729, %740 : vector<8x512xf32>
      %c0_i32_317 = arith.constant 0 : i32
      %c0_i32_318 = arith.constant 0 : i32
      %742 = tpu.memref_slice %arg3[%19, %c0_i32_317, %c0_i32_318] : memref<16x512x512xf32, #tpu.memory_space<vmem>> -> memref<1x512x512xf32, #tpu.memory_space<vmem>>
      %743 = tpu.memref_squeeze %742 : memref<1x512x512xf32, #tpu.memory_space<vmem>> -> memref<512x512xf32, #tpu.memory_space<vmem>>
      %c480 = arith.constant 480 : index
      %c0_319 = arith.constant 0 : index
      %744 = vector.load %743[%c480, %c0_319] : memref<512x512xf32, #tpu.memory_space<vmem>>, vector<8x512xf32>
      %c480_320 = arith.constant 480 : index
      %c0_321 = arith.constant 0 : index
      %745 = vector.load %arg1[%c480_320, %c0_321] : memref<512x2xf32, #tpu.memory_space<vmem>>, vector<8x2xf32>
      %746 = vector.extract_strided_slice %745 {offsets = [0, 0], sizes = [8, 1], strides = [1, 1]} : vector<8x2xf32> to vector<8x1xf32>
      %747 = vector.broadcast %746 : vector<8x1xf32> to vector<8x512xf32>
      %748 = arith.mulf %744, %747 : vector<8x512xf32>
      %749 = arith.addf %737, %748 : vector<8x512xf32>
      %750 = vector.extract_strided_slice %745 {offsets = [0, 1], sizes = [8, 1], strides = [1, 1]} : vector<8x2xf32> to vector<8x1xf32>
      %751 = vector.broadcast %750 : vector<8x1xf32> to vector<8x512xf32>
      %752 = arith.mulf %744, %751 : vector<8x512xf32>
      %753 = arith.addf %741, %752 : vector<8x512xf32>
      %c0_i32_322 = arith.constant 0 : i32
      %c0_i32_323 = arith.constant 0 : i32
      %754 = tpu.memref_slice %arg3[%19, %c0_i32_322, %c0_i32_323] : memref<16x512x512xf32, #tpu.memory_space<vmem>> -> memref<1x512x512xf32, #tpu.memory_space<vmem>>
      %755 = tpu.memref_squeeze %754 : memref<1x512x512xf32, #tpu.memory_space<vmem>> -> memref<512x512xf32, #tpu.memory_space<vmem>>
      %c488 = arith.constant 488 : index
      %c0_324 = arith.constant 0 : index
      %756 = vector.load %755[%c488, %c0_324] : memref<512x512xf32, #tpu.memory_space<vmem>>, vector<8x512xf32>
      %c488_325 = arith.constant 488 : index
      %c0_326 = arith.constant 0 : index
      %757 = vector.load %arg1[%c488_325, %c0_326] : memref<512x2xf32, #tpu.memory_space<vmem>>, vector<8x2xf32>
      %758 = vector.extract_strided_slice %757 {offsets = [0, 0], sizes = [8, 1], strides = [1, 1]} : vector<8x2xf32> to vector<8x1xf32>
      %759 = vector.broadcast %758 : vector<8x1xf32> to vector<8x512xf32>
      %760 = arith.mulf %756, %759 : vector<8x512xf32>
      %761 = arith.addf %749, %760 : vector<8x512xf32>
      %762 = vector.extract_strided_slice %757 {offsets = [0, 1], sizes = [8, 1], strides = [1, 1]} : vector<8x2xf32> to vector<8x1xf32>
      %763 = vector.broadcast %762 : vector<8x1xf32> to vector<8x512xf32>
      %764 = arith.mulf %756, %763 : vector<8x512xf32>
      %765 = arith.addf %753, %764 : vector<8x512xf32>
      %c0_i32_327 = arith.constant 0 : i32
      %c0_i32_328 = arith.constant 0 : i32
      %766 = tpu.memref_slice %arg3[%19, %c0_i32_327, %c0_i32_328] : memref<16x512x512xf32, #tpu.memory_space<vmem>> -> memref<1x512x512xf32, #tpu.memory_space<vmem>>
      %767 = tpu.memref_squeeze %766 : memref<1x512x512xf32, #tpu.memory_space<vmem>> -> memref<512x512xf32, #tpu.memory_space<vmem>>
      %c496 = arith.constant 496 : index
      %c0_329 = arith.constant 0 : index
      %768 = vector.load %767[%c496, %c0_329] : memref<512x512xf32, #tpu.memory_space<vmem>>, vector<8x512xf32>
      %c496_330 = arith.constant 496 : index
      %c0_331 = arith.constant 0 : index
      %769 = vector.load %arg1[%c496_330, %c0_331] : memref<512x2xf32, #tpu.memory_space<vmem>>, vector<8x2xf32>
      %770 = vector.extract_strided_slice %769 {offsets = [0, 0], sizes = [8, 1], strides = [1, 1]} : vector<8x2xf32> to vector<8x1xf32>
      %771 = vector.broadcast %770 : vector<8x1xf32> to vector<8x512xf32>
      %772 = arith.mulf %768, %771 : vector<8x512xf32>
      %773 = arith.addf %761, %772 : vector<8x512xf32>
      %774 = vector.extract_strided_slice %769 {offsets = [0, 1], sizes = [8, 1], strides = [1, 1]} : vector<8x2xf32> to vector<8x1xf32>
      %775 = vector.broadcast %774 : vector<8x1xf32> to vector<8x512xf32>
      %776 = arith.mulf %768, %775 : vector<8x512xf32>
      %777 = arith.addf %765, %776 : vector<8x512xf32>
      %c0_i32_332 = arith.constant 0 : i32
      %c0_i32_333 = arith.constant 0 : i32
      %778 = tpu.memref_slice %arg3[%19, %c0_i32_332, %c0_i32_333] : memref<16x512x512xf32, #tpu.memory_space<vmem>> -> memref<1x512x512xf32, #tpu.memory_space<vmem>>
      %779 = tpu.memref_squeeze %778 : memref<1x512x512xf32, #tpu.memory_space<vmem>> -> memref<512x512xf32, #tpu.memory_space<vmem>>
      %c504 = arith.constant 504 : index
      %c0_334 = arith.constant 0 : index
      %780 = vector.load %779[%c504, %c0_334] : memref<512x512xf32, #tpu.memory_space<vmem>>, vector<8x512xf32>
      %c504_335 = arith.constant 504 : index
      %c0_336 = arith.constant 0 : index
      %781 = vector.load %arg1[%c504_335, %c0_336] : memref<512x2xf32, #tpu.memory_space<vmem>>, vector<8x2xf32>
      %782 = vector.extract_strided_slice %781 {offsets = [0, 0], sizes = [8, 1], strides = [1, 1]} : vector<8x2xf32> to vector<8x1xf32>
      %783 = vector.broadcast %782 : vector<8x1xf32> to vector<8x512xf32>
      %784 = arith.mulf %780, %783 : vector<8x512xf32>
      %785 = arith.addf %773, %784 : vector<8x512xf32>
      %786 = vector.extract_strided_slice %781 {offsets = [0, 1], sizes = [8, 1], strides = [1, 1]} : vector<8x2xf32> to vector<8x1xf32>
      %787 = vector.broadcast %786 : vector<8x1xf32> to vector<8x512xf32>
      %788 = arith.mulf %780, %787 : vector<8x512xf32>
      %789 = arith.addf %777, %788 : vector<8x512xf32>
      %cst_337 = arith.constant dense<0.000000e+00> : vector<512xf32>
      %790 = vector.multi_reduction <add>, %785, %cst_337 [0] : vector<8x512xf32> to vector<512xf32>
      %791 = vector.shape_cast %790 : vector<512xf32> to vector<1x512xf32>
      %c0_i32_338 = arith.constant 0 : i32
      %792 = arith.addi %c0_i32_338, %19 : i32
      %793 = arith.index_cast %792 : i32 to index
      %c0_339 = arith.constant 0 : index
      %794 = vector.load %arg6[%793, %c0_339] : memref<32x512xf32, #tpu.memory_space<vmem>>, vector<1x512xf32>
      tpu.vector_store %arg6[%793, %c0_339], %791 {strides = array<i32>} : memref<32x512xf32, #tpu.memory_space<vmem>>, vector<1x512xf32>,
      %cst_340 = arith.constant dense<0.000000e+00> : vector<512xf32>
      %795 = vector.multi_reduction <add>, %789, %cst_340 [0] : vector<8x512xf32> to vector<512xf32>
      %796 = vector.shape_cast %795 : vector<512xf32> to vector<1x512xf32>
      %c16_i32_341 = arith.constant 16 : i32
      %797 = arith.addi %c16_i32_341, %19 : i32
      %798 = arith.index_cast %797 : i32 to index
      %c0_342 = arith.constant 0 : index
      %799 = vector.load %arg6[%798, %c0_342] : memref<32x512xf32, #tpu.memory_space<vmem>>, vector<1x512xf32>
      tpu.vector_store %arg6[%798, %c0_342], %796 {strides = array<i32>} : memref<32x512xf32, #tpu.memory_space<vmem>>, vector<1x512xf32>,
    }
    %c16_i32_0 = arith.constant 16 : i32
    %c0 = arith.constant 0 : index
    %c0_1 = arith.constant 0 : index
    %1 = vector.load %arg6[%c0, %c0_1] : memref<32x512xf32, #tpu.memory_space<vmem>>, vector<16x512xf32>
    %c0_2 = arith.constant 0 : index
    %c0_3 = arith.constant 0 : index
    %2 = vector.load %arg2[%c0_2, %c0_3] : memref<2x512xf32, #tpu.memory_space<vmem>>, vector<1x512xf32>
    %3 = vector.broadcast %2 : vector<1x512xf32> to vector<16x512xf32>
    %4 = arith.mulf %1, %3 : vector<16x512xf32>
    %cst = arith.constant dense<0.000000e+00> : vector<16xf32>
    %5 = vector.multi_reduction <add>, %4, %cst [1] : vector<16x512xf32> to vector<16xf32>
    %6 = vector.shape_cast %5 : vector<16xf32> to vector<16x1xf32>
    %c16 = arith.constant 16 : index
    %c0_4 = arith.constant 0 : index
    %7 = vector.load %arg6[%c16, %c0_4] : memref<32x512xf32, #tpu.memory_space<vmem>>, vector<16x512xf32>
    %c1 = arith.constant 1 : index
    %c0_5 = arith.constant 0 : index
    %8 = vector.load %arg2[%c1, %c0_5] : memref<2x512xf32, #tpu.memory_space<vmem>>, vector<1x512xf32>
    %9 = vector.broadcast %8 : vector<1x512xf32> to vector<16x512xf32>
    %10 = arith.mulf %7, %9 : vector<16x512xf32>
    %cst_6 = arith.constant dense<0.000000e+00> : vector<16xf32>
    %11 = vector.multi_reduction <add>, %10, %cst_6 [1] : vector<16x512xf32> to vector<16xf32>
    %12 = vector.shape_cast %11 : vector<16xf32> to vector<16x1xf32>
    %13 = tpu.concatenate %6, %12 in 1 : vector<16x1xf32>, vector<16x1xf32> -> vector<16x2xf32>
    %c0_7 = arith.constant 0 : index
    %c0_8 = arith.constant 0 : index
    %14 = vector.load %arg4[%c0_7, %c0_8] : memref<16x1xf32, #tpu.memory_space<vmem>>, vector<16x1xf32>
    %15 = vector.broadcast %14 : vector<16x1xf32> to vector<16x2xf32>
    %16 = arith.addf %13, %15 : vector<16x2xf32>
    %c0_9 = arith.constant 0 : index
    %c0_10 = arith.constant 0 : index
    %17 = vector.load %arg5[%c0_9, %c0_10] : memref<16x2xf32, #tpu.memory_space<vmem>>, vector<16x2xf32>
    tpu.vector_store %arg5[%c0_9, %c0_10], %16 {strides = array<i32>} : memref<16x2xf32, #tpu.memory_space<vmem>>, vector<16x2xf32>,
    return
  }
  func.func @transform_0(%arg0: i32) -> (i32, i32) {
    %c0_i32 = arith.constant 0 : i32
    %c0_i32_0 = arith.constant 0 : i32
    %c0_i32_1 = arith.constant 0 : i32
    return %c0_i32, %c0_i32_0 : i32, i32
  }
  func.func @transform_1(%arg0: i32) -> (i32, i32) {
    %c0_i32 = arith.constant 0 : i32
    %c0_i32_0 = arith.constant 0 : i32
    %c0_i32_1 = arith.constant 0 : i32
    return %c0_i32, %c0_i32_0 : i32, i32
  }
  func.func @transform_2(%arg0: i32) -> (i32, i32, i32) {
    %c0_i32 = arith.constant 0 : i32
    %c0_i32_0 = arith.constant 0 : i32
    %c0_i32_1 = arith.constant 0 : i32
    return %arg0, %c0_i32, %c0_i32_0 : i32, i32, i32
  }
  func.func @transform_3(%arg0: i32) -> (i32, i32) {
    %c0_i32 = arith.constant 0 : i32
    %c0_i32_0 = arith.constant 0 : i32
    return %arg0, %c0_i32 : i32, i32
  }
  func.func @transform_4(%arg0: i32) -> (i32, i32) {
    %c0_i32 = arith.constant 0 : i32
    %c0_i32_0 = arith.constant 0 : i32
    return %arg0, %c0_i32 : i32, i32
  }
}

</mosaic_0001>

<llo_original>
// kernel: mixer_forward.1
$region0: #{mixer_forward.1}
  #allocation0 [shape = 'u32[]', space=smem, size = 0x4, offset = 0x4, fixed_abs, tag = 'smem constant byte address 0x4 - core index']
  #allocation1 [shape = 'u32[72,128]{1,0:T(1,128)}', space=vmem, size = 0x9000, scoped, tag = 'internal scratch']
  #allocation2 [shape = 'f32[32,512]{1,0:T(8,128)}', space=vmem, size = 0x10000, scoped, tag = 'scratch operand']
  %s0 = inlined_call_operand.vmem [shape: f32[512,2], index: 0, kind: input, shape index: {}]
  %s1 = inlined_call_operand.vmem [shape: f32[2,512], index: 1, kind: input, shape index: {}]
  %s2 = inlined_call_operand.hbm [shape: f32[512,512,512], index: 2, kind: input, shape index: {}]
  %s3 = inlined_call_operand.vmem [shape: f32[512,1], index: 3, kind: input, shape index: {}]
  %s4 = inlined_call_operand.vmem [shape: f32[512,2], index: 4, kind: output, shape index: {}]
  %s5 = sld [smem:[#allocation0]]
  $region60: #{mixer_forward.1} parent=0
    _
  %s7 = ssub.s32 1, %s5
  %s8 = scalar_select 0, %s7, %s5
  $region1: #{mixer_forward.1} parent=0
    #allocation3 [shape = 'u8[33554432]{0}', space=vmem, size = 0x2000000, scoped, tag = 'input window, operand 2']
    #allocation4 [shape = 's32[2]{0}', space=sflag, size = 0x8, scoped, tag = 'scoped memory for mixer_forward.1']
    %9 = vsyncpa [#allocation4], 0
    %s10 = scalar_lea.sflag [#allocation4], 1
    %11 = vsyncpa %s10, 0
    loop: start=0, step=1, limit=34
    $region2: #{mixer_forward.1} parent=1 // loop_pre_header
      _
    $region3: #{mixer_forward.1} parent=1 // loop_header
      %s13 = sphi 0, %s17
      %p14 = scmp.ge.s32.totalorder %s13, 34
      %s21 = sphi 0, %s21
      %s23 = sphi 0, %s21
      %s24 = sphi 0, %s23
      %s38 = sphi 0, %s24
      %s42 = sphi 0, %s42
      %s44 = sphi 0, %s42
      %s45 = sphi 0, %s44
      %s59 = sphi 0, %s45
      %s65 = sphi 0, %s67
      %s68 = sphi 0, %s65
      %s69 = sphi 0, %s68
      %s85 = sphi 0, %s69
      %s91 = sphi 0, %s93
      %s94 = sphi 0, %s91
      %s95 = sphi 0, %s94
      %s111 = sphi 0, %s95
      %s117 = sphi 0, %s119
      %s120 = sphi 0, %s117
      %s121 = sphi 0, %s120
      %s137 = sphi 0, %s121
    $region4: #{mixer_forward.1} parent=1 // loop_header_branch
      %16 = sbr.rel (%p14) target = $region8
    $region5: #{mixer_forward.1} parent=1 // loop_body
      %s18 = ssub.s32 %s13, 1
      %s19 = ssub.s32 %s13, 2
      %s20 = sadd.s32 %s13, 1
      %s22 = sadd.s32 %s21, 1
      %p25 = scmp.eq.s32.totalorder %s13, 31
      %p26 = scmp.ne.s32.totalorder %s21, %s23
      %p27 = scmp.eq.s32.totalorder %s13, 0
      %p28 = por %p26, %p27
      %p29 = scmp.ne.s32.totalorder %s21, %s23
      %p30 = scmp.eq.s32.totalorder %s18, 31
      %p31 = por %p29, %p30
      %p32 = scmp.ne.s32.totalorder %s23, %s24
      %p33 = scmp.eq.s32.totalorder %s18, 0
      %p34 = por %p32, %p33
      %p35 = scmp.ne.s32.totalorder %s23, %s24
      %p36 = scmp.eq.s32.totalorder %s19, 31
      %p37 = por %p35, %p36
      %p39 = scmp.ne.s32.totalorder %s24, %s38
      %p40 = scmp.eq.s32.totalorder %s19, 0
      %p41 = por %p39, %p40
      %s43 = sadd.s32 %s42, 1
      %p46 = scmp.eq.s32.totalorder %s13, 31
      %p47 = scmp.ne.s32.totalorder %s42, %s44
      %p48 = scmp.eq.s32.totalorder %s13, 0
      %p49 = por %p47, %p48
      %p50 = scmp.ne.s32.totalorder %s42, %s44
      %p51 = scmp.eq.s32.totalorder %s18, 31
      %p52 = por %p50, %p51
      %p53 = scmp.ne.s32.totalorder %s44, %s45
      %p54 = scmp.eq.s32.totalorder %s18, 0
      %p55 = por %p53, %p54
      %p56 = scmp.ne.s32.totalorder %s44, %s45
      %p57 = scmp.eq.s32.totalorder %s19, 31
      %p58 = por %p56, %p57
      %p60 = scmp.ne.s32.totalorder %s45, %s59
      %p61 = scmp.eq.s32.totalorder %s19, 0
      %p62 = por %p60, %p61
      %s63 = ssub.s32 %s13, %s20
      %p64 = scmp.eq.s32.totalorder %s63, 0
      %s66 = sadd.s32 %s65, 1
      %s67 = scalar_select %p64, %s65, %s66
      %p70 = pneg %p64
      %p71 = scmp.eq.s32.totalorder %s13, 31
      %p72 = por %p70, %p71
      %p73 = scmp.ne.s32.totalorder %s65, %s68
      %p74 = scmp.eq.s32.totalorder %s13, 0
      %p75 = por %p73, %p74
      %p76 = scmp.ne.s32.totalorder %s65, %s68
      %p77 = scmp.eq.s32.totalorder %s18, 31
      %p78 = por %p76, %p77
      %p79 = scmp.ne.s32.totalorder %s68, %s69
      %p80 = scmp.eq.s32.totalorder %s18, 0
      %p81 = por %p79, %p80
      %p82 = scmp.ne.s32.totalorder %s68, %s69
      %p83 = scmp.eq.s32.totalorder %s19, 31
      %p84 = por %p82, %p83
      %p86 = scmp.ne.s32.totalorder %s69, %s85
      %p87 = scmp.eq.s32.totalorder %s19, 0
      %p88 = por %p86, %p87
      %s89 = ssub.s32 %s13, %s20
      %p90 = scmp.eq.s32.totalorder %s89, 0
      %s92 = sadd.s32 %s91, 1
      %s93 = scalar_select %p90, %s91, %s92
      %p96 = pneg %p90
      %p97 = scmp.eq.s32.totalorder %s13, 31
      %p98 = por %p96, %p97
      %p99 = scmp.ne.s32.totalorder %s91, %s94
      %p100 = scmp.eq.s32.totalorder %s13, 0
      %p101 = por %p99, %p100
      %p102 = scmp.ne.s32.totalorder %s91, %s94
      %p103 = scmp.eq.s32.totalorder %s18, 31
      %p104 = por %p102, %p103
      %p105 = scmp.ne.s32.totalorder %s94, %s95
      %p106 = scmp.eq.s32.totalorder %s18, 0
      %p107 = por %p105, %p106
      %p108 = scmp.ne.s32.totalorder %s94, %s95
      %p109 = scmp.eq.s32.totalorder %s19, 31
      %p110 = por %p108, %p109
      %p112 = scmp.ne.s32.totalorder %s95, %s111
      %p113 = scmp.eq.s32.totalorder %s19, 0
      %p114 = por %p112, %p113
      %s115 = ssub.s32 %s13, %s20
      %p116 = scmp.eq.s32.totalorder %s115, 0
      %s118 = sadd.s32 %s117, 1
      %s119 = scalar_select %p116, %s117, %s118
      %p122 = pneg %p116
      %p123 = scmp.eq.s32.totalorder %s13, 31
      %p124 = por %p122, %p123
      %p125 = scmp.ne.s32.totalorder %s117, %s120
      %p126 = scmp.eq.s32.totalorder %s13, 0
      %p127 = por %p125, %p126
      %p128 = scmp.ne.s32.totalorder %s117, %s120
      %p129 = scmp.eq.s32.totalorder %s18, 31
      %p130 = por %p128, %p129
      %p131 = scmp.ne.s32.totalorder %s120, %s121
      %p132 = scmp.eq.s32.totalorder %s18, 0
      %p133 = por %p131, %p132
      %p134 = scmp.ne.s32.totalorder %s120, %s121
      %p135 = scmp.eq.s32.totalorder %s19, 31
      %p136 = por %p134, %p135
      %p138 = scmp.ne.s32.totalorder %s121, %s137
      %p139 = scmp.eq.s32.totalorder %s19, 0
      %p140 = por %p138, %p139
      %p141 = scmp.le.s32.totalorder 1, %s13
      %p142 = scmp.lt.s32.totalorder %s13, 33
      %p143 = pnand %p141, %p142
      %p144 = pneg %p143
      // Predicated region
      $region9: #{mixer_forward.1} parent=5 // pred_check
        _
      $region10: #{mixer_forward.1} parent=5 // pred_check_branch
        %146 = sbr.rel (%p143) target = $region12
      $region11: #{mixer_forward.1} parent=5 // pred_region
        %s147 = ssub.s32 %s13, 1
        // Predicated region
        $region13: #{mixer_forward.1} parent=11 // pred_check
          %p148 = pneg %p34
        $region14: #{mixer_forward.1} parent=11 // pred_check_branch
          %150 = sbr.rel (%p148) target = $region16
        $region15: #{mixer_forward.1} parent=11 // pred_region
          _
        $region16: #{mixer_forward.1} parent=11 // pred_fallthru
          _
        // Predicated region
        $region17: #{mixer_forward.1} parent=11 // pred_check
          %p151 = pneg %p55
        $region18: #{mixer_forward.1} parent=11 // pred_check_branch
          %153 = sbr.rel (%p151) target = $region20
        $region19: #{mixer_forward.1} parent=11 // pred_region
          _
        $region20: #{mixer_forward.1} parent=11 // pred_fallthru
          _
      $region12: #{mixer_forward.1} parent=5 // pred_fallthru
        _
      %p154 = scmp.lt.s32.totalorder %s13, 32
      // Predicated region
      $region21: #{mixer_forward.1} parent=5 // pred_check
        %p155 = pneg %p154
      $region22: #{mixer_forward.1} parent=5 // pred_check_branch
        %157 = sbr.rel (%p155) target = $region24
      $region23: #{mixer_forward.1} parent=5 // pred_region
        // Predicated region
        $region25: #{mixer_forward.1} parent=23 // pred_check
          %p158 = pneg %p75
        $region26: #{mixer_forward.1} parent=23 // pred_check_branch
          %160 = sbr.rel (%p158) target = $region28
        $region27: #{mixer_forward.1} parent=23 // pred_region
          %s161 = sand.u32 %s65, 1
          %s162 = scalar_lea.sflag [#allocation4], %s161
          %s163 = sand.u32 %s65, 1
          %s164 = smul.addr %s163, 32768
          %s165 = scalar_lea.vmem [#allocation3], %s164
          %s166 = smul.u32 16, %s13
          %168 = vsyncadd %s162, 0
          %s169 = smul.addr %s166, 256
          %s170 = smul.addr %s169, 8
          %s171 = scalar_lea.hbm %s2, %s170
          %s172 = sshll.u32 %s171, 4
          %s173 = int_to_ptr.hbm [resolvable:$true] %s172
          %s174 = sshll.u32 %s165, 4
          %s175 = int_to_ptr.vmem [resolvable:$true] %s174
          %180 = dma.hbm_to_vmem [thread:$0]  %s173, 524288, %s175, %s162, 512, 512, 32
        $region28: #{mixer_forward.1} parent=23 // pred_fallthru
          _
        // Predicated region
        $region29: #{mixer_forward.1} parent=23 // pred_check
          %p181 = pneg %p101
        $region30: #{mixer_forward.1} parent=23 // pred_check_branch
          %183 = sbr.rel (%p181) target = $region32
        $region31: #{mixer_forward.1} parent=23 // pred_region
          %s184 = smul.u32 2, %s13
          %p185 = scmp.lt.s32.totalorder %s184, 63
          %s186 = scalar_select %p185, %s184, 63
          %s187 = smul.addr %s186, 8
          %s188 = scalar_lea.vmem %s3, %s187
          %s189 = smul.u32 2, %s13
        $region32: #{mixer_forward.1} parent=23 // pred_fallthru
          _
      $region24: #{mixer_forward.1} parent=5 // pred_fallthru
        _
      %p190 = scmp.le.s32.totalorder 1, %s13
      %p191 = scmp.lt.s32.totalorder %s13, 33
      %p192 = pnand %p190, %p191
      %p193 = pneg %p192
      // Predicated region
      $region33: #{mixer_forward.1} parent=5 // pred_check
        _
      $region34: #{mixer_forward.1} parent=5 // pred_check_branch
        %195 = sbr.rel (%p192) target = $region36
      $region35: #{mixer_forward.1} parent=5 // pred_region
        %s196 = ssub.s32 %s13, 1
        %s197 = sand.u32 %s68, 1
        %s198 = scalar_lea.sflag [#allocation4], %s197
        %s199 = sand.u32 %s68, 1
        %s200 = smul.addr %s199, 32768
        %s201 = scalar_lea.vmem [#allocation3], %s200
        // Predicated region
        $region37: #{mixer_forward.1} parent=35 // pred_check
          %p202 = pneg %p81
        $region38: #{mixer_forward.1} parent=35 // pred_check_branch
          %204 = sbr.rel (%p202) target = $region40
        $region39: #{mixer_forward.1} parent=35 // pred_region
          %206 = dma.done %s198, 524288
        $region40: #{mixer_forward.1} parent=35 // pred_fallthru
          _
        %p207 = pneg %p34
        %p208 = pneg %p31
        %p209 = pneg %p55
        %p210 = pneg %p52
        %s211 = sand.u32 %s68, 1
        %s212 = scalar_lea.sflag [#allocation4], %s211
        %s213 = sand.u32 %s68, 1
        %s214 = smul.addr %s213, 32768
        %s215 = scalar_lea.vmem [#allocation3], %s214
        %p216 = pneg %p81
        %p217 = pneg %p78
        %s218 = smul.u32 2, %s18
        %p219 = scmp.lt.s32.totalorder %s218, 63
        %s220 = scalar_select %p219, %s218, 63
        %s221 = smul.addr %s220, 8
        %s222 = scalar_lea.vmem %s3, %s221
        %p223 = pneg %p107
        %p224 = pneg %p104
        %p225 = pneg %p133
        %p226 = pneg %p130
        %s227 = smul.u32 2, %s18
        %p228 = scmp.lt.s32.totalorder %s227, 63
        %s229 = scalar_select %p228, %s227, 63
        %s230 = smul.addr %s229, 8
        %s231 = scalar_lea.vmem %s4, %s230
        %s232 = smul.u32 16, %s18
        %s233 = smul.u32 2, %s18
        %p234 = scmp.lt.s32.totalorder %s233, 63
        %s235 = scalar_select %p234, %s233, 63
        %s236 = smul.addr %s235, 8
        %s237 = scalar_lea.vmem %s3, %s236
        %s238 = smul.u32 2, %s18
        %s239 = smul.u32 2, %s18
        %p240 = scmp.lt.s32.totalorder %s239, 63
        %s241 = scalar_select %p240, %s239, 63
        %s242 = smul.addr %s241, 8
        %s243 = scalar_lea.vmem %s4, %s242
        %s244 = smul.u32 2, %s18
        loop: start=0, step=1, limit=16
        $region41: #{mixer_forward.1} parent=35 // loop_pre_header
          _
        $region42: #{mixer_forward.1} parent=35 // loop_header
          %s246 = sphi 0, %s250
          %p247 = scmp.ge.s32.totalorder %s246, 16
        $region43: #{mixer_forward.1} parent=35 // loop_header_branch
          %249 = sbr.rel (%p247) target = $region47
        $region44: #{mixer_forward.1} parent=35 // loop_body
          %s251 = smul.u32 %s246, 256
          %s252 = smul.addr %s251, 8
          %s253 = scalar_lea.vmem %s201, %s252 [#allocation3]
          %v254 = vld [vmem:[%s253] sm:$0xff]
          %v255 = vld [vmem:[%s253 + $0x8] sm:$0xff]
          %v256 = vld [vmem:[%s253 + $0x10] sm:$0xff]
          %v257 = vld [vmem:[%s253 + $0x18] sm:$0xff]
          %v258 = vld [vmem:[%s0] sm:$0xff]
          %260 = vset.pattern.permute.xlu0 0
          %261 = vperm.xlu0 %260, %v258
          %v262 = vpop.permute.xlu0 %261
          %v264 = vmul.f32 %v254, %v262
          %v265 = vmul.f32 %v255, %v262
          %v266 = vmul.f32 %v256, %v262
          %v267 = vmul.f32 %v257, %v262
          %v268 = vadd.f32 %v264, 0.0
          %v269 = vadd.f32 %v265, 0.0
          %v270 = vadd.f32 %v266, 0.0
          %v271 = vadd.f32 %v267, 0.0
          %272 = vset.pattern.permute.xlu0 1
          %273 = vperm.xlu0 %272, %v258
          %v274 = vpop.permute.xlu0 %273
          %v276 = vmul.f32 %v254, %v274
          %v277 = vmul.f32 %v255, %v274
          %v278 = vmul.f32 %v256, %v274
          %v279 = vmul.f32 %v257, %v274
          %v280 = vadd.f32 %v276, 0.0
          %v281 = vadd.f32 %v277, 0.0
          %v282 = vadd.f32 %v278, 0.0
          %v283 = vadd.f32 %v279, 0.0
          %v284 = vld [vmem:[%s253 + $0x20] sm:$0xff]
          %v285 = vld [vmem:[%s253 + $0x28] sm:$0xff]
          %v286 = vld [vmem:[%s253 + $0x30] sm:$0xff]
          %v287 = vld [vmem:[%s253 + $0x38] sm:$0xff]
          %v288 = vld [vmem:[%s0 + $0x8] sm:$0xff]
          %290 = vset.pattern.permute.xlu0 0
          %291 = vperm.xlu0 %290, %v288
          %v292 = vpop.permute.xlu0 %291
          %v294 = vmul.f32 %v284, %v292
          %v295 = vmul.f32 %v285, %v292
          %v296 = vmul.f32 %v286, %v292
          %v297 = vmul.f32 %v287, %v292
          %v298 = vadd.f32 %v268, %v294
          %v299 = vadd.f32 %v269, %v295
          %v300 = vadd.f32 %v270, %v296
          %v301 = vadd.f32 %v271, %v297
          %302 = vset.pattern.permute.xlu0 1
          %303 = vperm.xlu0 %302, %v288
          %v304 = vpop.permute.xlu0 %303
          %v306 = vmul.f32 %v284, %v304
          %v307 = vmul.f32 %v285, %v304
          %v308 = vmul.f32 %v286, %v304
          %v309 = vmul.f32 %v287, %v304
          %v310 = vadd.f32 %v280, %v306
          %v311 = vadd.f32 %v281, %v307
          %v312 = vadd.f32 %v282, %v308
          %v313 = vadd.f32 %v283, %v309
          %v314 = vld [vmem:[%s253 + $0x40] sm:$0xff]
          %v315 = vld [vmem:[%s253 + $0x48] sm:$0xff]
          %v316 = vld [vmem:[%s253 + $0x50] sm:$0xff]
          %v317 = vld [vmem:[%s253 + $0x58] sm:$0xff]
          %v318 = vld [vmem:[%s0 + $0x10] sm:$0xff]
          %320 = vset.pattern.permute.xlu0 0
          %321 = vperm.xlu0 %320, %v318
          %v322 = vpop.permute.xlu0 %321
          %v324 = vmul.f32 %v314, %v322
          %v325 = vmul.f32 %v315, %v322
          %v326 = vmul.f32 %v316, %v322
          %v327 = vmul.f32 %v317, %v322
          %v328 = vadd.f32 %v298, %v324
          %v329 = vadd.f32 %v299, %v325
          %v330 = vadd.f32 %v300, %v326
          %v331 = vadd.f32 %v301, %v327
          %332 = vset.pattern.permute.xlu0 1
          %333 = vperm.xlu0 %332, %v318
          %v334 = vpop.permute.xlu0 %333
          %v336 = vmul.f32 %v314, %v334
          %v337 = vmul.f32 %v315, %v334
          %v338 = vmul.f32 %v316, %v334
          %v339 = vmul.f32 %v317, %v334
          %v340 = vadd.f32 %v310, %v336
          %v341 = vadd.f32 %v311, %v337
          %v342 = vadd.f32 %v312, %v338
          %v343 = vadd.f32 %v313, %v339
          %v344 = vld [vmem:[%s253 + $0x60] sm:$0xff]
          %v345 = vld [vmem:[%s253 + $0x68] sm:$0xff]
          %v346 = vld [vmem:[%s253 + $0x70] sm:$0xff]
          %v347 = vld [vmem:[%s253 + $0x78] sm:$0xff]
          %v348 = vld [vmem:[%s0 + $0x18] sm:$0xff]
          %350 = vset.pattern.permute.xlu0 0
          %351 = vperm.xlu0 %350, %v348
          %v352 = vpop.permute.xlu0 %351
          %v354 = vmul.f32 %v344, %v352
          %v355 = vmul.f32 %v345, %v352
          %v356 = vmul.f32 %v346, %v352
          %v357 = vmul.f32 %v347, %v352
          %v358 = vadd.f32 %v328, %v354
          %v359 = vadd.f32 %v329, %v355
          %v360 = vadd.f32 %v330, %v356
          %v361 = vadd.f32 %v331, %v357
          %362 = vset.pattern.permute.xlu0 1
          %363 = vperm.xlu0 %362, %v348
          %v364 = vpop.permute.xlu0 %363
          %v366 = vmul.f32 %v344, %v364
          %v367 = vmul.f32 %v345, %v364
          %v368 = vmul.f32 %v346, %v364
          %v369 = vmul.f32 %v347, %v364
          %v370 = vadd.f32 %v340, %v366
          %v371 = vadd.f32 %v341, %v367
          %v372 = vadd.f32 %v342, %v368
          %v373 = vadd.f32 %v343, %v369
          %v374 = vld [vmem:[%s253 + $0x80] sm:$0xff]
          %v375 = vld [vmem:[%s253 + $0x88] sm:$0xff]
          %v376 = vld [vmem:[%s253 + $0x90] sm:$0xff]
          %v377 = vld [vmem:[%s253 + $0x98] sm:$0xff]
          %v378 = vld [vmem:[%s0 + $0x20] sm:$0xff]
          %380 = vset.pattern.permute.xlu0 0
          %381 = vperm.xlu0 %380, %v378
          %v382 = vpop.permute.xlu0 %381
          %v384 = vmul.f32 %v374, %v382
          %v385 = vmul.f32 %v375, %v382
          %v386 = vmul.f32 %v376, %v382
          %v387 = vmul.f32 %v377, %v382
          %v388 = vadd.f32 %v358, %v384
          %v389 = vadd.f32 %v359, %v385
          %v390 = vadd.f32 %v360, %v386
          %v391 = vadd.f32 %v361, %v387
          %392 = vset.pattern.permute.xlu0 1
          %393 = vperm.xlu0 %392, %v378
          %v394 = vpop.permute.xlu0 %393
          %v396 = vmul.f32 %v374, %v394
          %v397 = vmul.f32 %v375, %v394
          %v398 = vmul.f32 %v376, %v394
          %v399 = vmul.f32 %v377, %v394
          %v400 = vadd.f32 %v370, %v396
          %v401 = vadd.f32 %v371, %v397
          %v402 = vadd.f32 %v372, %v398
          %v403 = vadd.f32 %v373, %v399
          %v404 = vld [vmem:[%s253 + $0xa0] sm:$0xff]
          %v405 = vld [vmem:[%s253 + $0xa8] sm:$0xff]
          %v406 = vld [vmem:[%s253 + $0xb0] sm:$0xff]
          %v407 = vld [vmem:[%s253 + $0xb8] sm:$0xff]
          %v408 = vld [vmem:[%s0 + $0x28] sm:$0xff]
          %410 = vset.pattern.permute.xlu0 0
          %411 = vperm.xlu0 %410, %v408
          %v412 = vpop.permute.xlu0 %411
          %v414 = vmul.f32 %v404, %v412
          %v415 = vmul.f32 %v405, %v412
          %v416 = vmul.f32 %v406, %v412
          %v417 = vmul.f32 %v407, %v412
          %v418 = vadd.f32 %v388, %v414
          %v419 = vadd.f32 %v389, %v415
          %v420 = vadd.f32 %v390, %v416
          %v421 = vadd.f32 %v391, %v417
          %422 = vset.pattern.permute.xlu0 1
          %423 = vperm.xlu0 %422, %v408
          %v424 = vpop.permute.xlu0 %423
          %v426 = vmul.f32 %v404, %v424
          %v427 = vmul.f32 %v405, %v424
          %v428 = vmul.f32 %v406, %v424
          %v429 = vmul.f32 %v407, %v424
          %v430 = vadd.f32 %v400, %v426
          %v431 = vadd.f32 %v401, %v427
          %v432 = vadd.f32 %v402, %v428
          %v433 = vadd.f32 %v403, %v429
          %v434 = vld [vmem:[%s253 + $0xc0] sm:$0xff]
          %v435 = vld [vmem:[%s253 + $0xc8] sm:$0xff]
          %v436 = vld [vmem:[%s253 + $0xd0] sm:$0xff]
          %v437 = vld [vmem:[%s253 + $0xd8] sm:$0xff]
          %v438 = vld [vmem:[%s0 + $0x30] sm:$0xff]
          %440 = vset.pattern.permute.xlu0 0
          %441 = vperm.xlu0 %440, %v438
          %v442 = vpop.permute.xlu0 %441
          %v444 = vmul.f32 %v434, %v442
          %v445 = vmul.f32 %v435, %v442
          %v446 = vmul.f32 %v436, %v442
          %v447 = vmul.f32 %v437, %v442
          %v448 = vadd.f32 %v418, %v444
          %v449 = vadd.f32 %v419, %v445
          %v450 = vadd.f32 %v420, %v446
          %v451 = vadd.f32 %v421, %v447
          %452 = vset.pattern.permute.xlu0 1
          %453 = vperm.xlu0 %452, %v438
          %v454 = vpop.permute.xlu0 %453
          %v456 = vmul.f32 %v434, %v454
          %v457 = vmul.f32 %v435, %v454
          %v458 = vmul.f32 %v436, %v454
          %v459 = vmul.f32 %v437, %v454
          %v460 = vadd.f32 %v430, %v456
          %v461 = vadd.f32 %v431, %v457
          %v462 = vadd.f32 %v432, %v458
          %v463 = vadd.f32 %v433, %v459
          %v464 = vld [vmem:[%s253 + $0xe0] sm:$0xff]
          %v465 = vld [vmem:[%s253 + $0xe8] sm:$0xff]
          %v466 = vld [vmem:[%s253 + $0xf0] sm:$0xff]
          %v467 = vld [vmem:[%s253 + $0xf8] sm:$0xff]
          %v468 = vld [vmem:[%s0 + $0x38] sm:$0xff]
          %470 = vset.pattern.permute.xlu0 0
          %471 = vperm.xlu0 %470, %v468
          %v472 = vpop.permute.xlu0 %471
          %v474 = vmul.f32 %v464, %v472
          %v475 = vmul.f32 %v465, %v472
          %v476 = vmul.f32 %v466, %v472
          %v477 = vmul.f32 %v467, %v472
          %v478 = vadd.f32 %v448, %v474
          %v479 = vadd.f32 %v449, %v475
          %v480 = vadd.f32 %v450, %v476
          %v481 = vadd.f32 %v451, %v477
          %482 = vset.pattern.permute.xlu0 1
          %483 = vperm.xlu0 %482, %v468
          %v484 = vpop.permute.xlu0 %483
          %v486 = vmul.f32 %v464, %v484
          %v487 = vmul.f32 %v465, %v484
          %v488 = vmul.f32 %v466, %v484
          %v489 = vmul.f32 %v467, %v484
          %v490 = vadd.f32 %v460, %v486
          %v491 = vadd.f32 %v461, %v487
          %v492 = vadd.f32 %v462, %v488
          %v493 = vadd.f32 %v463, %v489
          %v494 = vld [vmem:[%s253 + $0x100] sm:$0xff]
          %v495 = vld [vmem:[%s253 + $0x108] sm:$0xff]
          %v496 = vld [vmem:[%s253 + $0x110] sm:$0xff]
          %v497 = vld [vmem:[%s253 + $0x118] sm:$0xff]
          %v498 = vld [vmem:[%s0 + $0x40] sm:$0xff]
          %500 = vset.pattern.permute.xlu0 0
          %501 = vperm.xlu0 %500, %v498
          %v502 = vpop.permute.xlu0 %501
          %v504 = vmul.f32 %v494, %v502
          %v505 = vmul.f32 %v495, %v502
          %v506 = vmul.f32 %v496, %v502
          %v507 = vmul.f32 %v497, %v502
          %v508 = vadd.f32 %v478, %v504
          %v509 = vadd.f32 %v479, %v505
          %v510 = vadd.f32 %v480, %v506
          %v511 = vadd.f32 %v481, %v507
          %512 = vset.pattern.permute.xlu0 1
          %513 = vperm.xlu0 %512, %v498
          %v514 = vpop.permute.xlu0 %513
          %v516 = vmul.f32 %v494, %v514
          %v517 = vmul.f32 %v495, %v514
          %v518 = vmul.f32 %v496, %v514
          %v519 = vmul.f32 %v497, %v514
          %v520 = vadd.f32 %v490, %v516
          %v521 = vadd.f32 %v491, %v517
          %v522 = vadd.f32 %v492, %v518
          %v523 = vadd.f32 %v493, %v519
          %v524 = vld [vmem:[%s253 + $0x120] sm:$0xff]
          %v525 = vld [vmem:[%s253 + $0x128] sm:$0xff]
          %v526 = vld [vmem:[%s253 + $0x130] sm:$0xff]
          %v527 = vld [vmem:[%s253 + $0x138] sm:$0xff]
          %v528 = vld [vmem:[%s0 + $0x48] sm:$0xff]
          %530 = vset.pattern.permute.xlu0 0
          %531 = vperm.xlu0 %530, %v528
          %v532 = vpop.permute.xlu0 %531
          %v534 = vmul.f32 %v524, %v532
          %v535 = vmul.f32 %v525, %v532
          %v536 = vmul.f32 %v526, %v532
          %v537 = vmul.f32 %v527, %v532
          %v538 = vadd.f32 %v508, %v534
          %v539 = vadd.f32 %v509, %v535
          %v540 = vadd.f32 %v510, %v536
          %v541 = vadd.f32 %v511, %v537
          %542 = vset.pattern.permute.xlu0 1
          %543 = vperm.xlu0 %542, %v528
          %v544 = vpop.permute.xlu0 %543
          %v546 = vmul.f32 %v524, %v544
          %v547 = vmul.f32 %v525, %v544
          %v548 = vmul.f32 %v526, %v544
          %v549 = vmul.f32 %v527, %v544
          %v550 = vadd.f32 %v520, %v546
          %v551 = vadd.f32 %v521, %v547
          %v552 = vadd.f32 %v522, %v548
          %v553 = vadd.f32 %v523, %v549
          %v554 = vld [vmem:[%s253 + $0x140] sm:$0xff]
          %v555 = vld [vmem:[%s253 + $0x148] sm:$0xff]
          %v556 = vld [vmem:[%s253 + $0x150] sm:$0xff]
          %v557 = vld [vmem:[%s253 + $0x158] sm:$0xff]
          %v558 = vld [vmem:[%s0 + $0x50] sm:$0xff]
          %560 = vset.pattern.permute.xlu0 0
          %561 = vperm.xlu0 %560, %v558
          %v562 = vpop.permute.xlu0 %561
          %v564 = vmul.f32 %v554, %v562
          %v565 = vmul.f32 %v555, %v562
          %v566 = vmul.f32 %v556, %v562
          %v567 = vmul.f32 %v557, %v562
          %v568 = vadd.f32 %v538, %v564
          %v569 = vadd.f32 %v539, %v565
          %v570 = vadd.f32 %v540, %v566
          %v571 = vadd.f32 %v541, %v567
          %572 = vset.pattern.permute.xlu0 1
          %573 = vperm.xlu0 %572, %v558
          %v574 = vpop.permute.xlu0 %573
          %v576 = vmul.f32 %v554, %v574
          %v577 = vmul.f32 %v555, %v574
          %v578 = vmul.f32 %v556, %v574
          %v579 = vmul.f32 %v557, %v574
          %v580 = vadd.f32 %v550, %v576
          %v581 = vadd.f32 %v551, %v577
          %v582 = vadd.f32 %v552, %v578
          %v583 = vadd.f32 %v553, %v579
          %v584 = vld [vmem:[%s253 + $0x160] sm:$0xff]
          %v585 = vld [vmem:[%s253 + $0x168] sm:$0xff]
          %v586 = vld [vmem:[%s253 + $0x170] sm:$0xff]
          %v587 = vld [vmem:[%s253 + $0x178] sm:$0xff]
          %v588 = vld [vmem:[%s0 + $0x58] sm:$0xff]
          %590 = vset.pattern.permute.xlu0 0
          %591 = vperm.xlu0 %590, %v588
          %v592 = vpop.permute.xlu0 %591
          %v594 = vmul.f32 %v584, %v592
          %v595 = vmul.f32 %v585, %v592
          %v596 = vmul.f32 %v586, %v592
          %v597 = vmul.f32 %v587, %v592
          %v598 = vadd.f32 %v568, %v594
          %v599 = vadd.f32 %v569, %v595
          %v600 = vadd.f32 %v570, %v596
          %v601 = vadd.f32 %v571, %v597
          %602 = vset.pattern.permute.xlu0 1
          %603 = vperm.xlu0 %602, %v588
          %v604 = vpop.permute.xlu0 %603
          %v606 = vmul.f32 %v584, %v604
          %v607 = vmul.f32 %v585, %v604
          %v608 = vmul.f32 %v586, %v604
          %v609 = vmul.f32 %v587, %v604
          %v610 = vadd.f32 %v580, %v606
          %v611 = vadd.f32 %v581, %v607
          %v612 = vadd.f32 %v582, %v608
          %v613 = vadd.f32 %v583, %v609
          %v614 = vld [vmem:[%s253 + $0x180] sm:$0xff]
          %v615 = vld [vmem:[%s253 + $0x188] sm:$0xff]
          %v616 = vld [vmem:[%s253 + $0x190] sm:$0xff]
          %v617 = vld [vmem:[%s253 + $0x198] sm:$0xff]
          %v618 = vld [vmem:[%s0 + $0x60] sm:$0xff]
          %620 = vset.pattern.permute.xlu0 0
          %621 = vperm.xlu0 %620, %v618
          %v622 = vpop.permute.xlu0 %621
          %v624 = vmul.f32 %v614, %v622
          %v625 = vmul.f32 %v615, %v622
          %v626 = vmul.f32 %v616, %v622
          %v627 = vmul.f32 %v617, %v622
          %v628 = vadd.f32 %v598, %v624
          %v629 = vadd.f32 %v599, %v625
          %v630 = vadd.f32 %v600, %v626
          %v631 = vadd.f32 %v601, %v627
          %632 = vset.pattern.permute.xlu0 1
          %633 = vperm.xlu0 %632, %v618
          %v634 = vpop.permute.xlu0 %633
          %v636 = vmul.f32 %v614, %v634
          %v637 = vmul.f32 %v615, %v634
          %v638 = vmul.f32 %v616, %v634
          %v639 = vmul.f32 %v617, %v634
          %v640 = vadd.f32 %v610, %v636
          %v641 = vadd.f32 %v611, %v637
          %v642 = vadd.f32 %v612, %v638
          %v643 = vadd.f32 %v613, %v639
          %v644 = vld [vmem:[%s253 + $0x1a0] sm:$0xff]
          %v645 = vld [vmem:[%s253 + $0x1a8] sm:$0xff]
          %v646 = vld [vmem:[%s253 + $0x1b0] sm:$0xff]
          %v647 = vld [vmem:[%s253 + $0x1b8] sm:$0xff]
          %v648 = vld [vmem:[%s0 + $0x68] sm:$0xff]
          %650 = vset.pattern.permute.xlu0 0
          %651 = vperm.xlu0 %650, %v648
          %v652 = vpop.permute.xlu0 %651
          %v654 = vmul.f32 %v644, %v652
          %v655 = vmul.f32 %v645, %v652
          %v656 = vmul.f32 %v646, %v652
          %v657 = vmul.f32 %v647, %v652
          %v658 = vadd.f32 %v628, %v654
          %v659 = vadd.f32 %v629, %v655
          %v660 = vadd.f32 %v630, %v656
          %v661 = vadd.f32 %v631, %v657
          %662 = vset.pattern.permute.xlu0 1
          %663 = vperm.xlu0 %662, %v648
          %v664 = vpop.permute.xlu0 %663
          %v666 = vmul.f32 %v644, %v664
          %v667 = vmul.f32 %v645, %v664
          %v668 = vmul.f32 %v646, %v664
          %v669 = vmul.f32 %v647, %v664
          %v670 = vadd.f32 %v640, %v666
          %v671 = vadd.f32 %v641, %v667
          %v672 = vadd.f32 %v642, %v668
          %v673 = vadd.f32 %v643, %v669
          %v674 = vld [vmem:[%s253 + $0x1c0] sm:$0xff]
          %v675 = vld [vmem:[%s253 + $0x1c8] sm:$0xff]
          %v676 = vld [vmem:[%s253 + $0x1d0] sm:$0xff]
          %v677 = vld [vmem:[%s253 + $0x1d8] sm:$0xff]
          %v678 = vld [vmem:[%s0 + $0x70] sm:$0xff]
          %680 = vset.pattern.permute.xlu0 0
          %681 = vperm.xlu0 %680, %v678
          %v682 = vpop.permute.xlu0 %681
          %v684 = vmul.f32 %v674, %v682
          %v685 = vmul.f32 %v675, %v682
          %v686 = vmul.f32 %v676, %v682
          %v687 = vmul.f32 %v677, %v682
          %v688 = vadd.f32 %v658, %v684
          %v689 = vadd.f32 %v659, %v685
          %v690 = vadd.f32 %v660, %v686
          %v691 = vadd.f32 %v661, %v687
          %692 = vset.pattern.permute.xlu0 1
          %693 = vperm.xlu0 %692, %v678
          %v694 = vpop.permute.xlu0 %693
          %v696 = vmul.f32 %v674, %v694
          %v697 = vmul.f32 %v675, %v694
          %v698 = vmul.f32 %v676, %v694
          %v699 = vmul.f32 %v677, %v694
          %v700 = vadd.f32 %v670, %v696
          %v701 = vadd.f32 %v671, %v697
          %v702 = vadd.f32 %v672, %v698
          %v703 = vadd.f32 %v673, %v699
          %v704 = vld [vmem:[%s253 + $0x1e0] sm:$0xff]
          %v705 = vld [vmem:[%s253 + $0x1e8] sm:$0xff]
          %v706 = vld [vmem:[%s253 + $0x1f0] sm:$0xff]
          %v707 = vld [vmem:[%s253 + $0x1f8] sm:$0xff]
          %v708 = vld [vmem:[%s0 + $0x78] sm:$0xff]
          %710 = vset.pattern.permute.xlu0 0
          %711 = vperm.xlu0 %710, %v708
          %v712 = vpop.permute.xlu0 %711
          %v714 = vmul.f32 %v704, %v712
          %v715 = vmul.f32 %v705, %v712
          %v716 = vmul.f32 %v706, %v712
          %v717 = vmul.f32 %v707, %v712
          %v718 = vadd.f32 %v688, %v714
          %v719 = vadd.f32 %v689, %v715
          %v720 = vadd.f32 %v690, %v716
          %v721 = vadd.f32 %v691, %v717
          %722 = vset.pattern.permute.xlu0 1
          %723 = vperm.xlu0 %722, %v708
          %v724 = vpop.permute.xlu0 %723
          %v726 = vmul.f32 %v704, %v724
          %v727 = vmul.f32 %v705, %v724
          %v728 = vmul.f32 %v706, %v724
          %v729 = vmul.f32 %v707, %v724
          %v730 = vadd.f32 %v700, %v726
          %v731 = vadd.f32 %v701, %v727
          %v732 = vadd.f32 %v702, %v728
          %v733 = vadd.f32 %v703, %v729
          %v734 = vld [vmem:[%s253 + $0x200] sm:$0xff]
          %v735 = vld [vmem:[%s253 + $0x208] sm:$0xff]
          %v736 = vld [vmem:[%s253 + $0x210] sm:$0xff]
          %v737 = vld [vmem:[%s253 + $0x218] sm:$0xff]
          %v738 = vld [vmem:[%s0 + $0x80] sm:$0xff]
          %740 = vset.pattern.permute.xlu0 0
          %741 = vperm.xlu0 %740, %v738
          %v742 = vpop.permute.xlu0 %741
          %v744 = vmul.f32 %v734, %v742
          %v745 = vmul.f32 %v735, %v742
          %v746 = vmul.f32 %v736, %v742
          %v747 = vmul.f32 %v737, %v742
          %v748 = vadd.f32 %v718, %v744
          %v749 = vadd.f32 %v719, %v745
          %v750 = vadd.f32 %v720, %v746
          %v751 = vadd.f32 %v721, %v747
          %752 = vset.pattern.permute.xlu0 1
          %753 = vperm.xlu0 %752, %v738
          %v754 = vpop.permute.xlu0 %753
          %v756 = vmul.f32 %v734, %v754
          %v757 = vmul.f32 %v735, %v754
          %v758 = vmul.f32 %v736, %v754
          %v759 = vmul.f32 %v737, %v754
          %v760 = vadd.f32 %v730, %v756
          %v761 = vadd.f32 %v731, %v757
          %v762 = vadd.f32 %v732, %v758
          %v763 = vadd.f32 %v733, %v759
          %v764 = vld [vmem:[%s253 + $0x220] sm:$0xff]
          %v765 = vld [vmem:[%s253 + $0x228] sm:$0xff]
          %v766 = vld [vmem:[%s253 + $0x230] sm:$0xff]
          %v767 = vld [vmem:[%s253 + $0x238] sm:$0xff]
          %v768 = vld [vmem:[%s0 + $0x88] sm:$0xff]
          %770 = vset.pattern.permute.xlu0 0
          %771 = vperm.xlu0 %770, %v768
          %v772 = vpop.permute.xlu0 %771
          %v774 = vmul.f32 %v764, %v772
          %v775 = vmul.f32 %v765, %v772
          %v776 = vmul.f32 %v766, %v772
          %v777 = vmul.f32 %v767, %v772
          %v778 = vadd.f32 %v748, %v774
          %v779 = vadd.f32 %v749, %v775
          %v780 = vadd.f32 %v750, %v776
          %v781 = vadd.f32 %v751, %v777
          %782 = vset.pattern.permute.xlu0 1
          %783 = vperm.xlu0 %782, %v768
          %v784 = vpop.permute.xlu0 %783
          %v786 = vmul.f32 %v764, %v784
          %v787 = vmul.f32 %v765, %v784
          %v788 = vmul.f32 %v766, %v784
          %v789 = vmul.f32 %v767, %v784
          %v790 = vadd.f32 %v760, %v786
          %v791 = vadd.f32 %v761, %v787
          %v792 = vadd.f32 %v762, %v788
          %v793 = vadd.f32 %v763, %v789
          %v794 = vld [vmem:[%s253 + $0x240] sm:$0xff]
          %v795 = vld [vmem:[%s253 + $0x248] sm:$0xff]
          %v796 = vld [vmem:[%s253 + $0x250] sm:$0xff]
          %v797 = vld [vmem:[%s253 + $0x258] sm:$0xff]
          %v798 = vld [vmem:[%s0 + $0x90] sm:$0xff]
          %800 = vset.pattern.permute.xlu0 0
          %801 = vperm.xlu0 %800, %v798
          %v802 = vpop.permute.xlu0 %801
          %v804 = vmul.f32 %v794, %v802
          %v805 = vmul.f32 %v795, %v802
          %v806 = vmul.f32 %v796, %v802
          %v807 = vmul.f32 %v797, %v802
          %v808 = vadd.f32 %v778, %v804
          %v809 = vadd.f32 %v779, %v805
          %v810 = vadd.f32 %v780, %v806
          %v811 = vadd.f32 %v781, %v807
          %812 = vset.pattern.permute.xlu0 1
          %813 = vperm.xlu0 %812, %v798
          %v814 = vpop.permute.xlu0 %813
          %v816 = vmul.f32 %v794, %v814
          %v817 = vmul.f32 %v795, %v814
          %v818 = vmul.f32 %v796, %v814
          %v819 = vmul.f32 %v797, %v814
          %v820 = vadd.f32 %v790, %v816
          %v821 = vadd.f32 %v791, %v817
          %v822 = vadd.f32 %v792, %v818
          %v823 = vadd.f32 %v793, %v819
          %v824 = vld [vmem:[%s253 + $0x260] sm:$0xff]
          %v825 = vld [vmem:[%s253 + $0x268] sm:$0xff]
          %v826 = vld [vmem:[%s253 + $0x270] sm:$0xff]
          %v827 = vld [vmem:[%s253 + $0x278] sm:$0xff]
          %v828 = vld [vmem:[%s0 + $0x98] sm:$0xff]
          %830 = vset.pattern.permute.xlu0 0
          %831 = vperm.xlu0 %830, %v828
          %v832 = vpop.permute.xlu0 %831
          %v834 = vmul.f32 %v824, %v832
          %v835 = vmul.f32 %v825, %v832
          %v836 = vmul.f32 %v826, %v832
          %v837 = vmul.f32 %v827, %v832
          %v838 = vadd.f32 %v808, %v834
          %v839 = vadd.f32 %v809, %v835
          %v840 = vadd.f32 %v810, %v836
          %v841 = vadd.f32 %v811, %v837
          %842 = vset.pattern.permute.xlu0 1
          %843 = vperm.xlu0 %842, %v828
          %v844 = vpop.permute.xlu0 %843
          %v846 = vmul.f32 %v824, %v844
          %v847 = vmul.f32 %v825, %v844
          %v848 = vmul.f32 %v826, %v844
          %v849 = vmul.f32 %v827, %v844
          %v850 = vadd.f32 %v820, %v846
          %v851 = vadd.f32 %v821, %v847
          %v852 = vadd.f32 %v822, %v848
          %v853 = vadd.f32 %v823, %v849
          %v854 = vld [vmem:[%s253 + $0x280] sm:$0xff]
          %v855 = vld [vmem:[%s253 + $0x288] sm:$0xff]
          %v856 = vld [vmem:[%s253 + $0x290] sm:$0xff]
          %v857 = vld [vmem:[%s253 + $0x298] sm:$0xff]
          %v858 = vld [vmem:[%s0 + $0xa0] sm:$0xff]
          %860 = vset.pattern.permute.xlu0 0
          %861 = vperm.xlu0 %860, %v858
          %v862 = vpop.permute.xlu0 %861
          %v864 = vmul.f32 %v854, %v862
          %v865 = vmul.f32 %v855, %v862
          %v866 = vmul.f32 %v856, %v862
          %v867 = vmul.f32 %v857, %v862
          %v868 = vadd.f32 %v838, %v864
          %v869 = vadd.f32 %v839, %v865
          %v870 = vadd.f32 %v840, %v866
          %v871 = vadd.f32 %v841, %v867
          %872 = vset.pattern.permute.xlu0 1
          %873 = vperm.xlu0 %872, %v858
          %v874 = vpop.permute.xlu0 %873
          %v876 = vmul.f32 %v854, %v874
          %v877 = vmul.f32 %v855, %v874
          %v878 = vmul.f32 %v856, %v874
          %v879 = vmul.f32 %v857, %v874
          %v880 = vadd.f32 %v850, %v876
          %v881 = vadd.f32 %v851, %v877
          %v882 = vadd.f32 %v852, %v878
          %v883 = vadd.f32 %v853, %v879
          %v884 = vld [vmem:[%s253 + $0x2a0] sm:$0xff]
          %v885 = vld [vmem:[%s253 + $0x2a8] sm:$0xff]
          %v886 = vld [vmem:[%s253 + $0x2b0] sm:$0xff]
          %v887 = vld [vmem:[%s253 + $0x2b8] sm:$0xff]
          %v888 = vld [vmem:[%s0 + $0xa8] sm:$0xff]
          %890 = vset.pattern.permute.xlu0 0
          %891 = vperm.xlu0 %890, %v888
          %v892 = vpop.permute.xlu0 %891
          %v894 = vmul.f32 %v884, %v892
          %v895 = vmul.f32 %v885, %v892
          %v896 = vmul.f32 %v886, %v892
          %v897 = vmul.f32 %v887, %v892
          %v898 = vadd.f32 %v868, %v894
          %v899 = vadd.f32 %v869, %v895
          %v900 = vadd.f32 %v870, %v896
          %v901 = vadd.f32 %v871, %v897
          %902 = vset.pattern.permute.xlu0 1
          %903 = vperm.xlu0 %902, %v888
          %v904 = vpop.permute.xlu0 %903
          %v906 = vmul.f32 %v884, %v904
          %v907 = vmul.f32 %v885, %v904
          %v908 = vmul.f32 %v886, %v904
          %v909 = vmul.f32 %v887, %v904
          %v910 = vadd.f32 %v880, %v906
          %v911 = vadd.f32 %v881, %v907
          %v912 = vadd.f32 %v882, %v908
          %v913 = vadd.f32 %v883, %v909
          %v914 = vld [vmem:[%s253 + $0x2c0] sm:$0xff]
          %v915 = vld [vmem:[%s253 + $0x2c8] sm:$0xff]
          %v916 = vld [vmem:[%s253 + $0x2d0] sm:$0xff]
          %v917 = vld [vmem:[%s253 + $0x2d8] sm:$0xff]
          %v918 = vld [vmem:[%s0 + $0xb0] sm:$0xff]
          %920 = vset.pattern.permute.xlu0 0
          %921 = vperm.xlu0 %920, %v918
          %v922 = vpop.permute.xlu0 %921
          %v924 = vmul.f32 %v914, %v922
          %v925 = vmul.f32 %v915, %v922
          %v926 = vmul.f32 %v916, %v922
          %v927 = vmul.f32 %v917, %v922
          %v928 = vadd.f32 %v898, %v924
          %v929 = vadd.f32 %v899, %v925
          %v930 = vadd.f32 %v900, %v926
          %v931 = vadd.f32 %v901, %v927
          %932 = vset.pattern.permute.xlu0 1
          %933 = vperm.xlu0 %932, %v918
          %v934 = vpop.permute.xlu0 %933
          %v936 = vmul.f32 %v914, %v934
          %v937 = vmul.f32 %v915, %v934
          %v938 = vmul.f32 %v916, %v934
          %v939 = vmul.f32 %v917, %v934
          %v940 = vadd.f32 %v910, %v936
          %v941 = vadd.f32 %v911, %v937
          %v942 = vadd.f32 %v912, %v938
          %v943 = vadd.f32 %v913, %v939
          %v944 = vld [vmem:[%s253 + $0x2e0] sm:$0xff]
          %v945 = vld [vmem:[%s253 + $0x2e8] sm:$0xff]
          %v946 = vld [vmem:[%s253 + $0x2f0] sm:$0xff]
          %v947 = vld [vmem:[%s253 + $0x2f8] sm:$0xff]
          %v948 = vld [vmem:[%s0 + $0xb8] sm:$0xff]
          %950 = vset.pattern.permute.xlu0 0
          %951 = vperm.xlu0 %950, %v948
          %v952 = vpop.permute.xlu0 %951
          %v954 = vmul.f32 %v944, %v952
          %v955 = vmul.f32 %v945, %v952
          %v956 = vmul.f32 %v946, %v952
          %v957 = vmul.f32 %v947, %v952
          %v958 = vadd.f32 %v928, %v954
          %v959 = vadd.f32 %v929, %v955
          %v960 = vadd.f32 %v930, %v956
          %v961 = vadd.f32 %v931, %v957
          %962 = vset.pattern.permute.xlu0 1
          %963 = vperm.xlu0 %962, %v948
          %v964 = vpop.permute.xlu0 %963
          %v966 = vmul.f32 %v944, %v964
          %v967 = vmul.f32 %v945, %v964
          %v968 = vmul.f32 %v946, %v964
          %v969 = vmul.f32 %v947, %v964
          %v970 = vadd.f32 %v940, %v966
          %v971 = vadd.f32 %v941, %v967
          %v972 = vadd.f32 %v942, %v968
          %v973 = vadd.f32 %v943, %v969
          %v974 = vld [vmem:[%s253 + $0x300] sm:$0xff]
          %v975 = vld [vmem:[%s253 + $0x308] sm:$0xff]
          %v976 = vld [vmem:[%s253 + $0x310] sm:$0xff]
          %v977 = vld [vmem:[%s253 + $0x318] sm:$0xff]
          %v978 = vld [vmem:[%s0 + $0xc0] sm:$0xff]
          %980 = vset.pattern.permute.xlu0 0
          %981 = vperm.xlu0 %980, %v978
          %v982 = vpop.permute.xlu0 %981
          %v984 = vmul.f32 %v974, %v982
          %v985 = vmul.f32 %v975, %v982
          %v986 = vmul.f32 %v976, %v982
          %v987 = vmul.f32 %v977, %v982
          %v988 = vadd.f32 %v958, %v984
          %v989 = vadd.f32 %v959, %v985
          %v990 = vadd.f32 %v960, %v986
          %v991 = vadd.f32 %v961, %v987
          %992 = vset.pattern.permute.xlu0 1
          %993 = vperm.xlu0 %992, %v978
          %v994 = vpop.permute.xlu0 %993
          %v996 = vmul.f32 %v974, %v994
          %v997 = vmul.f32 %v975, %v994
          %v998 = vmul.f32 %v976, %v994
          %v999 = vmul.f32 %v977, %v994
          %v1000 = vadd.f32 %v970, %v996
          %v1001 = vadd.f32 %v971, %v997
          %v1002 = vadd.f32 %v972, %v998
          %v1003 = vadd.f32 %v973, %v999
          %v1004 = vld [vmem:[%s253 + $0x320] sm:$0xff]
          %v1005 = vld [vmem:[%s253 + $0x328] sm:$0xff]
          %v1006 = vld [vmem:[%s253 + $0x330] sm:$0xff]
          %v1007 = vld [vmem:[%s253 + $0x338] sm:$0xff]
          %v1008 = vld [vmem:[%s0 + $0xc8] sm:$0xff]
          %1010 = vset.pattern.permute.xlu0 0
          %1011 = vperm.xlu0 %1010, %v1008
          %v1012 = vpop.permute.xlu0 %1011
          %v1014 = vmul.f32 %v1004, %v1012
          %v1015 = vmul.f32 %v1005, %v1012
          %v1016 = vmul.f32 %v1006, %v1012
          %v1017 = vmul.f32 %v1007, %v1012
          %v1018 = vadd.f32 %v988, %v1014
          %v1019 = vadd.f32 %v989, %v1015
          %v1020 = vadd.f32 %v990, %v1016
          %v1021 = vadd.f32 %v991, %v1017
          %1022 = vset.pattern.permute.xlu0 1
          %1023 = vperm.xlu0 %1022, %v1008
          %v1024 = vpop.permute.xlu0 %1023
          %v1026 = vmul.f32 %v1004, %v1024
          %v1027 = vmul.f32 %v1005, %v1024
          %v1028 = vmul.f32 %v1006, %v1024
          %v1029 = vmul.f32 %v1007, %v1024
          %v1030 = vadd.f32 %v1000, %v1026
          %v1031 = vadd.f32 %v1001, %v1027
          %v1032 = vadd.f32 %v1002, %v1028
          %v1033 = vadd.f32 %v1003, %v1029
          %v1034 = vld [vmem:[%s253 + $0x340] sm:$0xff]
          %v1035 = vld [vmem:[%s253 + $0x348] sm:$0xff]
          %v1036 = vld [vmem:[%s253 + $0x350] sm:$0xff]
          %v1037 = vld [vmem:[%s253 + $0x358] sm:$0xff]
          %v1038 = vld [vmem:[%s0 + $0xd0] sm:$0xff]
          %1040 = vset.pattern.permute.xlu0 0
          %1041 = vperm.xlu0 %1040, %v1038
          %v1042 = vpop.permute.xlu0 %1041
          %v1044 = vmul.f32 %v1034, %v1042
          %v1045 = vmul.f32 %v1035, %v1042
          %v1046 = vmul.f32 %v1036, %v1042
          %v1047 = vmul.f32 %v1037, %v1042
          %v1048 = vadd.f32 %v1018, %v1044
          %v1049 = vadd.f32 %v1019, %v1045
          %v1050 = vadd.f32 %v1020, %v1046
          %v1051 = vadd.f32 %v1021, %v1047
          %1052 = vset.pattern.permute.xlu0 1
          %1053 = vperm.xlu0 %1052, %v1038
          %v1054 = vpop.permute.xlu0 %1053
          %v1056 = vmul.f32 %v1034, %v1054
          %v1057 = vmul.f32 %v1035, %v1054
          %v1058 = vmul.f32 %v1036, %v1054
          %v1059 = vmul.f32 %v1037, %v1054
          %v1060 = vadd.f32 %v1030, %v1056
          %v1061 = vadd.f32 %v1031, %v1057
          %v1062 = vadd.f32 %v1032, %v1058
          %v1063 = vadd.f32 %v1033, %v1059
          %v1064 = vld [vmem:[%s253 + $0x360] sm:$0xff]
          %v1065 = vld [vmem:[%s253 + $0x368] sm:$0xff]
          %v1066 = vld [vmem:[%s253 + $0x370] sm:$0xff]
          %v1067 = vld [vmem:[%s253 + $0x378] sm:$0xff]
          %v1068 = vld [vmem:[%s0 + $0xd8] sm:$0xff]
          %1070 = vset.pattern.permute.xlu0 0
          %1071 = vperm.xlu0 %1070, %v1068
          %v1072 = vpop.permute.xlu0 %1071
          %v1074 = vmul.f32 %v1064, %v1072
          %v1075 = vmul.f32 %v1065, %v1072
          %v1076 = vmul.f32 %v1066, %v1072
          %v1077 = vmul.f32 %v1067, %v1072
          %v1078 = vadd.f32 %v1048, %v1074
          %v1079 = vadd.f32 %v1049, %v1075
          %v1080 = vadd.f32 %v1050, %v1076
          %v1081 = vadd.f32 %v1051, %v1077
          %1082 = vset.pattern.permute.xlu0 1
          %1083 = vperm.xlu0 %1082, %v1068
          %v1084 = vpop.permute.xlu0 %1083
          %v1086 = vmul.f32 %v1064, %v1084
          %v1087 = vmul.f32 %v1065, %v1084
          %v1088 = vmul.f32 %v1066, %v1084
          %v1089 = vmul.f32 %v1067, %v1084
          %v1090 = vadd.f32 %v1060, %v1086
          %v1091 = vadd.f32 %v1061, %v1087
          %v1092 = vadd.f32 %v1062, %v1088
          %v1093 = vadd.f32 %v1063, %v1089
          %v1094 = vld [vmem:[%s253 + $0x380] sm:$0xff]
          %v1095 = vld [vmem:[%s253 + $0x388] sm:$0xff]
          %v1096 = vld [vmem:[%s253 + $0x390] sm:$0xff]
          %v1097 = vld [vmem:[%s253 + $0x398] sm:$0xff]
          %v1098 = vld [vmem:[%s0 + $0xe0] sm:$0xff]
          %1100 = vset.pattern.permute.xlu0 0
          %1101 = vperm.xlu0 %1100, %v1098
          %v1102 = vpop.permute.xlu0 %1101
          %v1104 = vmul.f32 %v1094, %v1102
          %v1105 = vmul.f32 %v1095, %v1102
          %v1106 = vmul.f32 %v1096, %v1102
          %v1107 = vmul.f32 %v1097, %v1102
          %v1108 = vadd.f32 %v1078, %v1104
          %v1109 = vadd.f32 %v1079, %v1105
          %v1110 = vadd.f32 %v1080, %v1106
          %v1111 = vadd.f32 %v1081, %v1107
          %1112 = vset.pattern.permute.xlu0 1
          %1113 = vperm.xlu0 %1112, %v1098
          %v1114 = vpop.permute.xlu0 %1113
          %v1116 = vmul.f32 %v1094, %v1114
          %v1117 = vmul.f32 %v1095, %v1114
          %v1118 = vmul.f32 %v1096, %v1114
          %v1119 = vmul.f32 %v1097, %v1114
          %v1120 = vadd.f32 %v1090, %v1116
          %v1121 = vadd.f32 %v1091, %v1117
          %v1122 = vadd.f32 %v1092, %v1118
          %v1123 = vadd.f32 %v1093, %v1119
          %v1124 = vld [vmem:[%s253 + $0x3a0] sm:$0xff]
          %v1125 = vld [vmem:[%s253 + $0x3a8] sm:$0xff]
          %v1126 = vld [vmem:[%s253 + $0x3b0] sm:$0xff]
          %v1127 = vld [vmem:[%s253 + $0x3b8] sm:$0xff]
          %v1128 = vld [vmem:[%s0 + $0xe8] sm:$0xff]
          %1130 = vset.pattern.permute.xlu0 0
          %1131 = vperm.xlu0 %1130, %v1128
          %v1132 = vpop.permute.xlu0 %1131
          %v1134 = vmul.f32 %v1124, %v1132
          %v1135 = vmul.f32 %v1125, %v1132
          %v1136 = vmul.f32 %v1126, %v1132
          %v1137 = vmul.f32 %v1127, %v1132
          %v1138 = vadd.f32 %v1108, %v1134
          %v1139 = vadd.f32 %v1109, %v1135
          %v1140 = vadd.f32 %v1110, %v1136
          %v1141 = vadd.f32 %v1111, %v1137
          %1142 = vset.pattern.permute.xlu0 1
          %1143 = vperm.xlu0 %1142, %v1128
          %v1144 = vpop.permute.xlu0 %1143
          %v1146 = vmul.f32 %v1124, %v1144
          %v1147 = vmul.f32 %v1125, %v1144
          %v1148 = vmul.f32 %v1126, %v1144
          %v1149 = vmul.f32 %v1127, %v1144
          %v1150 = vadd.f32 %v1120, %v1146
          %v1151 = vadd.f32 %v1121, %v1147
          %v1152 = vadd.f32 %v1122, %v1148
          %v1153 = vadd.f32 %v1123, %v1149
          %v1154 = vld [vmem:[%s253 + $0x3c0] sm:$0xff]
          %v1155 = vld [vmem:[%s253 + $0x3c8] sm:$0xff]
          %v1156 = vld [vmem:[%s253 + $0x3d0] sm:$0xff]
          %v1157 = vld [vmem:[%s253 + $0x3d8] sm:$0xff]
          %v1158 = vld [vmem:[%s0 + $0xf0] sm:$0xff]
          %1160 = vset.pattern.permute.xlu0 0
          %1161 = vperm.xlu0 %1160, %v1158
          %v1162 = vpop.permute.xlu0 %1161
          %v1164 = vmul.f32 %v1154, %v1162
          %v1165 = vmul.f32 %v1155, %v1162
          %v1166 = vmul.f32 %v1156, %v1162
          %v1167 = vmul.f32 %v1157, %v1162
          %v1168 = vadd.f32 %v1138, %v1164
          %v1169 = vadd.f32 %v1139, %v1165
          %v1170 = vadd.f32 %v1140, %v1166
          %v1171 = vadd.f32 %v1141, %v1167
          %1172 = vset.pattern.permute.xlu0 1
          %1173 = vperm.xlu0 %1172, %v1158
          %v1174 = vpop.permute.xlu0 %1173
          %v1176 = vmul.f32 %v1154, %v1174
          %v1177 = vmul.f32 %v1155, %v1174
          %v1178 = vmul.f32 %v1156, %v1174
          %v1179 = vmul.f32 %v1157, %v1174
          %v1180 = vadd.f32 %v1150, %v1176
          %v1181 = vadd.f32 %v1151, %v1177
          %v1182 = vadd.f32 %v1152, %v1178
          %v1183 = vadd.f32 %v1153, %v1179
          %v1184 = vld [vmem:[%s253 + $0x3e0] sm:$0xff]
          %v1185 = vld [vmem:[%s253 + $0x3e8] sm:$0xff]
          %v1186 = vld [vmem:[%s253 + $0x3f0] sm:$0xff]
          %v1187 = vld [vmem:[%s253 + $0x3f8] sm:$0xff]
          %v1188 = vld [vmem:[%s0 + $0xf8] sm:$0xff]
          %1190 = vset.pattern.permute.xlu0 0
          %1191 = vperm.xlu0 %1190, %v1188
          %v1192 = vpop.permute.xlu0 %1191
          %v1194 = vmul.f32 %v1184, %v1192
          %v1195 = vmul.f32 %v1185, %v1192
          %v1196 = vmul.f32 %v1186, %v1192
          %v1197 = vmul.f32 %v1187, %v1192
          %v1198 = vadd.f32 %v1168, %v1194
          %v1199 = vadd.f32 %v1169, %v1195
          %v1200 = vadd.f32 %v1170, %v1196
          %v1201 = vadd.f32 %v1171, %v1197
          %1202 = vset.pattern.permute.xlu0 1
          %1203 = vperm.xlu0 %1202, %v1188
          %v1204 = vpop.permute.xlu0 %1203
          %v1206 = vmul.f32 %v1184, %v1204
          %v1207 = vmul.f32 %v1185, %v1204
          %v1208 = vmul.f32 %v1186, %v1204
          %v1209 = vmul.f32 %v1187, %v1204
          %v1210 = vadd.f32 %v1180, %v1206
          %v1211 = vadd.f32 %v1181, %v1207
          %v1212 = vadd.f32 %v1182, %v1208
          %v1213 = vadd.f32 %v1183, %v1209
          %v1214 = vld [vmem:[%s253 + $0x400] sm:$0xff]
          %v1215 = vld [vmem:[%s253 + $0x408] sm:$0xff]
          %v1216 = vld [vmem:[%s253 + $0x410] sm:$0xff]
          %v1217 = vld [vmem:[%s253 + $0x418] sm:$0xff]
          %v1218 = vld [vmem:[%s0 + $0x100] sm:$0xff]
          %1220 = vset.pattern.permute.xlu0 0
          %1221 = vperm.xlu0 %1220, %v1218
          %v1222 = vpop.permute.xlu0 %1221
          %v1224 = vmul.f32 %v1214, %v1222
          %v1225 = vmul.f32 %v1215, %v1222
          %v1226 = vmul.f32 %v1216, %v1222
          %v1227 = vmul.f32 %v1217, %v1222
          %v1228 = vadd.f32 %v1198, %v1224
          %v1229 = vadd.f32 %v1199, %v1225
          %v1230 = vadd.f32 %v1200, %v1226
          %v1231 = vadd.f32 %v1201, %v1227
          %1232 = vset.pattern.permute.xlu0 1
          %1233 = vperm.xlu0 %1232, %v1218
          %v1234 = vpop.permute.xlu0 %1233
          %v1236 = vmul.f32 %v1214, %v1234
          %v1237 = vmul.f32 %v1215, %v1234
          %v1238 = vmul.f32 %v1216, %v1234
          %v1239 = vmul.f32 %v1217, %v1234
          %v1240 = vadd.f32 %v1210, %v1236
          %v1241 = vadd.f32 %v1211, %v1237
          %v1242 = vadd.f32 %v1212, %v1238
          %v1243 = vadd.f32 %v1213, %v1239
          %v1244 = vld [vmem:[%s253 + $0x420] sm:$0xff]
          %v1245 = vld [vmem:[%s253 + $0x428] sm:$0xff]
          %v1246 = vld [vmem:[%s253 + $0x430] sm:$0xff]
          %v1247 = vld [vmem:[%s253 + $0x438] sm:$0xff]
          %v1248 = vld [vmem:[%s0 + $0x108] sm:$0xff]
          %1250 = vset.pattern.permute.xlu0 0
          %1251 = vperm.xlu0 %1250, %v1248
          %v1252 = vpop.permute.xlu0 %1251
          %v1254 = vmul.f32 %v1244, %v1252
          %v1255 = vmul.f32 %v1245, %v1252
          %v1256 = vmul.f32 %v1246, %v1252
          %v1257 = vmul.f32 %v1247, %v1252
          %v1258 = vadd.f32 %v1228, %v1254
          %v1259 = vadd.f32 %v1229, %v1255
          %v1260 = vadd.f32 %v1230, %v1256
          %v1261 = vadd.f32 %v1231, %v1257
          %1262 = vset.pattern.permute.xlu0 1
          %1263 = vperm.xlu0 %1262, %v1248
          %v1264 = vpop.permute.xlu0 %1263
          %v1266 = vmul.f32 %v1244, %v1264
          %v1267 = vmul.f32 %v1245, %v1264
          %v1268 = vmul.f32 %v1246, %v1264
          %v1269 = vmul.f32 %v1247, %v1264
          %v1270 = vadd.f32 %v1240, %v1266
          %v1271 = vadd.f32 %v1241, %v1267
          %v1272 = vadd.f32 %v1242, %v1268
          %v1273 = vadd.f32 %v1243, %v1269
          %v1274 = vld [vmem:[%s253 + $0x440] sm:$0xff]
          %v1275 = vld [vmem:[%s253 + $0x448] sm:$0xff]
          %v1276 = vld [vmem:[%s253 + $0x450] sm:$0xff]
          %v1277 = vld [vmem:[%s253 + $0x458] sm:$0xff]
          %v1278 = vld [vmem:[%s0 + $0x110] sm:$0xff]
          %1280 = vset.pattern.permute.xlu0 0
          %1281 = vperm.xlu0 %1280, %v1278
          %v1282 = vpop.permute.xlu0 %1281
          %v1284 = vmul.f32 %v1274, %v1282
          %v1285 = vmul.f32 %v1275, %v1282
          %v1286 = vmul.f32 %v1276, %v1282
          %v1287 = vmul.f32 %v1277, %v1282
          %v1288 = vadd.f32 %v1258, %v1284
          %v1289 = vadd.f32 %v1259, %v1285
          %v1290 = vadd.f32 %v1260, %v1286
          %v1291 = vadd.f32 %v1261, %v1287
          %1292 = vset.pattern.permute.xlu0 1
          %1293 = vperm.xlu0 %1292, %v1278
          %v1294 = vpop.permute.xlu0 %1293
          %v1296 = vmul.f32 %v1274, %v1294
          %v1297 = vmul.f32 %v1275, %v1294
          %v1298 = vmul.f32 %v1276, %v1294
          %v1299 = vmul.f32 %v1277, %v1294
          %v1300 = vadd.f32 %v1270, %v1296
          %v1301 = vadd.f32 %v1271, %v1297
          %v1302 = vadd.f32 %v1272, %v1298
          %v1303 = vadd.f32 %v1273, %v1299
          %v1304 = vld [vmem:[%s253 + $0x460] sm:$0xff]
          %v1305 = vld [vmem:[%s253 + $0x468] sm:$0xff]
          %v1306 = vld [vmem:[%s253 + $0x470] sm:$0xff]
          %v1307 = vld [vmem:[%s253 + $0x478] sm:$0xff]
          %v1308 = vld [vmem:[%s0 + $0x118] sm:$0xff]
          %1310 = vset.pattern.permute.xlu0 0
          %1311 = vperm.xlu0 %1310, %v1308
          %v1312 = vpop.permute.xlu0 %1311
          %v1314 = vmul.f32 %v1304, %v1312
          %v1315 = vmul.f32 %v1305, %v1312
          %v1316 = vmul.f32 %v1306, %v1312
          %v1317 = vmul.f32 %v1307, %v1312
          %v1318 = vadd.f32 %v1288, %v1314
          %v1319 = vadd.f32 %v1289, %v1315
          %v1320 = vadd.f32 %v1290, %v1316
          %v1321 = vadd.f32 %v1291, %v1317
          %1322 = vset.pattern.permute.xlu0 1
          %1323 = vperm.xlu0 %1322, %v1308
          %v1324 = vpop.permute.xlu0 %1323
          %v1326 = vmul.f32 %v1304, %v1324
          %v1327 = vmul.f32 %v1305, %v1324
          %v1328 = vmul.f32 %v1306, %v1324
          %v1329 = vmul.f32 %v1307, %v1324
          %v1330 = vadd.f32 %v1300, %v1326
          %v1331 = vadd.f32 %v1301, %v1327
          %v1332 = vadd.f32 %v1302, %v1328
          %v1333 = vadd.f32 %v1303, %v1329
          %v1334 = vld [vmem:[%s253 + $0x480] sm:$0xff]
          %v1335 = vld [vmem:[%s253 + $0x488] sm:$0xff]
          %v1336 = vld [vmem:[%s253 + $0x490] sm:$0xff]
          %v1337 = vld [vmem:[%s253 + $0x498] sm:$0xff]
          %v1338 = vld [vmem:[%s0 + $0x120] sm:$0xff]
          %1340 = vset.pattern.permute.xlu0 0
          %1341 = vperm.xlu0 %1340, %v1338
          %v1342 = vpop.permute.xlu0 %1341
          %v1344 = vmul.f32 %v1334, %v1342
          %v1345 = vmul.f32 %v1335, %v1342
          %v1346 = vmul.f32 %v1336, %v1342
          %v1347 = vmul.f32 %v1337, %v1342
          %v1348 = vadd.f32 %v1318, %v1344
          %v1349 = vadd.f32 %v1319, %v1345
          %v1350 = vadd.f32 %v1320, %v1346
          %v1351 = vadd.f32 %v1321, %v1347
          %1352 = vset.pattern.permute.xlu0 1
          %1353 = vperm.xlu0 %1352, %v1338
          %v1354 = vpop.permute.xlu0 %1353
          %v1356 = vmul.f32 %v1334, %v1354
          %v1357 = vmul.f32 %v1335, %v1354
          %v1358 = vmul.f32 %v1336, %v1354
          %v1359 = vmul.f32 %v1337, %v1354
          %v1360 = vadd.f32 %v1330, %v1356
          %v1361 = vadd.f32 %v1331, %v1357
          %v1362 = vadd.f32 %v1332, %v1358
          %v1363 = vadd.f32 %v1333, %v1359
          %v1364 = vld [vmem:[%s253 + $0x4a0] sm:$0xff]
          %v1365 = vld [vmem:[%s253 + $0x4a8] sm:$0xff]
          %v1366 = vld [vmem:[%s253 + $0x4b0] sm:$0xff]
          %v1367 = vld [vmem:[%s253 + $0x4b8] sm:$0xff]
          %v1368 = vld [vmem:[%s0 + $0x128] sm:$0xff]
          %1370 = vset.pattern.permute.xlu0 0
          %1371 = vperm.xlu0 %1370, %v1368
          %v1372 = vpop.permute.xlu0 %1371
          %v1374 = vmul.f32 %v1364, %v1372
          %v1375 = vmul.f32 %v1365, %v1372
          %v1376 = vmul.f32 %v1366, %v1372
          %v1377 = vmul.f32 %v1367, %v1372
          %v1378 = vadd.f32 %v1348, %v1374
          %v1379 = vadd.f32 %v1349, %v1375
          %v1380 = vadd.f32 %v1350, %v1376
          %v1381 = vadd.f32 %v1351, %v1377
          %1382 = vset.pattern.permute.xlu0 1
          %1383 = vperm.xlu0 %1382, %v1368
          %v1384 = vpop.permute.xlu0 %1383
          %v1386 = vmul.f32 %v1364, %v1384
          %v1387 = vmul.f32 %v1365, %v1384
          %v1388 = vmul.f32 %v1366, %v1384
          %v1389 = vmul.f32 %v1367, %v1384
          %v1390 = vadd.f32 %v1360, %v1386
          %v1391 = vadd.f32 %v1361, %v1387
          %v1392 = vadd.f32 %v1362, %v1388
          %v1393 = vadd.f32 %v1363, %v1389
          %v1394 = vld [vmem:[%s253 + $0x4c0] sm:$0xff]
          %v1395 = vld [vmem:[%s253 + $0x4c8] sm:$0xff]
          %v1396 = vld [vmem:[%s253 + $0x4d0] sm:$0xff]
          %v1397 = vld [vmem:[%s253 + $0x4d8] sm:$0xff]
          %v1398 = vld [vmem:[%s0 + $0x130] sm:$0xff]
          %1400 = vset.pattern.permute.xlu0 0
          %1401 = vperm.xlu0 %1400, %v1398
          %v1402 = vpop.permute.xlu0 %1401
          %v1404 = vmul.f32 %v1394, %v1402
          %v1405 = vmul.f32 %v1395, %v1402
          %v1406 = vmul.f32 %v1396, %v1402
          %v1407 = vmul.f32 %v1397, %v1402
          %v1408 = vadd.f32 %v1378, %v1404
          %v1409 = vadd.f32 %v1379, %v1405
          %v1410 = vadd.f32 %v1380, %v1406
          %v1411 = vadd.f32 %v1381, %v1407
          %1412 = vset.pattern.permute.xlu0 1
          %1413 = vperm.xlu0 %1412, %v1398
          %v1414 = vpop.permute.xlu0 %1413
          %v1416 = vmul.f32 %v1394, %v1414
          %v1417 = vmul.f32 %v1395, %v1414
          %v1418 = vmul.f32 %v1396, %v1414
          %v1419 = vmul.f32 %v1397, %v1414
          %v1420 = vadd.f32 %v1390, %v1416
          %v1421 = vadd.f32 %v1391, %v1417
          %v1422 = vadd.f32 %v1392, %v1418
          %v1423 = vadd.f32 %v1393, %v1419
          %v1424 = vld [vmem:[%s253 + $0x4e0] sm:$0xff]
          %v1425 = vld [vmem:[%s253 + $0x4e8] sm:$0xff]
          %v1426 = vld [vmem:[%s253 + $0x4f0] sm:$0xff]
          %v1427 = vld [vmem:[%s253 + $0x4f8] sm:$0xff]
          %v1428 = vld [vmem:[%s0 + $0x138] sm:$0xff]
          %1430 = vset.pattern.permute.xlu0 0
          %1431 = vperm.xlu0 %1430, %v1428
          %v1432 = vpop.permute.xlu0 %1431
          %v1434 = vmul.f32 %v1424, %v1432
          %v1435 = vmul.f32 %v1425, %v1432
          %v1436 = vmul.f32 %v1426, %v1432
          %v1437 = vmul.f32 %v1427, %v1432
          %v1438 = vadd.f32 %v1408, %v1434
          %v1439 = vadd.f32 %v1409, %v1435
          %v1440 = vadd.f32 %v1410, %v1436
          %v1441 = vadd.f32 %v1411, %v1437
          %1442 = vset.pattern.permute.xlu0 1
          %1443 = vperm.xlu0 %1442, %v1428
          %v1444 = vpop.permute.xlu0 %1443
          %v1446 = vmul.f32 %v1424, %v1444
          %v1447 = vmul.f32 %v1425, %v1444
          %v1448 = vmul.f32 %v1426, %v1444
          %v1449 = vmul.f32 %v1427, %v1444
          %v1450 = vadd.f32 %v1420, %v1446
          %v1451 = vadd.f32 %v1421, %v1447
          %v1452 = vadd.f32 %v1422, %v1448
          %v1453 = vadd.f32 %v1423, %v1449
          %v1454 = vld [vmem:[%s253 + $0x500] sm:$0xff]
          %v1455 = vld [vmem:[%s253 + $0x508] sm:$0xff]
          %v1456 = vld [vmem:[%s253 + $0x510] sm:$0xff]
          %v1457 = vld [vmem:[%s253 + $0x518] sm:$0xff]
          %v1458 = vld [vmem:[%s0 + $0x140] sm:$0xff]
          %1460 = vset.pattern.permute.xlu0 0
          %1461 = vperm.xlu0 %1460, %v1458
          %v1462 = vpop.permute.xlu0 %1461
          %v1464 = vmul.f32 %v1454, %v1462
          %v1465 = vmul.f32 %v1455, %v1462
          %v1466 = vmul.f32 %v1456, %v1462
          %v1467 = vmul.f32 %v1457, %v1462
          %v1468 = vadd.f32 %v1438, %v1464
          %v1469 = vadd.f32 %v1439, %v1465
          %v1470 = vadd.f32 %v1440, %v1466
          %v1471 = vadd.f32 %v1441, %v1467
          %1472 = vset.pattern.permute.xlu0 1
          %1473 = vperm.xlu0 %1472, %v1458
          %v1474 = vpop.permute.xlu0 %1473
          %v1476 = vmul.f32 %v1454, %v1474
          %v1477 = vmul.f32 %v1455, %v1474
          %v1478 = vmul.f32 %v1456, %v1474
          %v1479 = vmul.f32 %v1457, %v1474
          %v1480 = vadd.f32 %v1450, %v1476
          %v1481 = vadd.f32 %v1451, %v1477
          %v1482 = vadd.f32 %v1452, %v1478
          %v1483 = vadd.f32 %v1453, %v1479
          %v1484 = vld [vmem:[%s253 + $0x520] sm:$0xff]
          %v1485 = vld [vmem:[%s253 + $0x528] sm:$0xff]
          %v1486 = vld [vmem:[%s253 + $0x530] sm:$0xff]
          %v1487 = vld [vmem:[%s253 + $0x538] sm:$0xff]
          %v1488 = vld [vmem:[%s0 + $0x148] sm:$0xff]
          %1490 = vset.pattern.permute.xlu0 0
          %1491 = vperm.xlu0 %1490, %v1488
          %v1492 = vpop.permute.xlu0 %1491
          %v1494 = vmul.f32 %v1484, %v1492
          %v1495 = vmul.f32 %v1485, %v1492
          %v1496 = vmul.f32 %v1486, %v1492
          %v1497 = vmul.f32 %v1487, %v1492
          %v1498 = vadd.f32 %v1468, %v1494
          %v1499 = vadd.f32 %v1469, %v1495
          %v1500 = vadd.f32 %v1470, %v1496
          %v1501 = vadd.f32 %v1471, %v1497
          %1502 = vset.pattern.permute.xlu0 1
          %1503 = vperm.xlu0 %1502, %v1488
          %v1504 = vpop.permute.xlu0 %1503
          %v1506 = vmul.f32 %v1484, %v1504
          %v1507 = vmul.f32 %v1485, %v1504
          %v1508 = vmul.f32 %v1486, %v1504
          %v1509 = vmul.f32 %v1487, %v1504
          %v1510 = vadd.f32 %v1480, %v1506
          %v1511 = vadd.f32 %v1481, %v1507
          %v1512 = vadd.f32 %v1482, %v1508
          %v1513 = vadd.f32 %v1483, %v1509
          %v1514 = vld [vmem:[%s253 + $0x540] sm:$0xff]
          %v1515 = vld [vmem:[%s253 + $0x548] sm:$0xff]
          %v1516 = vld [vmem:[%s253 + $0x550] sm:$0xff]
          %v1517 = vld [vmem:[%s253 + $0x558] sm:$0xff]
          %v1518 = vld [vmem:[%s0 + $0x150] sm:$0xff]
          %1520 = vset.pattern.permute.xlu0 0
          %1521 = vperm.xlu0 %1520, %v1518
          %v1522 = vpop.permute.xlu0 %1521
          %v1524 = vmul.f32 %v1514, %v1522
          %v1525 = vmul.f32 %v1515, %v1522
          %v1526 = vmul.f32 %v1516, %v1522
          %v1527 = vmul.f32 %v1517, %v1522
          %v1528 = vadd.f32 %v1498, %v1524
          %v1529 = vadd.f32 %v1499, %v1525
          %v1530 = vadd.f32 %v1500, %v1526
          %v1531 = vadd.f32 %v1501, %v1527
          %1532 = vset.pattern.permute.xlu0 1
          %1533 = vperm.xlu0 %1532, %v1518
          %v1534 = vpop.permute.xlu0 %1533
          %v1536 = vmul.f32 %v1514, %v1534
          %v1537 = vmul.f32 %v1515, %v1534
          %v1538 = vmul.f32 %v1516, %v1534
          %v1539 = vmul.f32 %v1517, %v1534
          %v1540 = vadd.f32 %v1510, %v1536
          %v1541 = vadd.f32 %v1511, %v1537
          %v1542 = vadd.f32 %v1512, %v1538
          %v1543 = vadd.f32 %v1513, %v1539
          %v1544 = vld [vmem:[%s253 + $0x560] sm:$0xff]
          %v1545 = vld [vmem:[%s253 + $0x568] sm:$0xff]
          %v1546 = vld [vmem:[%s253 + $0x570] sm:$0xff]
          %v1547 = vld [vmem:[%s253 + $0x578] sm:$0xff]
          %v1548 = vld [vmem:[%s0 + $0x158] sm:$0xff]
          %1550 = vset.pattern.permute.xlu0 0
          %1551 = vperm.xlu0 %1550, %v1548
          %v1552 = vpop.permute.xlu0 %1551
          %v1554 = vmul.f32 %v1544, %v1552
          %v1555 = vmul.f32 %v1545, %v1552
          %v1556 = vmul.f32 %v1546, %v1552
          %v1557 = vmul.f32 %v1547, %v1552
          %v1558 = vadd.f32 %v1528, %v1554
          %v1559 = vadd.f32 %v1529, %v1555
          %v1560 = vadd.f32 %v1530, %v1556
          %v1561 = vadd.f32 %v1531, %v1557
          %1562 = vset.pattern.permute.xlu0 1
          %1563 = vperm.xlu0 %1562, %v1548
          %v1564 = vpop.permute.xlu0 %1563
          %v1566 = vmul.f32 %v1544, %v1564
          %v1567 = vmul.f32 %v1545, %v1564
          %v1568 = vmul.f32 %v1546, %v1564
          %v1569 = vmul.f32 %v1547, %v1564
          %v1570 = vadd.f32 %v1540, %v1566
          %v1571 = vadd.f32 %v1541, %v1567
          %v1572 = vadd.f32 %v1542, %v1568
          %v1573 = vadd.f32 %v1543, %v1569
          %v1574 = vld [vmem:[%s253 + $0x580] sm:$0xff]
          %v1575 = vld [vmem:[%s253 + $0x588] sm:$0xff]
          %v1576 = vld [vmem:[%s253 + $0x590] sm:$0xff]
          %v1577 = vld [vmem:[%s253 + $0x598] sm:$0xff]
          %v1578 = vld [vmem:[%s0 + $0x160] sm:$0xff]
          %1580 = vset.pattern.permute.xlu0 0
          %1581 = vperm.xlu0 %1580, %v1578
          %v1582 = vpop.permute.xlu0 %1581
          %v1584 = vmul.f32 %v1574, %v1582
          %v1585 = vmul.f32 %v1575, %v1582
          %v1586 = vmul.f32 %v1576, %v1582
          %v1587 = vmul.f32 %v1577, %v1582
          %v1588 = vadd.f32 %v1558, %v1584
          %v1589 = vadd.f32 %v1559, %v1585
          %v1590 = vadd.f32 %v1560, %v1586
          %v1591 = vadd.f32 %v1561, %v1587
          %1592 = vset.pattern.permute.xlu0 1
          %1593 = vperm.xlu0 %1592, %v1578
          %v1594 = vpop.permute.xlu0 %1593
          %v1596 = vmul.f32 %v1574, %v1594
          %v1597 = vmul.f32 %v1575, %v1594
          %v1598 = vmul.f32 %v1576, %v1594
          %v1599 = vmul.f32 %v1577, %v1594
          %v1600 = vadd.f32 %v1570, %v1596
          %v1601 = vadd.f32 %v1571, %v1597
          %v1602 = vadd.f32 %v1572, %v1598
          %v1603 = vadd.f32 %v1573, %v1599
          %v1604 = vld [vmem:[%s253 + $0x5a0] sm:$0xff]
          %v1605 = vld [vmem:[%s253 + $0x5a8] sm:$0xff]
          %v1606 = vld [vmem:[%s253 + $0x5b0] sm:$0xff]
          %v1607 = vld [vmem:[%s253 + $0x5b8] sm:$0xff]
          %v1608 = vld [vmem:[%s0 + $0x168] sm:$0xff]
          %1610 = vset.pattern.permute.xlu0 0
          %1611 = vperm.xlu0 %1610, %v1608
          %v1612 = vpop.permute.xlu0 %1611
          %v1614 = vmul.f32 %v1604, %v1612
          %v1615 = vmul.f32 %v1605, %v1612
          %v1616 = vmul.f32 %v1606, %v1612
          %v1617 = vmul.f32 %v1607, %v1612
          %v1618 = vadd.f32 %v1588, %v1614
          %v1619 = vadd.f32 %v1589, %v1615
          %v1620 = vadd.f32 %v1590, %v1616
          %v1621 = vadd.f32 %v1591, %v1617
          %1622 = vset.pattern.permute.xlu0 1
          %1623 = vperm.xlu0 %1622, %v1608
          %v1624 = vpop.permute.xlu0 %1623
          %v1626 = vmul.f32 %v1604, %v1624
          %v1627 = vmul.f32 %v1605, %v1624
          %v1628 = vmul.f32 %v1606, %v1624
          %v1629 = vmul.f32 %v1607, %v1624
          %v1630 = vadd.f32 %v1600, %v1626
          %v1631 = vadd.f32 %v1601, %v1627
          %v1632 = vadd.f32 %v1602, %v1628
          %v1633 = vadd.f32 %v1603, %v1629
          %v1634 = vld [vmem:[%s253 + $0x5c0] sm:$0xff]
          %v1635 = vld [vmem:[%s253 + $0x5c8] sm:$0xff]
          %v1636 = vld [vmem:[%s253 + $0x5d0] sm:$0xff]
          %v1637 = vld [vmem:[%s253 + $0x5d8] sm:$0xff]
          %v1638 = vld [vmem:[%s0 + $0x170] sm:$0xff]
          %1640 = vset.pattern.permute.xlu0 0
          %1641 = vperm.xlu0 %1640, %v1638
          %v1642 = vpop.permute.xlu0 %1641
          %v1644 = vmul.f32 %v1634, %v1642
          %v1645 = vmul.f32 %v1635, %v1642
          %v1646 = vmul.f32 %v1636, %v1642
          %v1647 = vmul.f32 %v1637, %v1642
          %v1648 = vadd.f32 %v1618, %v1644
          %v1649 = vadd.f32 %v1619, %v1645
          %v1650 = vadd.f32 %v1620, %v1646
          %v1651 = vadd.f32 %v1621, %v1647
          %1652 = vset.pattern.permute.xlu0 1
          %1653 = vperm.xlu0 %1652, %v1638
          %v1654 = vpop.permute.xlu0 %1653
          %v1656 = vmul.f32 %v1634, %v1654
          %v1657 = vmul.f32 %v1635, %v1654
          %v1658 = vmul.f32 %v1636, %v1654
          %v1659 = vmul.f32 %v1637, %v1654
          %v1660 = vadd.f32 %v1630, %v1656
          %v1661 = vadd.f32 %v1631, %v1657
          %v1662 = vadd.f32 %v1632, %v1658
          %v1663 = vadd.f32 %v1633, %v1659
          %v1664 = vld [vmem:[%s253 + $0x5e0] sm:$0xff]
          %v1665 = vld [vmem:[%s253 + $0x5e8] sm:$0xff]
          %v1666 = vld [vmem:[%s253 + $0x5f0] sm:$0xff]
          %v1667 = vld [vmem:[%s253 + $0x5f8] sm:$0xff]
          %v1668 = vld [vmem:[%s0 + $0x178] sm:$0xff]
          %1670 = vset.pattern.permute.xlu0 0
          %1671 = vperm.xlu0 %1670, %v1668
          %v1672 = vpop.permute.xlu0 %1671
          %v1674 = vmul.f32 %v1664, %v1672
          %v1675 = vmul.f32 %v1665, %v1672
          %v1676 = vmul.f32 %v1666, %v1672
          %v1677 = vmul.f32 %v1667, %v1672
          %v1678 = vadd.f32 %v1648, %v1674
          %v1679 = vadd.f32 %v1649, %v1675
          %v1680 = vadd.f32 %v1650, %v1676
          %v1681 = vadd.f32 %v1651, %v1677
          %1682 = vset.pattern.permute.xlu0 1
          %1683 = vperm.xlu0 %1682, %v1668
          %v1684 = vpop.permute.xlu0 %1683
          %v1686 = vmul.f32 %v1664, %v1684
          %v1687 = vmul.f32 %v1665, %v1684
          %v1688 = vmul.f32 %v1666, %v1684
          %v1689 = vmul.f32 %v1667, %v1684
          %v1690 = vadd.f32 %v1660, %v1686
          %v1691 = vadd.f32 %v1661, %v1687
          %v1692 = vadd.f32 %v1662, %v1688
          %v1693 = vadd.f32 %v1663, %v1689
          %v1694 = vld [vmem:[%s253 + $0x600] sm:$0xff]
          %v1695 = vld [vmem:[%s253 + $0x608] sm:$0xff]
          %v1696 = vld [vmem:[%s253 + $0x610] sm:$0xff]
          %v1697 = vld [vmem:[%s253 + $0x618] sm:$0xff]
          %v1698 = vld [vmem:[%s0 + $0x180] sm:$0xff]
          %1700 = vset.pattern.permute.xlu0 0
          %1701 = vperm.xlu0 %1700, %v1698
          %v1702 = vpop.permute.xlu0 %1701
          %v1704 = vmul.f32 %v1694, %v1702
          %v1705 = vmul.f32 %v1695, %v1702
          %v1706 = vmul.f32 %v1696, %v1702
          %v1707 = vmul.f32 %v1697, %v1702
          %v1708 = vadd.f32 %v1678, %v1704
          %v1709 = vadd.f32 %v1679, %v1705
          %v1710 = vadd.f32 %v1680, %v1706
          %v1711 = vadd.f32 %v1681, %v1707
          %1712 = vset.pattern.permute.xlu0 1
          %1713 = vperm.xlu0 %1712, %v1698
          %v1714 = vpop.permute.xlu0 %1713
          %v1716 = vmul.f32 %v1694, %v1714
          %v1717 = vmul.f32 %v1695, %v1714
          %v1718 = vmul.f32 %v1696, %v1714
          %v1719 = vmul.f32 %v1697, %v1714
          %v1720 = vadd.f32 %v1690, %v1716
          %v1721 = vadd.f32 %v1691, %v1717
          %v1722 = vadd.f32 %v1692, %v1718
          %v1723 = vadd.f32 %v1693, %v1719
          %v1724 = vld [vmem:[%s253 + $0x620] sm:$0xff]
          %v1725 = vld [vmem:[%s253 + $0x628] sm:$0xff]
          %v1726 = vld [vmem:[%s253 + $0x630] sm:$0xff]
          %v1727 = vld [vmem:[%s253 + $0x638] sm:$0xff]
          %v1728 = vld [vmem:[%s0 + $0x188] sm:$0xff]
          %1730 = vset.pattern.permute.xlu0 0
          %1731 = vperm.xlu0 %1730, %v1728
          %v1732 = vpop.permute.xlu0 %1731
          %v1734 = vmul.f32 %v1724, %v1732
          %v1735 = vmul.f32 %v1725, %v1732
          %v1736 = vmul.f32 %v1726, %v1732
          %v1737 = vmul.f32 %v1727, %v1732
          %v1738 = vadd.f32 %v1708, %v1734
          %v1739 = vadd.f32 %v1709, %v1735
          %v1740 = vadd.f32 %v1710, %v1736
          %v1741 = vadd.f32 %v1711, %v1737
          %1742 = vset.pattern.permute.xlu0 1
          %1743 = vperm.xlu0 %1742, %v1728
          %v1744 = vpop.permute.xlu0 %1743
          %v1746 = vmul.f32 %v1724, %v1744
          %v1747 = vmul.f32 %v1725, %v1744
          %v1748 = vmul.f32 %v1726, %v1744
          %v1749 = vmul.f32 %v1727, %v1744
          %v1750 = vadd.f32 %v1720, %v1746
          %v1751 = vadd.f32 %v1721, %v1747
          %v1752 = vadd.f32 %v1722, %v1748
          %v1753 = vadd.f32 %v1723, %v1749
          %v1754 = vld [vmem:[%s253 + $0x640] sm:$0xff]
          %v1755 = vld [vmem:[%s253 + $0x648] sm:$0xff]
          %v1756 = vld [vmem:[%s253 + $0x650] sm:$0xff]
          %v1757 = vld [vmem:[%s253 + $0x658] sm:$0xff]
          %v1758 = vld [vmem:[%s0 + $0x190] sm:$0xff]
          %1760 = vset.pattern.permute.xlu0 0
          %1761 = vperm.xlu0 %1760, %v1758
          %v1762 = vpop.permute.xlu0 %1761
          %v1764 = vmul.f32 %v1754, %v1762
          %v1765 = vmul.f32 %v1755, %v1762
          %v1766 = vmul.f32 %v1756, %v1762
          %v1767 = vmul.f32 %v1757, %v1762
          %v1768 = vadd.f32 %v1738, %v1764
          %v1769 = vadd.f32 %v1739, %v1765
          %v1770 = vadd.f32 %v1740, %v1766
          %v1771 = vadd.f32 %v1741, %v1767
          %1772 = vset.pattern.permute.xlu0 1
          %1773 = vperm.xlu0 %1772, %v1758
          %v1774 = vpop.permute.xlu0 %1773
          %v1776 = vmul.f32 %v1754, %v1774
          %v1777 = vmul.f32 %v1755, %v1774
          %v1778 = vmul.f32 %v1756, %v1774
          %v1779 = vmul.f32 %v1757, %v1774
          %v1780 = vadd.f32 %v1750, %v1776
          %v1781 = vadd.f32 %v1751, %v1777
          %v1782 = vadd.f32 %v1752, %v1778
          %v1783 = vadd.f32 %v1753, %v1779
          %v1784 = vld [vmem:[%s253 + $0x660] sm:$0xff]
          %v1785 = vld [vmem:[%s253 + $0x668] sm:$0xff]
          %v1786 = vld [vmem:[%s253 + $0x670] sm:$0xff]
          %v1787 = vld [vmem:[%s253 + $0x678] sm:$0xff]
          %v1788 = vld [vmem:[%s0 + $0x198] sm:$0xff]
          %1790 = vset.pattern.permute.xlu0 0
          %1791 = vperm.xlu0 %1790, %v1788
          %v1792 = vpop.permute.xlu0 %1791
          %v1794 = vmul.f32 %v1784, %v1792
          %v1795 = vmul.f32 %v1785, %v1792
          %v1796 = vmul.f32 %v1786, %v1792
          %v1797 = vmul.f32 %v1787, %v1792
          %v1798 = vadd.f32 %v1768, %v1794
          %v1799 = vadd.f32 %v1769, %v1795
          %v1800 = vadd.f32 %v1770, %v1796
          %v1801 = vadd.f32 %v1771, %v1797
          %1802 = vset.pattern.permute.xlu0 1
          %1803 = vperm.xlu0 %1802, %v1788
          %v1804 = vpop.permute.xlu0 %1803
          %v1806 = vmul.f32 %v1784, %v1804
          %v1807 = vmul.f32 %v1785, %v1804
          %v1808 = vmul.f32 %v1786, %v1804
          %v1809 = vmul.f32 %v1787, %v1804
          %v1810 = vadd.f32 %v1780, %v1806
          %v1811 = vadd.f32 %v1781, %v1807
          %v1812 = vadd.f32 %v1782, %v1808
          %v1813 = vadd.f32 %v1783, %v1809
          %v1814 = vld [vmem:[%s253 + $0x680] sm:$0xff]
          %v1815 = vld [vmem:[%s253 + $0x688] sm:$0xff]
          %v1816 = vld [vmem:[%s253 + $0x690] sm:$0xff]
          %v1817 = vld [vmem:[%s253 + $0x698] sm:$0xff]
          %v1818 = vld [vmem:[%s0 + $0x1a0] sm:$0xff]
          %1820 = vset.pattern.permute.xlu0 0
          %1821 = vperm.xlu0 %1820, %v1818
          %v1822 = vpop.permute.xlu0 %1821
          %v1824 = vmul.f32 %v1814, %v1822
          %v1825 = vmul.f32 %v1815, %v1822
          %v1826 = vmul.f32 %v1816, %v1822
          %v1827 = vmul.f32 %v1817, %v1822
          %v1828 = vadd.f32 %v1798, %v1824
          %v1829 = vadd.f32 %v1799, %v1825
          %v1830 = vadd.f32 %v1800, %v1826
          %v1831 = vadd.f32 %v1801, %v1827
          %1832 = vset.pattern.permute.xlu0 1
          %1833 = vperm.xlu0 %1832, %v1818
          %v1834 = vpop.permute.xlu0 %1833
          %v1836 = vmul.f32 %v1814, %v1834
          %v1837 = vmul.f32 %v1815, %v1834
          %v1838 = vmul.f32 %v1816, %v1834
          %v1839 = vmul.f32 %v1817, %v1834
          %v1840 = vadd.f32 %v1810, %v1836
          %v1841 = vadd.f32 %v1811, %v1837
          %v1842 = vadd.f32 %v1812, %v1838
          %v1843 = vadd.f32 %v1813, %v1839
          %v1844 = vld [vmem:[%s253 + $0x6a0] sm:$0xff]
          %v1845 = vld [vmem:[%s253 + $0x6a8] sm:$0xff]
          %v1846 = vld [vmem:[%s253 + $0x6b0] sm:$0xff]
          %v1847 = vld [vmem:[%s253 + $0x6b8] sm:$0xff]
          %v1848 = vld [vmem:[%s0 + $0x1a8] sm:$0xff]
          %1850 = vset.pattern.permute.xlu0 0
          %1851 = vperm.xlu0 %1850, %v1848
          %v1852 = vpop.permute.xlu0 %1851
          %v1854 = vmul.f32 %v1844, %v1852
          %v1855 = vmul.f32 %v1845, %v1852
          %v1856 = vmul.f32 %v1846, %v1852
          %v1857 = vmul.f32 %v1847, %v1852
          %v1858 = vadd.f32 %v1828, %v1854
          %v1859 = vadd.f32 %v1829, %v1855
          %v1860 = vadd.f32 %v1830, %v1856
          %v1861 = vadd.f32 %v1831, %v1857
          %1862 = vset.pattern.permute.xlu0 1
          %1863 = vperm.xlu0 %1862, %v1848
          %v1864 = vpop.permute.xlu0 %1863
          %v1866 = vmul.f32 %v1844, %v1864
          %v1867 = vmul.f32 %v1845, %v1864
          %v1868 = vmul.f32 %v1846, %v1864
          %v1869 = vmul.f32 %v1847, %v1864
          %v1870 = vadd.f32 %v1840, %v1866
          %v1871 = vadd.f32 %v1841, %v1867
          %v1872 = vadd.f32 %v1842, %v1868
          %v1873 = vadd.f32 %v1843, %v1869
          %v1874 = vld [vmem:[%s253 + $0x6c0] sm:$0xff]
          %v1875 = vld [vmem:[%s253 + $0x6c8] sm:$0xff]
          %v1876 = vld [vmem:[%s253 + $0x6d0] sm:$0xff]
          %v1877 = vld [vmem:[%s253 + $0x6d8] sm:$0xff]
          %v1878 = vld [vmem:[%s0 + $0x1b0] sm:$0xff]
          %1880 = vset.pattern.permute.xlu0 0
          %1881 = vperm.xlu0 %1880, %v1878
          %v1882 = vpop.permute.xlu0 %1881
          %v1884 = vmul.f32 %v1874, %v1882
          %v1885 = vmul.f32 %v1875, %v1882
          %v1886 = vmul.f32 %v1876, %v1882
          %v1887 = vmul.f32 %v1877, %v1882
          %v1888 = vadd.f32 %v1858, %v1884
          %v1889 = vadd.f32 %v1859, %v1885
          %v1890 = vadd.f32 %v1860, %v1886
          %v1891 = vadd.f32 %v1861, %v1887
          %1892 = vset.pattern.permute.xlu0 1
          %1893 = vperm.xlu0 %1892, %v1878
          %v1894 = vpop.permute.xlu0 %1893
          %v1896 = vmul.f32 %v1874, %v1894
          %v1897 = vmul.f32 %v1875, %v1894
          %v1898 = vmul.f32 %v1876, %v1894
          %v1899 = vmul.f32 %v1877, %v1894
          %v1900 = vadd.f32 %v1870, %v1896
          %v1901 = vadd.f32 %v1871, %v1897
          %v1902 = vadd.f32 %v1872, %v1898
          %v1903 = vadd.f32 %v1873, %v1899
          %v1904 = vld [vmem:[%s253 + $0x6e0] sm:$0xff]
          %v1905 = vld [vmem:[%s253 + $0x6e8] sm:$0xff]
          %v1906 = vld [vmem:[%s253 + $0x6f0] sm:$0xff]
          %v1907 = vld [vmem:[%s253 + $0x6f8] sm:$0xff]
          %v1908 = vld [vmem:[%s0 + $0x1b8] sm:$0xff]
          %1910 = vset.pattern.permute.xlu0 0
          %1911 = vperm.xlu0 %1910, %v1908
          %v1912 = vpop.permute.xlu0 %1911
          %v1914 = vmul.f32 %v1904, %v1912
          %v1915 = vmul.f32 %v1905, %v1912
          %v1916 = vmul.f32 %v1906, %v1912
          %v1917 = vmul.f32 %v1907, %v1912
          %v1918 = vadd.f32 %v1888, %v1914
          %v1919 = vadd.f32 %v1889, %v1915
          %v1920 = vadd.f32 %v1890, %v1916
          %v1921 = vadd.f32 %v1891, %v1917
          %1922 = vset.pattern.permute.xlu0 1
          %1923 = vperm.xlu0 %1922, %v1908
          %v1924 = vpop.permute.xlu0 %1923
          %v1926 = vmul.f32 %v1904, %v1924
          %v1927 = vmul.f32 %v1905, %v1924
          %v1928 = vmul.f32 %v1906, %v1924
          %v1929 = vmul.f32 %v1907, %v1924
          %v1930 = vadd.f32 %v1900, %v1926
          %v1931 = vadd.f32 %v1901, %v1927
          %v1932 = vadd.f32 %v1902, %v1928
          %v1933 = vadd.f32 %v1903, %v1929
          %v1934 = vld [vmem:[%s253 + $0x700] sm:$0xff]
          %v1935 = vld [vmem:[%s253 + $0x708] sm:$0xff]
          %v1936 = vld [vmem:[%s253 + $0x710] sm:$0xff]
          %v1937 = vld [vmem:[%s253 + $0x718] sm:$0xff]
          %v1938 = vld [vmem:[%s0 + $0x1c0] sm:$0xff]
          %1940 = vset.pattern.permute.xlu0 0
          %1941 = vperm.xlu0 %1940, %v1938
          %v1942 = vpop.permute.xlu0 %1941
          %v1944 = vmul.f32 %v1934, %v1942
          %v1945 = vmul.f32 %v1935, %v1942
          %v1946 = vmul.f32 %v1936, %v1942
          %v1947 = vmul.f32 %v1937, %v1942
          %v1948 = vadd.f32 %v1918, %v1944
          %v1949 = vadd.f32 %v1919, %v1945
          %v1950 = vadd.f32 %v1920, %v1946
          %v1951 = vadd.f32 %v1921, %v1947
          %1952 = vset.pattern.permute.xlu0 1
          %1953 = vperm.xlu0 %1952, %v1938
          %v1954 = vpop.permute.xlu0 %1953
          %v1956 = vmul.f32 %v1934, %v1954
          %v1957 = vmul.f32 %v1935, %v1954
          %v1958 = vmul.f32 %v1936, %v1954
          %v1959 = vmul.f32 %v1937, %v1954
          %v1960 = vadd.f32 %v1930, %v1956
          %v1961 = vadd.f32 %v1931, %v1957
          %v1962 = vadd.f32 %v1932, %v1958
          %v1963 = vadd.f32 %v1933, %v1959
          %v1964 = vld [vmem:[%s253 + $0x720] sm:$0xff]
          %v1965 = vld [vmem:[%s253 + $0x728] sm:$0xff]
          %v1966 = vld [vmem:[%s253 + $0x730] sm:$0xff]
          %v1967 = vld [vmem:[%s253 + $0x738] sm:$0xff]
          %v1968 = vld [vmem:[%s0 + $0x1c8] sm:$0xff]
          %1970 = vset.pattern.permute.xlu0 0
          %1971 = vperm.xlu0 %1970, %v1968
          %v1972 = vpop.permute.xlu0 %1971
          %v1974 = vmul.f32 %v1964, %v1972
          %v1975 = vmul.f32 %v1965, %v1972
          %v1976 = vmul.f32 %v1966, %v1972
          %v1977 = vmul.f32 %v1967, %v1972
          %v1978 = vadd.f32 %v1948, %v1974
          %v1979 = vadd.f32 %v1949, %v1975
          %v1980 = vadd.f32 %v1950, %v1976
          %v1981 = vadd.f32 %v1951, %v1977
          %1982 = vset.pattern.permute.xlu0 1
          %1983 = vperm.xlu0 %1982, %v1968
          %v1984 = vpop.permute.xlu0 %1983
          %v1986 = vmul.f32 %v1964, %v1984
          %v1987 = vmul.f32 %v1965, %v1984
          %v1988 = vmul.f32 %v1966, %v1984
          %v1989 = vmul.f32 %v1967, %v1984
          %v1990 = vadd.f32 %v1960, %v1986
          %v1991 = vadd.f32 %v1961, %v1987
          %v1992 = vadd.f32 %v1962, %v1988
          %v1993 = vadd.f32 %v1963, %v1989
          %v1994 = vld [vmem:[%s253 + $0x740] sm:$0xff]
          %v1995 = vld [vmem:[%s253 + $0x748] sm:$0xff]
          %v1996 = vld [vmem:[%s253 + $0x750] sm:$0xff]
          %v1997 = vld [vmem:[%s253 + $0x758] sm:$0xff]
          %v1998 = vld [vmem:[%s0 + $0x1d0] sm:$0xff]
          %2000 = vset.pattern.permute.xlu0 0
          %2001 = vperm.xlu0 %2000, %v1998
          %v2002 = vpop.permute.xlu0 %2001
          %v2004 = vmul.f32 %v1994, %v2002
          %v2005 = vmul.f32 %v1995, %v2002
          %v2006 = vmul.f32 %v1996, %v2002
          %v2007 = vmul.f32 %v1997, %v2002
          %v2008 = vadd.f32 %v1978, %v2004
          %v2009 = vadd.f32 %v1979, %v2005
          %v2010 = vadd.f32 %v1980, %v2006
          %v2011 = vadd.f32 %v1981, %v2007
          %2012 = vset.pattern.permute.xlu0 1
          %2013 = vperm.xlu0 %2012, %v1998
          %v2014 = vpop.permute.xlu0 %2013
          %v2016 = vmul.f32 %v1994, %v2014
          %v2017 = vmul.f32 %v1995, %v2014
          %v2018 = vmul.f32 %v1996, %v2014
          %v2019 = vmul.f32 %v1997, %v2014
          %v2020 = vadd.f32 %v1990, %v2016
          %v2021 = vadd.f32 %v1991, %v2017
          %v2022 = vadd.f32 %v1992, %v2018
          %v2023 = vadd.f32 %v1993, %v2019
          %v2024 = vld [vmem:[%s253 + $0x760] sm:$0xff]
          %v2025 = vld [vmem:[%s253 + $0x768] sm:$0xff]
          %v2026 = vld [vmem:[%s253 + $0x770] sm:$0xff]
          %v2027 = vld [vmem:[%s253 + $0x778] sm:$0xff]
          %v2028 = vld [vmem:[%s0 + $0x1d8] sm:$0xff]
          %2030 = vset.pattern.permute.xlu0 0
          %2031 = vperm.xlu0 %2030, %v2028
          %v2032 = vpop.permute.xlu0 %2031
          %v2034 = vmul.f32 %v2024, %v2032
          %v2035 = vmul.f32 %v2025, %v2032
          %v2036 = vmul.f32 %v2026, %v2032
          %v2037 = vmul.f32 %v2027, %v2032
          %v2038 = vadd.f32 %v2008, %v2034
          %v2039 = vadd.f32 %v2009, %v2035
          %v2040 = vadd.f32 %v2010, %v2036
          %v2041 = vadd.f32 %v2011, %v2037
          %2042 = vset.pattern.permute.xlu0 1
          %2043 = vperm.xlu0 %2042, %v2028
          %v2044 = vpop.permute.xlu0 %2043
          %v2046 = vmul.f32 %v2024, %v2044
          %v2047 = vmul.f32 %v2025, %v2044
          %v2048 = vmul.f32 %v2026, %v2044
          %v2049 = vmul.f32 %v2027, %v2044
          %v2050 = vadd.f32 %v2020, %v2046
          %v2051 = vadd.f32 %v2021, %v2047
          %v2052 = vadd.f32 %v2022, %v2048
          %v2053 = vadd.f32 %v2023, %v2049
          %v2054 = vld [vmem:[%s253 + $0x780] sm:$0xff]
          %v2055 = vld [vmem:[%s253 + $0x788] sm:$0xff]
          %v2056 = vld [vmem:[%s253 + $0x790] sm:$0xff]
          %v2057 = vld [vmem:[%s253 + $0x798] sm:$0xff]
          %v2058 = vld [vmem:[%s0 + $0x1e0] sm:$0xff]
          %2060 = vset.pattern.permute.xlu0 0
          %2061 = vperm.xlu0 %2060, %v2058
          %v2062 = vpop.permute.xlu0 %2061
          %v2064 = vmul.f32 %v2054, %v2062
          %v2065 = vmul.f32 %v2055, %v2062
          %v2066 = vmul.f32 %v2056, %v2062
          %v2067 = vmul.f32 %v2057, %v2062
          %v2068 = vadd.f32 %v2038, %v2064
          %v2069 = vadd.f32 %v2039, %v2065
          %v2070 = vadd.f32 %v2040, %v2066
          %v2071 = vadd.f32 %v2041, %v2067
          %2072 = vset.pattern.permute.xlu0 1
          %2073 = vperm.xlu0 %2072, %v2058
          %v2074 = vpop.permute.xlu0 %2073
          %v2076 = vmul.f32 %v2054, %v2074
          %v2077 = vmul.f32 %v2055, %v2074
          %v2078 = vmul.f32 %v2056, %v2074
          %v2079 = vmul.f32 %v2057, %v2074
          %v2080 = vadd.f32 %v2050, %v2076
          %v2081 = vadd.f32 %v2051, %v2077
          %v2082 = vadd.f32 %v2052, %v2078
          %v2083 = vadd.f32 %v2053, %v2079
          %v2084 = vld [vmem:[%s253 + $0x7a0] sm:$0xff]
          %v2085 = vld [vmem:[%s253 + $0x7a8] sm:$0xff]
          %v2086 = vld [vmem:[%s253 + $0x7b0] sm:$0xff]
          %v2087 = vld [vmem:[%s253 + $0x7b8] sm:$0xff]
          %v2088 = vld [vmem:[%s0 + $0x1e8] sm:$0xff]
          %2090 = vset.pattern.permute.xlu0 0
          %2091 = vperm.xlu0 %2090, %v2088
          %v2092 = vpop.permute.xlu0 %2091
          %v2094 = vmul.f32 %v2084, %v2092
          %v2095 = vmul.f32 %v2085, %v2092
          %v2096 = vmul.f32 %v2086, %v2092
          %v2097 = vmul.f32 %v2087, %v2092
          %v2098 = vadd.f32 %v2068, %v2094
          %v2099 = vadd.f32 %v2069, %v2095
          %v2100 = vadd.f32 %v2070, %v2096
          %v2101 = vadd.f32 %v2071, %v2097
          %2102 = vset.pattern.permute.xlu0 1
          %2103 = vperm.xlu0 %2102, %v2088
          %v2104 = vpop.permute.xlu0 %2103
          %v2106 = vmul.f32 %v2084, %v2104
          %v2107 = vmul.f32 %v2085, %v2104
          %v2108 = vmul.f32 %v2086, %v2104
          %v2109 = vmul.f32 %v2087, %v2104
          %v2110 = vadd.f32 %v2080, %v2106
          %v2111 = vadd.f32 %v2081, %v2107
          %v2112 = vadd.f32 %v2082, %v2108
          %v2113 = vadd.f32 %v2083, %v2109
          %v2114 = vld [vmem:[%s253 + $0x7c0] sm:$0xff]
          %v2115 = vld [vmem:[%s253 + $0x7c8] sm:$0xff]
          %v2116 = vld [vmem:[%s253 + $0x7d0] sm:$0xff]
          %v2117 = vld [vmem:[%s253 + $0x7d8] sm:$0xff]
          %v2118 = vld [vmem:[%s0 + $0x1f0] sm:$0xff]
          %2120 = vset.pattern.permute.xlu0 0
          %2121 = vperm.xlu0 %2120, %v2118
          %v2122 = vpop.permute.xlu0 %2121
          %v2124 = vmul.f32 %v2114, %v2122
          %v2125 = vmul.f32 %v2115, %v2122
          %v2126 = vmul.f32 %v2116, %v2122
          %v2127 = vmul.f32 %v2117, %v2122
          %v2128 = vadd.f32 %v2098, %v2124
          %v2129 = vadd.f32 %v2099, %v2125
          %v2130 = vadd.f32 %v2100, %v2126
          %v2131 = vadd.f32 %v2101, %v2127
          %2132 = vset.pattern.permute.xlu0 1
          %2133 = vperm.xlu0 %2132, %v2118
          %v2134 = vpop.permute.xlu0 %2133
          %v2136 = vmul.f32 %v2114, %v2134
          %v2137 = vmul.f32 %v2115, %v2134
          %v2138 = vmul.f32 %v2116, %v2134
          %v2139 = vmul.f32 %v2117, %v2134
          %v2140 = vadd.f32 %v2110, %v2136
          %v2141 = vadd.f32 %v2111, %v2137
          %v2142 = vadd.f32 %v2112, %v2138
          %v2143 = vadd.f32 %v2113, %v2139
          %v2144 = vld [vmem:[%s253 + $0x7e0] sm:$0xff]
          %v2145 = vld [vmem:[%s253 + $0x7e8] sm:$0xff]
          %v2146 = vld [vmem:[%s253 + $0x7f0] sm:$0xff]
          %v2147 = vld [vmem:[%s253 + $0x7f8] sm:$0xff]
          %v2148 = vld [vmem:[%s0 + $0x1f8] sm:$0xff]
          %2150 = vset.pattern.permute.xlu0 0
          %2151 = vperm.xlu0 %2150, %v2148
          %v2152 = vpop.permute.xlu0 %2151
          %v2154 = vmul.f32 %v2144, %v2152
          %v2155 = vmul.f32 %v2145, %v2152
          %v2156 = vmul.f32 %v2146, %v2152
          %v2157 = vmul.f32 %v2147, %v2152
          %v2158 = vadd.f32 %v2128, %v2154
          %v2159 = vadd.f32 %v2129, %v2155
          %v2160 = vadd.f32 %v2130, %v2156
          %v2161 = vadd.f32 %v2131, %v2157
          %2162 = vset.pattern.permute.xlu0 1
          %2163 = vperm.xlu0 %2162, %v2148
          %v2164 = vpop.permute.xlu0 %2163
          %v2166 = vmul.f32 %v2144, %v2164
          %v2167 = vmul.f32 %v2145, %v2164
          %v2168 = vmul.f32 %v2146, %v2164
          %v2169 = vmul.f32 %v2147, %v2164
          %v2170 = vadd.f32 %v2140, %v2166
          %v2171 = vadd.f32 %v2141, %v2167
          %v2172 = vadd.f32 %v2142, %v2168
          %v2173 = vadd.f32 %v2143, %v2169
          %v2174 = vrot.slane %v2158, 4
          %v2175 = vadd.f32 %v2158, %v2174
          %v2176 = vrot.slane %v2175, 2
          %v2177 = vadd.f32 %v2175, %v2176
          %v2178 = vrot.slane %v2177, 1
          %v2179 = vadd.f32 %v2177, %v2178
          %v2180 = vrot.slane %v2159, 4
          %v2181 = vadd.f32 %v2159, %v2180
          %v2182 = vrot.slane %v2181, 2
          %v2183 = vadd.f32 %v2181, %v2182
          %v2184 = vrot.slane %v2183, 1
          %v2185 = vadd.f32 %v2183, %v2184
          %v2186 = vrot.slane %v2160, 4
          %v2187 = vadd.f32 %v2160, %v2186
          %v2188 = vrot.slane %v2187, 2
          %v2189 = vadd.f32 %v2187, %v2188
          %v2190 = vrot.slane %v2189, 1
          %v2191 = vadd.f32 %v2189, %v2190
          %v2192 = vrot.slane %v2161, 4
          %v2193 = vadd.f32 %v2161, %v2192
          %v2194 = vrot.slane %v2193, 2
          %v2195 = vadd.f32 %v2193, %v2194
          %v2196 = vrot.slane %v2195, 1
          %v2197 = vadd.f32 %v2195, %v2196
          %v2202 = vrot.slane %v2185, 7
          %v2203 = vrot.slane %v2191, 6
          %v2204 = vrot.slane %v2197, 5
          %vm2205 = vcmask 1040384
          %v2206 = vsel %vm2205, %v2179, %v2202
          %vm2207 = vcmask 1042434
          %v2208 = vsel %vm2207, %v2203, %v2204
          %vm2209 = vcmask 1041408
          %v2210 = vsel %vm2209, %v2206, %v2208
          %v2212 = vlaneseq
          %vm2213 = vcmp.ge.s32.totalorder %v2212, 0
          %vm2214 = vcmp.lt.s32.totalorder %v2212, 512
          %vm2215 = vmand %vm2213, %vm2214
          %s2216 = sshra.s32 %s246, 3
          %s2217 = sand.u32 %s246, 7
          %s2218 = sshra.s32 %s246, 3
          %s2219 = sand.u32 %s246, 7
          %s2220 = smul.u32 %s2216, 4
          %s2221 = smul.u32 %s2220, 8
          %s2222 = sadd.s32 %s2221, %s2219
          %s2223 = scalar_lea.vmem [#allocation2], %s2222
          %2224 = vst.msk [vmem:[%s2223] ss:$8 sm:$0xf] %vm2215, %v2210
          %2225 = vst.msk [vmem:[%s2223] ss:$8 sm:$0x0] %vm2215, %v2210
          %v2226 = vrot.slane %v2170, 4
          %v2227 = vadd.f32 %v2170, %v2226
          %v2228 = vrot.slane %v2227, 2
          %v2229 = vadd.f32 %v2227, %v2228
          %v2230 = vrot.slane %v2229, 1
          %v2231 = vadd.f32 %v2229, %v2230
          %v2232 = vrot.slane %v2171, 4
          %v2233 = vadd.f32 %v2171, %v2232
          %v2234 = vrot.slane %v2233, 2
          %v2235 = vadd.f32 %v2233, %v2234
          %v2236 = vrot.slane %v2235, 1
          %v2237 = vadd.f32 %v2235, %v2236
          %v2238 = vrot.slane %v2172, 4
          %v2239 = vadd.f32 %v2172, %v2238
          %v2240 = vrot.slane %v2239, 2
          %v2241 = vadd.f32 %v2239, %v2240
          %v2242 = vrot.slane %v2241, 1
          %v2243 = vadd.f32 %v2241, %v2242
          %v2244 = vrot.slane %v2173, 4
          %v2245 = vadd.f32 %v2173, %v2244
          %v2246 = vrot.slane %v2245, 2
          %v2247 = vadd.f32 %v2245, %v2246
          %v2248 = vrot.slane %v2247, 1
          %v2249 = vadd.f32 %v2247, %v2248
          %s2250 = sadd.s32 %s246, 16
          %v2255 = vrot.slane %v2237, 7
          %v2256 = vrot.slane %v2243, 6
          %v2257 = vrot.slane %v2249, 5
          %v2258 = vsel %vm2205, %v2231, %v2255
          %v2259 = vsel %vm2207, %v2256, %v2257
          %v2260 = vsel %vm2209, %v2258, %v2259
          %s2262 = sshra.s32 %s2250, 3
          %s2263 = sand.u32 %s2250, 7
          %s2264 = sshra.s32 %s2250, 3
          %s2265 = sand.u32 %s2250, 7
          %s2266 = smul.u32 %s2262, 4
          %s2267 = smul.u32 %s2266, 8
          %s2268 = sadd.s32 %s2267, %s2265
          %s2269 = scalar_lea.vmem [#allocation2], %s2268
          %2270 = vst.msk [vmem:[%s2269] ss:$8 sm:$0xf] %vm2215, %v2260
          %2271 = vst.msk [vmem:[%s2269] ss:$8 sm:$0x0] %vm2215, %v2260
        $region45: #{mixer_forward.1} parent=35 // loop_footer
          %s250 = sadd.s32 1, %s246
        $region46: #{mixer_forward.1} parent=35 // loop_footer_branch
          %245 = sbr.rel target = $region42
        $region47: #{mixer_forward.1} parent=35 // loop_exit
          _
        %v2272 = vld [vmem:[#allocation2] sm:$0xff]
        %v2273 = vld [vmem:[#allocation2 + $0x8] sm:$0xff]
        %v2274 = vld [vmem:[#allocation2 + $0x10] sm:$0xff]
        %v2275 = vld [vmem:[#allocation2 + $0x18] sm:$0xff]
        %v2276 = vld [vmem:[#allocation2 + $0x20] sm:$0xff]
        %v2277 = vld [vmem:[#allocation2 + $0x28] sm:$0xff]
        %v2278 = vld [vmem:[#allocation2 + $0x30] sm:$0xff]
        %v2279 = vld [vmem:[#allocation2 + $0x38] sm:$0xff]
        %v2280 = vld [vmem:[%s1] ss:$2 sm:$0xf]
        %v2282 = vperm.slane %v2280, 0
        %v2283 = vperm.slane %v2280, 1
        %v2284 = vperm.slane %v2280, 2
        %v2285 = vperm.slane %v2280, 3
        %v2290 = vmul.f32 %v2272, %v2282
        %v2291 = vmul.f32 %v2273, %v2283
        %v2292 = vmul.f32 %v2274, %v2284
        %v2293 = vmul.f32 %v2275, %v2285
        %v2294 = vmul.f32 %v2276, %v2282
        %v2295 = vmul.f32 %v2277, %v2283
        %v2296 = vmul.f32 %v2278, %v2284
        %v2297 = vmul.f32 %v2279, %v2285
        %v2298 = vadd.f32 %v2290, %v2291
        %v2299 = vadd.f32 %v2298, %v2292
        %v2300 = vadd.f32 %v2299, %v2293
        %2301 = vadd.xlane.f32.xlu0 %v2300
        %v2302 = vpop.xlane.xlu0 %2301
        %v2303 = vadd.f32 %v2294, %v2295
        %v2304 = vadd.f32 %v2303, %v2296
        %v2305 = vadd.f32 %v2304, %v2297
        %2306 = vadd.xlane.f32.xlu0 %v2305
        %v2307 = vpop.xlane.xlu0 %2306
        %v2308 = vld [vmem:[#allocation2 + $0x40] sm:$0xff]
        %v2309 = vld [vmem:[#allocation2 + $0x48] sm:$0xff]
        %v2310 = vld [vmem:[#allocation2 + $0x50] sm:$0xff]
        %v2311 = vld [vmem:[#allocation2 + $0x58] sm:$0xff]
        %v2312 = vld [vmem:[#allocation2 + $0x60] sm:$0xff]
        %v2313 = vld [vmem:[#allocation2 + $0x68] sm:$0xff]
        %v2314 = vld [vmem:[#allocation2 + $0x70] sm:$0xff]
        %v2315 = vld [vmem:[#allocation2 + $0x78] sm:$0xff]
        %s2316 = scalar_lea.vmem %s1, 1
        %v2317 = vld [vmem:[%s2316] ss:$2 sm:$0xf]
        %v2319 = vperm.slane %v2317, 0
        %v2320 = vperm.slane %v2317, 1
        %v2321 = vperm.slane %v2317, 2
        %v2322 = vperm.slane %v2317, 3
        %v2327 = vmul.f32 %v2308, %v2319
        %v2328 = vmul.f32 %v2309, %v2320
        %v2329 = vmul.f32 %v2310, %v2321
        %v2330 = vmul.f32 %v2311, %v2322
        %v2331 = vmul.f32 %v2312, %v2319
        %v2332 = vmul.f32 %v2313, %v2320
        %v2333 = vmul.f32 %v2314, %v2321
        %v2334 = vmul.f32 %v2315, %v2322
        %v2335 = vadd.f32 %v2327, %v2328
        %v2336 = vadd.f32 %v2335, %v2329
        %v2337 = vadd.f32 %v2336, %v2330
        %2338 = vadd.xlane.f32.xlu0 %v2337
        %v2339 = vpop.xlane.xlu0 %2338
        %v2340 = vadd.f32 %v2331, %v2332
        %v2341 = vadd.f32 %v2340, %v2333
        %v2342 = vadd.f32 %v2341, %v2334
        %2343 = vadd.xlane.f32.xlu0 %v2342
        %v2344 = vpop.xlane.xlu0 %2343
        %vm2345 = vcmask 7168
        %v2346 = vsel %vm2345, %v2302, %v2339
        %v2347 = vsel %vm2345, %v2307, %v2344
        %v2348 = vld [vmem:[%s237] sm:$0xff]
        %v2349 = vld [vmem:[%s237 + $0x8] sm:$0xff]
        %2351 = vset.pattern.permute.xlu0 0
        %2352 = vperm.xlu0 %2351, %v2348
        %v2353 = vpop.permute.xlu0 %2352
        %2356 = vset.pattern.permute.xlu0 0
        %2357 = vperm.xlu0 %2356, %v2349
        %v2358 = vpop.permute.xlu0 %2357
        %v2360 = vadd.f32 %v2346, %v2353
        %v2361 = vadd.f32 %v2347, %v2358
        %vm2362 = vcmask 15360
        %2363 = vst.msk [vmem:[%s243] sm:$0xff] %vm2362, %v2360
        %2364 = vst.msk [vmem:[%s243 + $0x8] sm:$0xff] %vm2362, %v2361
        %s2365 = smul.u32 2, %s18
        %p2366 = scmp.lt.s32.totalorder %s2365, 63
        %s2367 = scalar_select %p2366, %s2365, 63
        %s2368 = smul.addr %s2367, 8
        %s2369 = scalar_lea.vmem %s4, %s2368
        // Predicated region
        $region48: #{mixer_forward.1} parent=35 // pred_check
          %p2370 = pneg %p130
        $region49: #{mixer_forward.1} parent=35 // pred_check_branch
          %2372 = sbr.rel (%p2370) target = $region51
        $region50: #{mixer_forward.1} parent=35 // pred_region
          %s2373 = smul.u32 2, %s18
        $region51: #{mixer_forward.1} parent=35 // pred_fallthru
          _
      $region36: #{mixer_forward.1} parent=5 // pred_fallthru
        _
      %p2374 = scmp.le.s32.totalorder 2, %s13
      // Predicated region
      $region52: #{mixer_forward.1} parent=5 // pred_check
        %p2375 = pneg %p2374
      $region53: #{mixer_forward.1} parent=5 // pred_check_branch
        %2377 = sbr.rel (%p2375) target = $region55
      $region54: #{mixer_forward.1} parent=5 // pred_region
        %s2378 = ssub.s32 %s13, 2
        // Predicated region
        $region56: #{mixer_forward.1} parent=54 // pred_check
          %p2379 = pneg %p136
        $region57: #{mixer_forward.1} parent=54 // pred_check_branch
          %2381 = sbr.rel (%p2379) target = $region59
        $region58: #{mixer_forward.1} parent=54 // pred_region
          %s2382 = smul.u32 2, %s19
          %p2383 = scmp.lt.s32.totalorder %s2382, 63
          %s2384 = scalar_select %p2383, %s2382, 63
          %s2385 = smul.addr %s2384, 8
          %s2386 = scalar_lea.vmem %s4, %s2385
        $region59: #{mixer_forward.1} parent=54 // pred_fallthru
          _
      $region55: #{mixer_forward.1} parent=5 // pred_fallthru
        _
    $region6: #{mixer_forward.1} parent=1 // loop_footer
      %s17 = sadd.s32 1, %s13
    $region7: #{mixer_forward.1} parent=1 // loop_footer_branch
      %12 = sbr.rel target = $region3
    $region8: #{mixer_forward.1} parent=1 // loop_exit
      _
    %2387 = vsyncpa [#allocation4], 1
    %s2388 = scalar_lea.sflag [#allocation4], 1
    %2389 = vsyncpa %s2388, 1

</llo_original>
